<compile_context>
chip_gen: v5e
topology: v5e:2x2
jax: 0.10.0
libtpu: 0.0.40
codegen_flags: <defaults>
</compile_context>

<pallas_src>
import math
import jax
import jax.numpy as jnp
from jax import lax
from jax.experimental import pallas as pl
from jax.experimental.pallas import tpu as pltpu


def _attention_fuse_kernel(
    x_ref,       # (Bt, K, N, C)      f32   input, head-major-ready ('b k n c')
    p_ref,       # (K+5, H, 1, C)     f32   [win_0..win_{K-1}, bin, g1, b1, g2, b2]
    vb_ref,      # (1, 3D + C)        f32   [bq*scale | bk | bv | bo]
    wqkv_ref,    # (C, 3D)            bf16  [wq*scale | wk | wv]
    wo_ref,      # (D, C)             bf16
    out_ref,     # (Bt, H, N, C)      f32
):
    Bt, K, N, C = x_ref.shape
    H = p_ref.shape[1]
    threeD = wqkv_ref.shape[1]
    D = threeD // 3
    M = Bt * H * N
    eps = 1e-5
    inv_hc = 1.0 / float(H * C)
    f32, bf16 = jnp.float32, jnp.bfloat16

    # ---- input_proj on the VPU, all f32 (keeps the residual path exact) ----
    # short_cut[b, h, n, c] = sum_k win[k, h] * x[b, k, n, c] + bin[h]
    x = x_ref[...]                                                 # (Bt, K, N, C)
    sc = p_ref[0][None] * x[:, 0][:, None]                         # (1,H,1,C)*(Bt,1,N,C)
    for k in range(1, K):                                          # K == 4, unrolled
        sc = sc + p_ref[k][None] * x[:, k][:, None]
    sc = sc + p_ref[K][None]                                       # + bin   (Bt,H,N,C)

    # ---- LayerNorm over (head, channel) per token; single pass with var clamp ----
    def layer_norm_heads(t, g, b):                                 # t: (Bt,H,N,C); g,b: (H,1,C)
        s1 = jnp.sum(jnp.sum(t, axis=1, keepdims=True), axis=3, keepdims=True) * inv_hc
        s2 = jnp.sum(jnp.sum(t * t, axis=1, keepdims=True), axis=3, keepdims=True) * inv_hc
        var = jnp.maximum(s2 - s1 * s1, 0.0)                       # (Bt,1,N,1)
        inv = lax.rsqrt(var + eps)
        return (t - s1) * inv * g[None] + b[None]

    xn = layer_norm_heads(sc, p_ref[K + 1], p_ref[K + 2])          # (Bt,H,N,C)

    # ---- fused q/k/v projection: one MXU GEMM, static lane splits ----
    xn_bf = xn.reshape(M, C).astype(bf16)                          # leading-dim merge
    qkv = jnp.dot(xn_bf, wqkv_ref[...], preferred_element_type=f32) + vb_ref[:, :threeD]
    q = qkv[:, :D].reshape(Bt * H, N, D)                           # 1/sqrt(D) already folded in
    k_ = qkv[:, D:2 * D].reshape(Bt * H, N, D)
    v = qkv[:, 2 * D:].reshape(Bt * H, N, D)

    # ---- attention, batched over (batch * heads) ----
    s = jnp.einsum("hnd,hmd->hnm", q.astype(bf16), k_.astype(bf16),
                   preferred_element_type=f32)                     # (Bt*H, N, N)
    s = s - jnp.max(s, axis=-1, keepdims=True)
    pattn = jnp.exp(s)
    pattn = pattn * pl.reciprocal(jnp.sum(pattn, axis=-1, keepdims=True), approx=True)
    o = jnp.einsum("hnm,hmd->hnd", pattn.astype(bf16), v.astype(bf16),
                   preferred_element_type=f32)                     # (Bt*H, N, D)

    # ---- out_proj ----
    y = (jnp.dot(o.reshape(M, D).astype(bf16), wo_ref[...],
                 preferred_element_type=f32) + vb_ref[:, threeD:]).reshape(Bt, H, N, C)

    # ---- norm2 + residual (residual in f32) ----
    yn = layer_norm_heads(y, p_ref[K + 3], p_ref[K + 4])
    out_ref[...] = (sc + yn).astype(out_ref.dtype)


def prepare_params(params):
    """One-time parameter preparation: slab packing, bf16 casts, scale folding."""
    K, H = params["win"].shape
    C, D = params["wq"].shape
    f32, bf16 = jnp.float32, jnp.bfloat16
    scale = 1.0 / math.sqrt(D)

    # fused qkv weight / bias, with the attention scale folded into the q part
    wqkv = jnp.concatenate(
        [params["wq"] * scale, params["wk"], params["wv"]], axis=1).astype(bf16)   # (C, 3D)
    wo = params["wo"].astype(bf16)                                                  # (D, C)
    vb = jnp.concatenate(
        [params["bq"] * scale, params["bk"], params["bv"], params["bo"]]
    )[None].astype(f32)                                                             # (1, 3D+C)

    # f32 param slab: rows 0..K-1 = win[k] broadcast, row K = bin broadcast,
    # rows K+1..K+4 = g1, b1, g2, b2 in head-major (H, 1, C).
    def bcast_head(vec_h):                          # (H,) -> (H, 1, C)
        return jnp.broadcast_to(vec_h.astype(f32)[:, None, None], (H, 1, C))

    def headmajor(p_ch):                            # (C, H) -> (H, 1, C)
        return p_ch.T.astype(f32)[:, None, :]

    rows = [bcast_head(params["win"][k]) for k in range(K)]
    rows.append(bcast_head(params["bin"]))
    rows += [headmajor(params[n]) for n in ("g1", "b1", "g2", "b2")]
    pslab = jnp.stack(rows, axis=0)                                                 # (K+5, H, 1, C)

    return {"pslab": pslab, "vb": vb, "wqkv": wqkv, "wo": wo,
            "K": K, "H": H, "C": C, "D": D}


def attention_fuse(x, prep, H_spatial=None, W_spatial=None, block_batch=None):
    """x: (B, N, C, K) float32 -> (B, N, C, num_heads). H/W only used for sr_ratio>1."""
    B, N, C, K = x.shape
    H = prep["H"]
    assert C == prep["C"] and K == prep["K"]

    if block_batch is None:
        # keep 2 "parallel" grid steps when possible (both v7x TCs get work) while
        # folding extra batches into the per-step GEMM M dim to amortize overhead.
        block_batch = B // 2 if (B % 2 == 0 and B >= 2) else 1
    Bt = block_batch
    assert B % Bt == 0
    grid = (B // Bt,)

    # glue: 'b n c k -> b k n c' (the module's rearrange)
    x_t = jnp.transpose(x, (0, 3, 1, 2)).astype(jnp.float32)       # (B, K, N, C)

    def full_spec(arr):
        nd = arr.ndim
        return pl.BlockSpec(arr.shape, lambda b, nd=nd: (0,) * nd)

    out_t = pl.pallas_call(
        _attention_fuse_kernel,
        out_shape=jax.ShapeDtypeStruct((B, H, N, C), jnp.float32),
        grid_spec=pltpu.PrefetchScalarGridSpec(
            num_scalar_prefetch=0,
            grid=grid,
            in_specs=[
                pl.BlockSpec((Bt, K, N, C), lambda b: (b, 0, 0, 0)),   # x
                full_spec(prep["pslab"]),                               # f32 param slab
                full_spec(prep["vb"]),                                  # fused biases
                full_spec(prep["wqkv"]),                                # bf16 qkv weight
                full_spec(prep["wo"]),                                  # bf16 out weight
            ],
            out_specs=pl.BlockSpec((Bt, H, N, C), lambda b: (b, 0, 0, 0)),
        ),
        compiler_params=pltpu.CompilerParams(dimension_semantics=("parallel",)),
    )(x_t, prep["pslab"], prep["vb"], prep["wqkv"], prep["wo"])

    # glue: 'b k n c -> b n c k'  (k == heads); required by the module's output contract.
    return jnp.transpose(out_t, (0, 2, 3, 1))                       # (B, N, C, HEADS)


def attention_fuse_reference(x, params):
    """Pure-JAX f32 reference mirroring the PyTorch forward (sr_ratio=1, drop_path=0)."""
    eps = 1e-5

    def layer_norm_2d(t, g, b):  # normalize over last two dims
        mu = jnp.mean(t, axis=(-2, -1), keepdims=True)
        var = jnp.mean((t - mu) ** 2, axis=(-2, -1), keepdims=True)
        return (t - mu) / jnp.sqrt(var + eps) * g + b

    sc = jnp.einsum("bnck,kh->bnch", x, params["win"]) + params["bin"]       # (B,N,C,H)
    xn = layer_norm_2d(sc, params["g1"], params["b1"])
    xt = jnp.transpose(xn, (0, 3, 1, 2))                                     # (B,H,N,C)
    q = xt @ params["wq"] + params["bq"]
    k = xt @ params["wk"] + params["bk"]
    v = xt @ params["wv"] + params["bv"]
    attn = (q @ jnp.swapaxes(k, -1, -2)) / math.sqrt(q.shape[-1])
    attn = jax.nn.softmax(attn, axis=-1)
    o = attn @ v
    o = o @ params["wo"] + params["bo"]                                      # (B,H,N,C)
    o = jnp.transpose(o, (0, 2, 3, 1))                                       # (B,N,C,H)
    return sc + layer_norm_2d(o, params["g2"], params["b2"])


if __name__ == "__main__":
    # Small shapes implied by the forward: x (B, N_tokens, input_dim, input_k)
    B, Hs, Ws = 2, 8, 8
    N = Hs * Ws          # 64 tokens
    C = 32               # input_dim
    K = 4                # input_k (number of fused models)
    HEADS = 8            # num_heads
    D = C                # internal_dim (downsample_rate = 1)

    key = jax.random.PRNGKey(0)
    ks = jax.random.split(key, 16)

    params = {
        "win": 0.02 * jax.random.normal(ks[0], (K, HEADS), jnp.float32),   # Linear(K, HEADS) W^T
        "bin": 0.01 * jax.random.normal(ks[1], (HEADS,), jnp.float32),
        "wq": 0.02 * jax.random.normal(ks[2], (C, D), jnp.float32),
        "bq": 0.01 * jax.random.normal(ks[3], (D,), jnp.float32),
        "wk": 0.02 * jax.random.normal(ks[4], (C, D), jnp.float32),
        "bk": 0.01 * jax.random.normal(ks[5], (D,), jnp.float32),
        "wv": 0.02 * jax.random.normal(ks[6], (C, D), jnp.float32),
        "bv": 0.01 * jax.random.normal(ks[7], (D,), jnp.float32),
        "wo": 0.02 * jax.random.normal(ks[8], (D, C), jnp.float32),
        "bo": 0.01 * jax.random.normal(ks[9], (C,), jnp.float32),
        # LayerNorm([C, HEADS]) params (init: weight=1, bias=0; perturbed to exercise paths)
        "g1": 1.0 + 0.05 * jax.random.normal(ks[10], (C, HEADS), jnp.float32),
        "b1": 0.02 * jax.random.normal(ks[11], (C, HEADS), jnp.float32),
        "g2": 1.0 + 0.05 * jax.random.normal(ks[12], (C, HEADS), jnp.float32),
        "b2": 0.02 * jax.random.normal(ks[13], (C, HEADS), jnp.float32),
    }

    x = jax.random.normal(ks[15], (B, N, C, K), jnp.float32)

    # Parameter prep is done once (bf16 casts / slab packing do not re-run per call).
    prep = prepare_params(params)
    fuse = jax.jit(lambda xx: attention_fuse(xx, prep))

    out = fuse(x)
    out = jax.block_until_ready(out)
    assert out.shape == (B, N, C, HEADS), out.shape

    ref = attention_fuse_reference(x, params)
    # Residual / short-cut path is now fully f32; remaining drift comes from the bf16
    # MXU operands (f32 accumulation) in the attention / projection GEMMs.
    max_err = float(jnp.max(jnp.abs(out - ref)))
    assert max_err < 2e-2, f"mismatch vs reference: max abs err = {max_err}"

    print("KERNEL_OK")
</pallas_src>

<mosaic_0001>
module attributes {stable_mosaic.version = 11 : i64} {
  func.func @_attention_fuse_kernel(%arg0: i32, %arg1: memref<1x4x64x32xf32, #tpu.memory_space<vmem>>, %arg2: memref<9x8x1x32xf32, #tpu.memory_space<vmem>>, %arg3: memref<1x128xf32, #tpu.memory_space<vmem>>, %arg4: memref<32x96xbf16, #tpu.memory_space<vmem>>, %arg5: memref<32x32xbf16, #tpu.memory_space<vmem>>, %arg6: memref<1x8x64x32xf32, #tpu.memory_space<vmem>>) attributes {dimension_semantics = [#tpu.dimension_semantics<parallel>], iteration_bounds = array<i64: 2>, scalar_prefetch = 0 : i64, scratch_operands = 0 : i64, tpu.core_type = #tpu.core_type<tc>, window_params = [{transform_indices = @transform_0, window_bounds = array<i64: 1, 4, 64, 32>}, {pipeline_mode = #tpu.pipeline_mode<synchronous>, transform_indices = @transform_1, window_bounds = array<i64: 9, 8, 1, 32>}, {pipeline_mode = #tpu.pipeline_mode<synchronous>, transform_indices = @transform_2, window_bounds = array<i64: 1, 128>}, {pipeline_mode = #tpu.pipeline_mode<synchronous>, transform_indices = @transform_3, window_bounds = array<i64: 32, 96>}, {pipeline_mode = #tpu.pipeline_mode<synchronous>, transform_indices = @transform_4, window_bounds = array<i64: 32, 32>}, {transform_indices = @transform_5, window_bounds = array<i64: 1, 8, 64, 32>}]} {
    %c0 = arith.constant 0 : index
    %c0_0 = arith.constant 0 : index
    %c0_1 = arith.constant 0 : index
    %c0_2 = arith.constant 0 : index
    %0 = vector.load %arg1[%c0, %c0_0, %c0_1, %c0_2] : memref<1x4x64x32xf32, #tpu.memory_space<vmem>>, vector<1x4x64x32xf32>
    %c0_3 = arith.constant 0 : index
    %c0_4 = arith.constant 0 : index
    %c0_5 = arith.constant 0 : index
    %c0_6 = arith.constant 0 : index
    %1 = vector.load %arg2[%c0_3, %c0_4, %c0_5, %c0_6] : memref<9x8x1x32xf32, #tpu.memory_space<vmem>>, vector<1x8x1x32xf32>
    %2 = vector.shape_cast %1 : vector<1x8x1x32xf32> to vector<8x1x32xf32>
    %3 = vector.shape_cast %2 : vector<8x1x32xf32> to vector<1x8x1x32xf32>
    %4 = vector.extract_strided_slice %0 {offsets = [0, 0, 0, 0], sizes = [1, 1, 64, 32], strides = [1, 1, 1, 1]} : vector<1x4x64x32xf32> to vector<1x1x64x32xf32>
    %5 = vector.shape_cast %4 : vector<1x1x64x32xf32> to vector<1x64x32xf32>
    %6 = vector.shape_cast %5 : vector<1x64x32xf32> to vector<1x1x64x32xf32>
    %7 = vector.broadcast %3 : vector<1x8x1x32xf32> to vector<1x8x64x32xf32>
    %8 = vector.broadcast %6 : vector<1x1x64x32xf32> to vector<1x8x64x32xf32>
    %9 = arith.mulf %7, %8 : vector<1x8x64x32xf32>
    %c1 = arith.constant 1 : index
    %c0_7 = arith.constant 0 : index
    %c0_8 = arith.constant 0 : index
    %c0_9 = arith.constant 0 : index
    %10 = vector.load %arg2[%c1, %c0_7, %c0_8, %c0_9] : memref<9x8x1x32xf32, #tpu.memory_space<vmem>>, vector<1x8x1x32xf32>
    %11 = vector.shape_cast %10 : vector<1x8x1x32xf32> to vector<8x1x32xf32>
    %12 = vector.shape_cast %11 : vector<8x1x32xf32> to vector<1x8x1x32xf32>
    %13 = vector.extract_strided_slice %0 {offsets = [0, 1, 0, 0], sizes = [1, 1, 64, 32], strides = [1, 1, 1, 1]} : vector<1x4x64x32xf32> to vector<1x1x64x32xf32>
    %14 = vector.shape_cast %13 : vector<1x1x64x32xf32> to vector<1x64x32xf32>
    %15 = vector.shape_cast %14 : vector<1x64x32xf32> to vector<1x1x64x32xf32>
    %16 = vector.broadcast %12 : vector<1x8x1x32xf32> to vector<1x8x64x32xf32>
    %17 = vector.broadcast %15 : vector<1x1x64x32xf32> to vector<1x8x64x32xf32>
    %18 = arith.mulf %16, %17 : vector<1x8x64x32xf32>
    %19 = arith.addf %9, %18 : vector<1x8x64x32xf32>
    %c2 = arith.constant 2 : index
    %c0_10 = arith.constant 0 : index
    %c0_11 = arith.constant 0 : index
    %c0_12 = arith.constant 0 : index
    %20 = vector.load %arg2[%c2, %c0_10, %c0_11, %c0_12] : memref<9x8x1x32xf32, #tpu.memory_space<vmem>>, vector<1x8x1x32xf32>
    %21 = vector.shape_cast %20 : vector<1x8x1x32xf32> to vector<8x1x32xf32>
    %22 = vector.shape_cast %21 : vector<8x1x32xf32> to vector<1x8x1x32xf32>
    %23 = vector.extract_strided_slice %0 {offsets = [0, 2, 0, 0], sizes = [1, 1, 64, 32], strides = [1, 1, 1, 1]} : vector<1x4x64x32xf32> to vector<1x1x64x32xf32>
    %24 = vector.shape_cast %23 : vector<1x1x64x32xf32> to vector<1x64x32xf32>
    %25 = vector.shape_cast %24 : vector<1x64x32xf32> to vector<1x1x64x32xf32>
    %26 = vector.broadcast %22 : vector<1x8x1x32xf32> to vector<1x8x64x32xf32>
    %27 = vector.broadcast %25 : vector<1x1x64x32xf32> to vector<1x8x64x32xf32>
    %28 = arith.mulf %26, %27 : vector<1x8x64x32xf32>
    %29 = arith.addf %19, %28 : vector<1x8x64x32xf32>
    %c3 = arith.constant 3 : index
    %c0_13 = arith.constant 0 : index
    %c0_14 = arith.constant 0 : index
    %c0_15 = arith.constant 0 : index
    %30 = vector.load %arg2[%c3, %c0_13, %c0_14, %c0_15] : memref<9x8x1x32xf32, #tpu.memory_space<vmem>>, vector<1x8x1x32xf32>
    %31 = vector.shape_cast %30 : vector<1x8x1x32xf32> to vector<8x1x32xf32>
    %32 = vector.shape_cast %31 : vector<8x1x32xf32> to vector<1x8x1x32xf32>
    %33 = vector.extract_strided_slice %0 {offsets = [0, 3, 0, 0], sizes = [1, 1, 64, 32], strides = [1, 1, 1, 1]} : vector<1x4x64x32xf32> to vector<1x1x64x32xf32>
    %34 = vector.shape_cast %33 : vector<1x1x64x32xf32> to vector<1x64x32xf32>
    %35 = vector.shape_cast %34 : vector<1x64x32xf32> to vector<1x1x64x32xf32>
    %36 = vector.broadcast %32 : vector<1x8x1x32xf32> to vector<1x8x64x32xf32>
    %37 = vector.broadcast %35 : vector<1x1x64x32xf32> to vector<1x8x64x32xf32>
    %38 = arith.mulf %36, %37 : vector<1x8x64x32xf32>
    %39 = arith.addf %29, %38 : vector<1x8x64x32xf32>
    %c4 = arith.constant 4 : index
    %c0_16 = arith.constant 0 : index
    %c0_17 = arith.constant 0 : index
    %c0_18 = arith.constant 0 : index
    %40 = vector.load %arg2[%c4, %c0_16, %c0_17, %c0_18] : memref<9x8x1x32xf32, #tpu.memory_space<vmem>>, vector<1x8x1x32xf32>
    %41 = vector.shape_cast %40 : vector<1x8x1x32xf32> to vector<8x1x32xf32>
    %42 = vector.shape_cast %41 : vector<8x1x32xf32> to vector<1x8x1x32xf32>
    %43 = vector.broadcast %42 : vector<1x8x1x32xf32> to vector<1x8x64x32xf32>
    %44 = arith.addf %39, %43 : vector<1x8x64x32xf32>
    %c5 = arith.constant 5 : index
    %c0_19 = arith.constant 0 : index
    %c0_20 = arith.constant 0 : index
    %c0_21 = arith.constant 0 : index
    %45 = vector.load %arg2[%c5, %c0_19, %c0_20, %c0_21] : memref<9x8x1x32xf32, #tpu.memory_space<vmem>>, vector<1x8x1x32xf32>
    %46 = vector.shape_cast %45 : vector<1x8x1x32xf32> to vector<8x1x32xf32>
    %c6 = arith.constant 6 : index
    %c0_22 = arith.constant 0 : index
    %c0_23 = arith.constant 0 : index
    %c0_24 = arith.constant 0 : index
    %47 = vector.load %arg2[%c6, %c0_22, %c0_23, %c0_24] : memref<9x8x1x32xf32, #tpu.memory_space<vmem>>, vector<1x8x1x32xf32>
    %48 = vector.shape_cast %47 : vector<1x8x1x32xf32> to vector<8x1x32xf32>
    %cst = arith.constant dense<0.000000e+00> : vector<1x64x32xf32>
    %49 = vector.multi_reduction <add>, %44, %cst [1] : vector<1x8x64x32xf32> to vector<1x64x32xf32>
    %50 = vector.shape_cast %49 : vector<1x64x32xf32> to vector<1x1x64x32xf32>
    %cst_25 = arith.constant dense<0.000000e+00> : vector<1x1x64xf32>
    %51 = vector.multi_reduction <add>, %50, %cst_25 [3] : vector<1x1x64x32xf32> to vector<1x1x64xf32>
    %52 = vector.shape_cast %51 : vector<1x1x64xf32> to vector<1x1x64x1xf32>
    %cst_26 = arith.constant 3.906250e-03 : f32
    %53 = vector.broadcast %cst_26 : f32 to vector<1x1x64x1xf32>
    %54 = arith.mulf %52, %53 : vector<1x1x64x1xf32>
    %55 = arith.mulf %44, %44 : vector<1x8x64x32xf32>
    %cst_27 = arith.constant dense<0.000000e+00> : vector<1x64x32xf32>
    %56 = vector.multi_reduction <add>, %55, %cst_27 [1] : vector<1x8x64x32xf32> to vector<1x64x32xf32>
    %57 = vector.shape_cast %56 : vector<1x64x32xf32> to vector<1x1x64x32xf32>
    %cst_28 = arith.constant dense<0.000000e+00> : vector<1x1x64xf32>
    %58 = vector.multi_reduction <add>, %57, %cst_28 [3] : vector<1x1x64x32xf32> to vector<1x1x64xf32>
    %59 = vector.shape_cast %58 : vector<1x1x64xf32> to vector<1x1x64x1xf32>
    %cst_29 = arith.constant 3.906250e-03 : f32
    %60 = vector.broadcast %cst_29 : f32 to vector<1x1x64x1xf32>
    %61 = arith.mulf %59, %60 : vector<1x1x64x1xf32>
    %62 = arith.mulf %54, %54 : vector<1x1x64x1xf32>
    %63 = arith.subf %61, %62 : vector<1x1x64x1xf32>
    %cst_30 = arith.constant 0.000000e+00 : f32
    %64 = vector.broadcast %cst_30 : f32 to vector<1x1x64x1xf32>
    %65 = arith.maximumf %63, %64 : vector<1x1x64x1xf32>
    %cst_31 = arith.constant 9.99999974E-6 : f32
    %66 = vector.broadcast %cst_31 : f32 to vector<1x1x64x1xf32>
    %67 = arith.addf %65, %66 : vector<1x1x64x1xf32>
    %68 = math.rsqrt %67 : vector<1x1x64x1xf32>
    %69 = vector.broadcast %54 : vector<1x1x64x1xf32> to vector<1x8x64x32xf32>
    %70 = arith.subf %44, %69 : vector<1x8x64x32xf32>
    %71 = vector.broadcast %68 : vector<1x1x64x1xf32> to vector<1x8x64x32xf32>
    %72 = arith.mulf %70, %71 : vector<1x8x64x32xf32>
    %73 = vector.shape_cast %46 : vector<8x1x32xf32> to vector<1x8x1x32xf32>
    %74 = vector.broadcast %73 : vector<1x8x1x32xf32> to vector<1x8x64x32xf32>
    %75 = arith.mulf %72, %74 : vector<1x8x64x32xf32>
    %76 = vector.shape_cast %48 : vector<8x1x32xf32> to vector<1x8x1x32xf32>
    %77 = vector.broadcast %76 : vector<1x8x1x32xf32> to vector<1x8x64x32xf32>
    %78 = arith.addf %75, %77 : vector<1x8x64x32xf32>
    %79 = vector.shape_cast %78 : vector<1x8x64x32xf32> to vector<512x32xf32>
    %80 = arith.truncf %79 : vector<512x32xf32> to vector<512x32xbf16>
    %c0_32 = arith.constant 0 : index
    %c0_33 = arith.constant 0 : index
    %81 = vector.load %arg4[%c0_32, %c0_33] : memref<32x96xbf16, #tpu.memory_space<vmem>>, vector<32x96xbf16>
    %cst_34 = arith.constant dense<0.000000e+00> : vector<512x96xf32>
    %82 = tpu.matmul %80, %81, %cst_34 {dimension_numbers = #tpu.dot_dimension_numbers<[1], [0], [0], [1], [0, 0, 1, 1], [], []>} : vector<512x32xbf16>, vector<32x96xbf16>, vector<512x96xf32> -> vector<512x96xf32>
    %c0_35 = arith.constant 0 : index
    %c0_36 = arith.constant 0 : index
    %83 = vector.load %arg3[%c0_35, %c0_36] : memref<1x128xf32, #tpu.memory_space<vmem>>, vector<1x96xf32>
    %84 = vector.broadcast %83 : vector<1x96xf32> to vector<512x96xf32>
    %85 = arith.addf %82, %84 : vector<512x96xf32>
    %86 = vector.extract_strided_slice %85 {offsets = [0, 0], sizes = [512, 32], strides = [1, 1]} : vector<512x96xf32> to vector<512x32xf32>
    %87 = vector.shape_cast %86 : vector<512x32xf32> to vector<8x64x32xf32>
    %88 = vector.extract_strided_slice %85 {offsets = [0, 32], sizes = [512, 32], strides = [1, 1]} : vector<512x96xf32> to vector<512x32xf32>
    %89 = vector.shape_cast %88 : vector<512x32xf32> to vector<8x64x32xf32>
    %90 = vector.extract_strided_slice %85 {offsets = [0, 64], sizes = [512, 32], strides = [1, 1]} : vector<512x96xf32> to vector<512x32xf32>
    %91 = vector.shape_cast %90 : vector<512x32xf32> to vector<8x64x32xf32>
    %92 = arith.truncf %87 : vector<8x64x32xf32> to vector<8x64x32xbf16>
    %93 = arith.truncf %89 : vector<8x64x32xf32> to vector<8x64x32xbf16>
    "tpu.trace_start"() <{level = 10 : i32, message = "hnd,hmd->hnm"}> : () -> ()
    %cst_37 = arith.constant dense<0.000000e+00> : vector<8x64x64xf32>
    %94 = tpu.matmul %92, %93, %cst_37 {dimension_numbers = #tpu.dot_dimension_numbers<[2], [2], [1], [1], [0, 0, 0, 1, 1, 1], [0], [0]>} : vector<8x64x32xbf16>, vector<8x64x32xbf16>, vector<8x64x64xf32> -> vector<8x64x64xf32>
    "tpu.trace_stop"() : () -> ()
    %cst_38 = arith.constant dense<0xFF800000> : vector<8x64xf32>
    %95 = vector.multi_reduction <maximumf>, %94, %cst_38 [2] : vector<8x64x64xf32> to vector<8x64xf32>
    %96 = vector.shape_cast %95 : vector<8x64xf32> to vector<8x64x1xf32>
    %97 = vector.broadcast %96 : vector<8x64x1xf32> to vector<8x64x64xf32>
    %98 = arith.subf %94, %97 : vector<8x64x64xf32>
    %99 = math.exp %98 : vector<8x64x64xf32>
    %cst_39 = arith.constant dense<0.000000e+00> : vector<8x64xf32>
    %100 = vector.multi_reduction <add>, %99, %cst_39 [2] : vector<8x64x64xf32> to vector<8x64xf32>
    %101 = vector.shape_cast %100 : vector<8x64xf32> to vector<8x64x1xf32>
    %102 = tpu.reciprocal %101 {approx = true} : vector<8x64x1xf32> -> vector<8x64x1xf32>
    %103 = vector.broadcast %102 : vector<8x64x1xf32> to vector<8x64x64xf32>
    %104 = arith.mulf %99, %103 : vector<8x64x64xf32>
    %105 = arith.truncf %104 : vector<8x64x64xf32> to vector<8x64x64xbf16>
    %106 = arith.truncf %91 : vector<8x64x32xf32> to vector<8x64x32xbf16>
    "tpu.trace_start"() <{level = 10 : i32, message = "hnm,hmd->hnd"}> : () -> ()
    %cst_40 = arith.constant dense<0.000000e+00> : vector<8x64x32xf32>
    %107 = tpu.matmul %105, %106, %cst_40 {dimension_numbers = #tpu.dot_dimension_numbers<[2], [1], [1], [2], [0, 0, 0, 1, 1, 2], [0], [0]>} : vector<8x64x64xbf16>, vector<8x64x32xbf16>, vector<8x64x32xf32> -> vector<8x64x32xf32>
    "tpu.trace_stop"() : () -> ()
    %108 = vector.shape_cast %107 : vector<8x64x32xf32> to vector<512x32xf32>
    %109 = arith.truncf %108 : vector<512x32xf32> to vector<512x32xbf16>
    %c0_41 = arith.constant 0 : index
    %c0_42 = arith.constant 0 : index
    %110 = vector.load %arg5[%c0_41, %c0_42] : memref<32x32xbf16, #tpu.memory_space<vmem>>, vector<32x32xbf16>
    %cst_43 = arith.constant dense<0.000000e+00> : vector<512x32xf32>
    %111 = tpu.matmul %109, %110, %cst_43 {dimension_numbers = #tpu.dot_dimension_numbers<[1], [0], [0], [1], [0, 0, 1, 1], [], []>} : vector<512x32xbf16>, vector<32x32xbf16>, vector<512x32xf32> -> vector<512x32xf32>
    %c0_44 = arith.constant 0 : index
    %c96 = arith.constant 96 : index
    %112 = vector.load %arg3[%c0_44, %c96] : memref<1x128xf32, #tpu.memory_space<vmem>>, vector<1x32xf32>
    %113 = vector.broadcast %112 : vector<1x32xf32> to vector<512x32xf32>
    %114 = arith.addf %111, %113 : vector<512x32xf32>
    %115 = vector.shape_cast %114 : vector<512x32xf32> to vector<1x8x64x32xf32>
    %c7 = arith.constant 7 : index
    %c0_45 = arith.constant 0 : index
    %c0_46 = arith.constant 0 : index
    %c0_47 = arith.constant 0 : index
    %116 = vector.load %arg2[%c7, %c0_45, %c0_46, %c0_47] : memref<9x8x1x32xf32, #tpu.memory_space<vmem>>, vector<1x8x1x32xf32>
    %117 = vector.shape_cast %116 : vector<1x8x1x32xf32> to vector<8x1x32xf32>
    %c8 = arith.constant 8 : index
    %c0_48 = arith.constant 0 : index
    %c0_49 = arith.constant 0 : index
    %c0_50 = arith.constant 0 : index
    %118 = vector.load %arg2[%c8, %c0_48, %c0_49, %c0_50] : memref<9x8x1x32xf32, #tpu.memory_space<vmem>>, vector<1x8x1x32xf32>
    %119 = vector.shape_cast %118 : vector<1x8x1x32xf32> to vector<8x1x32xf32>
    %cst_51 = arith.constant dense<0.000000e+00> : vector<1x64x32xf32>
    %120 = vector.multi_reduction <add>, %115, %cst_51 [1] : vector<1x8x64x32xf32> to vector<1x64x32xf32>
    %121 = vector.shape_cast %120 : vector<1x64x32xf32> to vector<1x1x64x32xf32>
    %cst_52 = arith.constant dense<0.000000e+00> : vector<1x1x64xf32>
    %122 = vector.multi_reduction <add>, %121, %cst_52 [3] : vector<1x1x64x32xf32> to vector<1x1x64xf32>
    %123 = vector.shape_cast %122 : vector<1x1x64xf32> to vector<1x1x64x1xf32>
    %cst_53 = arith.constant 3.906250e-03 : f32
    %124 = vector.broadcast %cst_53 : f32 to vector<1x1x64x1xf32>
    %125 = arith.mulf %123, %124 : vector<1x1x64x1xf32>
    %126 = arith.mulf %115, %115 : vector<1x8x64x32xf32>
    %cst_54 = arith.constant dense<0.000000e+00> : vector<1x64x32xf32>
    %127 = vector.multi_reduction <add>, %126, %cst_54 [1] : vector<1x8x64x32xf32> to vector<1x64x32xf32>
    %128 = vector.shape_cast %127 : vector<1x64x32xf32> to vector<1x1x64x32xf32>
    %cst_55 = arith.constant dense<0.000000e+00> : vector<1x1x64xf32>
    %129 = vector.multi_reduction <add>, %128, %cst_55 [3] : vector<1x1x64x32xf32> to vector<1x1x64xf32>
    %130 = vector.shape_cast %129 : vector<1x1x64xf32> to vector<1x1x64x1xf32>
    %cst_56 = arith.constant 3.906250e-03 : f32
    %131 = vector.broadcast %cst_56 : f32 to vector<1x1x64x1xf32>
    %132 = arith.mulf %130, %131 : vector<1x1x64x1xf32>
    %133 = arith.mulf %125, %125 : vector<1x1x64x1xf32>
    %134 = arith.subf %132, %133 : vector<1x1x64x1xf32>
    %cst_57 = arith.constant 0.000000e+00 : f32
    %135 = vector.broadcast %cst_57 : f32 to vector<1x1x64x1xf32>
    %136 = arith.maximumf %134, %135 : vector<1x1x64x1xf32>
    %cst_58 = arith.constant 9.99999974E-6 : f32
    %137 = vector.broadcast %cst_58 : f32 to vector<1x1x64x1xf32>
    %138 = arith.addf %136, %137 : vector<1x1x64x1xf32>
    %139 = math.rsqrt %138 : vector<1x1x64x1xf32>
    %140 = vector.broadcast %125 : vector<1x1x64x1xf32> to vector<1x8x64x32xf32>
    %141 = arith.subf %115, %140 : vector<1x8x64x32xf32>
    %142 = vector.broadcast %139 : vector<1x1x64x1xf32> to vector<1x8x64x32xf32>
    %143 = arith.mulf %141, %142 : vector<1x8x64x32xf32>
    %144 = vector.shape_cast %117 : vector<8x1x32xf32> to vector<1x8x1x32xf32>
    %145 = vector.broadcast %144 : vector<1x8x1x32xf32> to vector<1x8x64x32xf32>
    %146 = arith.mulf %143, %145 : vector<1x8x64x32xf32>
    %147 = vector.shape_cast %119 : vector<8x1x32xf32> to vector<1x8x1x32xf32>
    %148 = vector.broadcast %147 : vector<1x8x1x32xf32> to vector<1x8x64x32xf32>
    %149 = arith.addf %146, %148 : vector<1x8x64x32xf32>
    %150 = arith.addf %44, %149 : vector<1x8x64x32xf32>
    %c0_59 = arith.constant 0 : index
    %c0_60 = arith.constant 0 : index
    %c0_61 = arith.constant 0 : index
    %c0_62 = arith.constant 0 : index
    %151 = vector.load %arg6[%c0_59, %c0_60, %c0_61, %c0_62] : memref<1x8x64x32xf32, #tpu.memory_space<vmem>>, vector<1x8x64x32xf32>
    tpu.vector_store %arg6[%c0_59, %c0_60, %c0_61, %c0_62], %150 {strides = array<i32>} : memref<1x8x64x32xf32, #tpu.memory_space<vmem>>, vector<1x8x64x32xf32>,
    return
  }
  func.func @transform_0(%arg0: i32) -> (i32, i32, i32, i32) {
    %c0_i32 = arith.constant 0 : i32
    %c0_i32_0 = arith.constant 0 : i32
    %c0_i32_1 = arith.constant 0 : i32
    %c0_i32_2 = arith.constant 0 : i32
    return %arg0, %c0_i32, %c0_i32_0, %c0_i32_1 : i32, i32, i32, i32
  }
  func.func @transform_1(%arg0: i32) -> (i32, i32, i32, i32) {
    %c0_i32 = arith.constant 0 : i32
    %c0_i32_0 = arith.constant 0 : i32
    %c0_i32_1 = arith.constant 0 : i32
    %c0_i32_2 = arith.constant 0 : i32
    %c0_i32_3 = arith.constant 0 : i32
    return %c0_i32, %c0_i32_0, %c0_i32_1, %c0_i32_2 : i32, i32, i32, i32
  }
  func.func @transform_2(%arg0: i32) -> (i32, i32) {
    %c0_i32 = arith.constant 0 : i32
    %c0_i32_0 = arith.constant 0 : i32
    %c0_i32_1 = arith.constant 0 : i32
    return %c0_i32, %c0_i32_0 : i32, i32
  }
  func.func @transform_3(%arg0: i32) -> (i32, i32) {
    %c0_i32 = arith.constant 0 : i32
    %c0_i32_0 = arith.constant 0 : i32
    %c0_i32_1 = arith.constant 0 : i32
    return %c0_i32, %c0_i32_0 : i32, i32
  }
  func.func @transform_4(%arg0: i32) -> (i32, i32) {
    %c0_i32 = arith.constant 0 : i32
    %c0_i32_0 = arith.constant 0 : i32
    %c0_i32_1 = arith.constant 0 : i32
    return %c0_i32, %c0_i32_0 : i32, i32
  }
  func.func @transform_5(%arg0: i32) -> (i32, i32, i32, i32) {
    %c0_i32 = arith.constant 0 : i32
    %c0_i32_0 = arith.constant 0 : i32
    %c0_i32_1 = arith.constant 0 : i32
    %c0_i32_2 = arith.constant 0 : i32
    return %arg0, %c0_i32, %c0_i32_0, %c0_i32_1 : i32, i32, i32, i32
  }
}

</mosaic_0001>

<llo_original>
// kernel: _lambda_.1
$region0: #{_lambda_.1}
  #allocation0 [shape = 'u32[]', space=smem, size = 0x4, offset = 0x4, fixed_abs, tag = 'smem constant byte address 0x4 - core index']
  #allocation1 [shape = 'u32[72,128]{1,0:T(1,128)}', space=vmem, size = 0x9000, scoped, tag = 'internal scratch']
  %s0 = inlined_call_operand.vmem [shape: f32[2,4,64,32], index: 0, kind: input, shape index: {}]
  %s1 = inlined_call_operand.vmem [shape: f32[9,8,1,32], index: 1, kind: input, shape index: {}]
  %s2 = inlined_call_operand.vmem [shape: f32[1,128], index: 2, kind: input, shape index: {}]
  %s3 = inlined_call_operand.vmem [shape: bf16[32,96], index: 3, kind: input, shape index: {}]
  %s4 = inlined_call_operand.vmem [shape: bf16[32,32], index: 4, kind: input, shape index: {}]
  %s5 = inlined_call_operand.vmem [shape: f32[2,8,64,32], index: 5, kind: output, shape index: {}]
  %s6 = sld [smem:[#allocation0]]
  $region53: #{_lambda_.1} parent=0
    _
  %s8 = ssub.s32 1, %s6
  %s9 = scalar_select 0, %s8, %s6
  loop: start=0, step=1, limit=4
  $region2: #{_lambda_.1} parent=0 // loop_pre_header
    _
  $region3: #{_lambda_.1} parent=0 // loop_header
    %s11 = sphi 0, %s15
    %p12 = scmp.ge.s32.totalorder %s11, 4
    %s21 = sphi 0, %s23
    %s24 = sphi 0, %s21
    %s25 = sphi 0, %s24
    %s41 = sphi 0, %s25
    %s45 = sphi 0, %s45
    %s47 = sphi 0, %s45
    %s48 = sphi 0, %s47
    %s62 = sphi 0, %s48
    %s66 = sphi 0, %s66
    %s68 = sphi 0, %s66
    %s69 = sphi 0, %s68
    %s83 = sphi 0, %s69
    %s87 = sphi 0, %s87
    %s89 = sphi 0, %s87
    %s90 = sphi 0, %s89
    %s104 = sphi 0, %s90
    %s108 = sphi 0, %s108
    %s110 = sphi 0, %s108
    %s111 = sphi 0, %s110
    %s125 = sphi 0, %s111
    %s131 = sphi 0, %s133
    %s134 = sphi 0, %s131
    %s135 = sphi 0, %s134
    %s151 = sphi 0, %s135
  $region4: #{_lambda_.1} parent=0 // loop_header_branch
    %14 = sbr.rel (%p12) target = $region8
  $region5: #{_lambda_.1} parent=0 // loop_body
    %s16 = ssub.s32 %s11, 1
    %s17 = ssub.s32 %s11, 2
    %s18 = sadd.s32 %s11, 1
    %s19 = ssub.s32 %s11, %s18
    %p20 = scmp.eq.s32.totalorder %s19, 0
    %s22 = sadd.s32 %s21, 1
    %s23 = scalar_select %p20, %s21, %s22
    %p26 = pneg %p20
    %p27 = scmp.eq.s32.totalorder %s11, 1
    %p28 = por %p26, %p27
    %p29 = scmp.ne.s32.totalorder %s21, %s24
    %p30 = scmp.eq.s32.totalorder %s11, 0
    %p31 = por %p29, %p30
    %p32 = scmp.ne.s32.totalorder %s21, %s24
    %p33 = scmp.eq.s32.totalorder %s16, 1
    %p34 = por %p32, %p33
    %p35 = scmp.ne.s32.totalorder %s24, %s25
    %p36 = scmp.eq.s32.totalorder %s16, 0
    %p37 = por %p35, %p36
    %p38 = scmp.ne.s32.totalorder %s24, %s25
    %p39 = scmp.eq.s32.totalorder %s17, 1
    %p40 = por %p38, %p39
    %p42 = scmp.ne.s32.totalorder %s25, %s41
    %p43 = scmp.eq.s32.totalorder %s17, 0
    %p44 = por %p42, %p43
    %s46 = sadd.s32 %s45, 1
    %p49 = scmp.eq.s32.totalorder %s11, 1
    %p50 = scmp.ne.s32.totalorder %s45, %s47
    %p51 = scmp.eq.s32.totalorder %s11, 0
    %p52 = por %p50, %p51
    %p53 = scmp.ne.s32.totalorder %s45, %s47
    %p54 = scmp.eq.s32.totalorder %s16, 1
    %p55 = por %p53, %p54
    %p56 = scmp.ne.s32.totalorder %s47, %s48
    %p57 = scmp.eq.s32.totalorder %s16, 0
    %p58 = por %p56, %p57
    %p59 = scmp.ne.s32.totalorder %s47, %s48
    %p60 = scmp.eq.s32.totalorder %s17, 1
    %p61 = por %p59, %p60
    %p63 = scmp.ne.s32.totalorder %s48, %s62
    %p64 = scmp.eq.s32.totalorder %s17, 0
    %p65 = por %p63, %p64
    %s67 = sadd.s32 %s66, 1
    %p70 = scmp.eq.s32.totalorder %s11, 1
    %p71 = scmp.ne.s32.totalorder %s66, %s68
    %p72 = scmp.eq.s32.totalorder %s11, 0
    %p73 = por %p71, %p72
    %p74 = scmp.ne.s32.totalorder %s66, %s68
    %p75 = scmp.eq.s32.totalorder %s16, 1
    %p76 = por %p74, %p75
    %p77 = scmp.ne.s32.totalorder %s68, %s69
    %p78 = scmp.eq.s32.totalorder %s16, 0
    %p79 = por %p77, %p78
    %p80 = scmp.ne.s32.totalorder %s68, %s69
    %p81 = scmp.eq.s32.totalorder %s17, 1
    %p82 = por %p80, %p81
    %p84 = scmp.ne.s32.totalorder %s69, %s83
    %p85 = scmp.eq.s32.totalorder %s17, 0
    %p86 = por %p84, %p85
    %s88 = sadd.s32 %s87, 1
    %p91 = scmp.eq.s32.totalorder %s11, 1
    %p92 = scmp.ne.s32.totalorder %s87, %s89
    %p93 = scmp.eq.s32.totalorder %s11, 0
    %p94 = por %p92, %p93
    %p95 = scmp.ne.s32.totalorder %s87, %s89
    %p96 = scmp.eq.s32.totalorder %s16, 1
    %p97 = por %p95, %p96
    %p98 = scmp.ne.s32.totalorder %s89, %s90
    %p99 = scmp.eq.s32.totalorder %s16, 0
    %p100 = por %p98, %p99
    %p101 = scmp.ne.s32.totalorder %s89, %s90
    %p102 = scmp.eq.s32.totalorder %s17, 1
    %p103 = por %p101, %p102
    %p105 = scmp.ne.s32.totalorder %s90, %s104
    %p106 = scmp.eq.s32.totalorder %s17, 0
    %p107 = por %p105, %p106
    %s109 = sadd.s32 %s108, 1
    %p112 = scmp.eq.s32.totalorder %s11, 1
    %p113 = scmp.ne.s32.totalorder %s108, %s110
    %p114 = scmp.eq.s32.totalorder %s11, 0
    %p115 = por %p113, %p114
    %p116 = scmp.ne.s32.totalorder %s108, %s110
    %p117 = scmp.eq.s32.totalorder %s16, 1
    %p118 = por %p116, %p117
    %p119 = scmp.ne.s32.totalorder %s110, %s111
    %p120 = scmp.eq.s32.totalorder %s16, 0
    %p121 = por %p119, %p120
    %p122 = scmp.ne.s32.totalorder %s110, %s111
    %p123 = scmp.eq.s32.totalorder %s17, 1
    %p124 = por %p122, %p123
    %p126 = scmp.ne.s32.totalorder %s111, %s125
    %p127 = scmp.eq.s32.totalorder %s17, 0
    %p128 = por %p126, %p127
    %s129 = ssub.s32 %s11, %s18
    %p130 = scmp.eq.s32.totalorder %s129, 0
    %s132 = sadd.s32 %s131, 1
    %s133 = scalar_select %p130, %s131, %s132
    %p136 = pneg %p130
    %p137 = scmp.eq.s32.totalorder %s11, 1
    %p138 = por %p136, %p137
    %p139 = scmp.ne.s32.totalorder %s131, %s134
    %p140 = scmp.eq.s32.totalorder %s11, 0
    %p141 = por %p139, %p140
    %p142 = scmp.ne.s32.totalorder %s131, %s134
    %p143 = scmp.eq.s32.totalorder %s16, 1
    %p144 = por %p142, %p143
    %p145 = scmp.ne.s32.totalorder %s134, %s135
    %p146 = scmp.eq.s32.totalorder %s16, 0
    %p147 = por %p145, %p146
    %p148 = scmp.ne.s32.totalorder %s134, %s135
    %p149 = scmp.eq.s32.totalorder %s17, 1
    %p150 = por %p148, %p149
    %p152 = scmp.ne.s32.totalorder %s135, %s151
    %p153 = scmp.eq.s32.totalorder %s17, 0
    %p154 = por %p152, %p153
    %p155 = scmp.le.s32.totalorder 1, %s11
    %p156 = scmp.lt.s32.totalorder %s11, 3
    %p157 = pnand %p155, %p156
    %p158 = pneg %p157
    // Predicated region
    $region9: #{_lambda_.1} parent=5 // pred_check
      _
    $region10: #{_lambda_.1} parent=5 // pred_check_branch
      %160 = sbr.rel (%p157) target = $region12
    $region11: #{_lambda_.1} parent=5 // pred_region
      %s161 = ssub.s32 %s11, 1
      // Predicated region
      $region13: #{_lambda_.1} parent=11 // pred_check
        %p162 = pneg %p58
      $region14: #{_lambda_.1} parent=11 // pred_check_branch
        %164 = sbr.rel (%p162) target = $region16
      $region15: #{_lambda_.1} parent=11 // pred_region
        _
      $region16: #{_lambda_.1} parent=11 // pred_fallthru
        _
      // Predicated region
      $region17: #{_lambda_.1} parent=11 // pred_check
        %p165 = pneg %p79
      $region18: #{_lambda_.1} parent=11 // pred_check_branch
        %167 = sbr.rel (%p165) target = $region20
      $region19: #{_lambda_.1} parent=11 // pred_region
        _
      $region20: #{_lambda_.1} parent=11 // pred_fallthru
        _
      // Predicated region
      $region21: #{_lambda_.1} parent=11 // pred_check
        %p168 = pneg %p100
      $region22: #{_lambda_.1} parent=11 // pred_check_branch
        %170 = sbr.rel (%p168) target = $region24
      $region23: #{_lambda_.1} parent=11 // pred_region
        _
      $region24: #{_lambda_.1} parent=11 // pred_fallthru
        _
      // Predicated region
      $region25: #{_lambda_.1} parent=11 // pred_check
        %p171 = pneg %p121
      $region26: #{_lambda_.1} parent=11 // pred_check_branch
        %173 = sbr.rel (%p171) target = $region28
      $region27: #{_lambda_.1} parent=11 // pred_region
        _
      $region28: #{_lambda_.1} parent=11 // pred_fallthru
        _
    $region12: #{_lambda_.1} parent=5 // pred_fallthru
      _
    %p174 = scmp.lt.s32.totalorder %s11, 2
    // Predicated region
    $region29: #{_lambda_.1} parent=5 // pred_check
      %p175 = pneg %p174
    $region30: #{_lambda_.1} parent=5 // pred_check_branch
      %177 = sbr.rel (%p175) target = $region32
    $region31: #{_lambda_.1} parent=5 // pred_region
      // Predicated region
      $region33: #{_lambda_.1} parent=31 // pred_check
        %p178 = pneg %p31
      $region34: #{_lambda_.1} parent=31 // pred_check_branch
        %180 = sbr.rel (%p178) target = $region36
      $region35: #{_lambda_.1} parent=31 // pred_region
        %p181 = scmp.lt.s32.totalorder %s11, 1
        %s182 = scalar_select %p181, %s11, 1
        %s183 = smul.addr %s182, 32
        %s184 = smul.addr %s183, 8
        %s185 = scalar_lea.vmem %s0, %s184
      $region36: #{_lambda_.1} parent=31 // pred_fallthru
        _
    $region32: #{_lambda_.1} parent=5 // pred_fallthru
      _
    %p186 = scmp.le.s32.totalorder 1, %s11
    %p187 = scmp.lt.s32.totalorder %s11, 3
    %p188 = pnand %p186, %p187
    %p189 = pneg %p188
    // Predicated region
    $region37: #{_lambda_.1} parent=5 // pred_check
      _
    $region38: #{_lambda_.1} parent=5 // pred_check_branch
      %191 = sbr.rel (%p188) target = $region40
    $region39: #{_lambda_.1} parent=5 // pred_region
      %s192 = ssub.s32 %s11, 1
      %p193 = scmp.lt.s32.totalorder %s16, 1
      %s194 = scalar_select %p193, %s16, 1
      %s195 = smul.addr %s194, 32
      %s196 = smul.addr %s195, 8
      %s197 = scalar_lea.vmem %s0, %s196
      %p198 = pneg %p37
      %p199 = pneg %p34
      %p200 = pneg %p58
      %p201 = pneg %p55
      %p202 = pneg %p79
      %p203 = pneg %p76
      %p204 = pneg %p100
      %p205 = pneg %p97
      %p206 = pneg %p121
      %p207 = pneg %p118
      %p208 = pneg %p147
      %p209 = pneg %p144
      %p210 = scmp.lt.s32.totalorder %s16, 1
      %s211 = scalar_select %p210, %s16, 1
      %s212 = smul.addr %s211, 64
      %s213 = smul.addr %s212, 8
      %s214 = scalar_lea.vmem %s5, %s213
      %p215 = scmp.lt.s32.totalorder %s16, 1
      %s216 = scalar_select %p215, %s16, 1
      %s217 = smul.addr %s216, 32
      %s218 = smul.addr %s217, 8
      %s219 = scalar_lea.vmem %s0, %s218
      %p220 = scmp.lt.s32.totalorder %s16, 1
      %s221 = scalar_select %p220, %s16, 1
      %s222 = smul.addr %s221, 64
      %s223 = smul.addr %s222, 8
      %s224 = scalar_lea.vmem %s5, %s223
      %v226 = vld [vmem:[%s219] sm:$0xff]
      %v227 = vld [vmem:[%s219 + $0x8] sm:$0xff]
      %v228 = vld [vmem:[%s219 + $0x10] sm:$0xff]
      %v229 = vld [vmem:[%s219 + $0x18] sm:$0xff]
      %v230 = vld [vmem:[%s219 + $0x20] sm:$0xff]
      %v231 = vld [vmem:[%s219 + $0x28] sm:$0xff]
      %v232 = vld [vmem:[%s219 + $0x30] sm:$0xff]
      %v233 = vld [vmem:[%s219 + $0x38] sm:$0xff]
      %v234 = vld [vmem:[%s219 + $0x40] sm:$0xff]
      %v235 = vld [vmem:[%s219 + $0x48] sm:$0xff]
      %v236 = vld [vmem:[%s219 + $0x50] sm:$0xff]
      %v237 = vld [vmem:[%s219 + $0x58] sm:$0xff]
      %v238 = vld [vmem:[%s219 + $0x60] sm:$0xff]
      %v239 = vld [vmem:[%s219 + $0x68] sm:$0xff]
      %v240 = vld [vmem:[%s219 + $0x70] sm:$0xff]
      %v241 = vld [vmem:[%s219 + $0x78] sm:$0xff]
      %v242 = vld [vmem:[%s219 + $0x80] sm:$0xff]
      %v243 = vld [vmem:[%s219 + $0x88] sm:$0xff]
      %v244 = vld [vmem:[%s219 + $0x90] sm:$0xff]
      %v245 = vld [vmem:[%s219 + $0x98] sm:$0xff]
      %v246 = vld [vmem:[%s219 + $0xa0] sm:$0xff]
      %v247 = vld [vmem:[%s219 + $0xa8] sm:$0xff]
      %v248 = vld [vmem:[%s219 + $0xb0] sm:$0xff]
      %v249 = vld [vmem:[%s219 + $0xb8] sm:$0xff]
      %v250 = vld [vmem:[%s219 + $0xc0] sm:$0xff]
      %v251 = vld [vmem:[%s219 + $0xc8] sm:$0xff]
      %v252 = vld [vmem:[%s219 + $0xd0] sm:$0xff]
      %v253 = vld [vmem:[%s219 + $0xd8] sm:$0xff]
      %v254 = vld [vmem:[%s219 + $0xe0] sm:$0xff]
      %v255 = vld [vmem:[%s219 + $0xe8] sm:$0xff]
      %v256 = vld [vmem:[%s219 + $0xf0] sm:$0xff]
      %v257 = vld [vmem:[%s219 + $0xf8] sm:$0xff]
      %v258 = vld [vmem:[%s1] sm:$0x1]
      %v259 = vld [vmem:[%s1 + $0x1] sm:$0x1]
      %v260 = vld [vmem:[%s1 + $0x2] sm:$0x1]
      %v261 = vld [vmem:[%s1 + $0x3] sm:$0x1]
      %v262 = vld [vmem:[%s1 + $0x4] sm:$0x1]
      %v263 = vld [vmem:[%s1 + $0x5] sm:$0x1]
      %v264 = vld [vmem:[%s1 + $0x6] sm:$0x1]
      %v265 = vld [vmem:[%s1 + $0x7] sm:$0x1]
      %v274 = vperm.slane %v258, 0
      %v275 = vperm.slane %v259, 0
      %v276 = vperm.slane %v260, 0
      %v277 = vperm.slane %v261, 0
      %v278 = vperm.slane %v262, 0
      %v279 = vperm.slane %v263, 0
      %v280 = vperm.slane %v264, 0
      %v281 = vperm.slane %v265, 0
      %v290 = vmul.f32 %v274, %v226
      %v291 = vmul.f32 %v274, %v227
      %v292 = vmul.f32 %v274, %v228
      %v293 = vmul.f32 %v274, %v229
      %v294 = vmul.f32 %v274, %v230
      %v295 = vmul.f32 %v274, %v231
      %v296 = vmul.f32 %v274, %v232
      %v297 = vmul.f32 %v274, %v233
      %v298 = vmul.f32 %v275, %v226
      %v299 = vmul.f32 %v275, %v227
      %v300 = vmul.f32 %v275, %v228
      %v301 = vmul.f32 %v275, %v229
      %v302 = vmul.f32 %v275, %v230
      %v303 = vmul.f32 %v275, %v231
      %v304 = vmul.f32 %v275, %v232
      %v305 = vmul.f32 %v275, %v233
      %v306 = vmul.f32 %v276, %v226
      %v307 = vmul.f32 %v276, %v227
      %v308 = vmul.f32 %v276, %v228
      %v309 = vmul.f32 %v276, %v229
      %v310 = vmul.f32 %v276, %v230
      %v311 = vmul.f32 %v276, %v231
      %v312 = vmul.f32 %v276, %v232
      %v313 = vmul.f32 %v276, %v233
      %v314 = vmul.f32 %v277, %v226
      %v315 = vmul.f32 %v277, %v227
      %v316 = vmul.f32 %v277, %v228
      %v317 = vmul.f32 %v277, %v229
      %v318 = vmul.f32 %v277, %v230
      %v319 = vmul.f32 %v277, %v231
      %v320 = vmul.f32 %v277, %v232
      %v321 = vmul.f32 %v277, %v233
      %v322 = vmul.f32 %v278, %v226
      %v323 = vmul.f32 %v278, %v227
      %v324 = vmul.f32 %v278, %v228
      %v325 = vmul.f32 %v278, %v229
      %v326 = vmul.f32 %v278, %v230
      %v327 = vmul.f32 %v278, %v231
      %v328 = vmul.f32 %v278, %v232
      %v329 = vmul.f32 %v278, %v233
      %v330 = vmul.f32 %v279, %v226
      %v331 = vmul.f32 %v279, %v227
      %v332 = vmul.f32 %v279, %v228
      %v333 = vmul.f32 %v279, %v229
      %v334 = vmul.f32 %v279, %v230
      %v335 = vmul.f32 %v279, %v231
      %v336 = vmul.f32 %v279, %v232
      %v337 = vmul.f32 %v279, %v233
      %v338 = vmul.f32 %v280, %v226
      %v339 = vmul.f32 %v280, %v227
      %v340 = vmul.f32 %v280, %v228
      %v341 = vmul.f32 %v280, %v229
      %v342 = vmul.f32 %v280, %v230
      %v343 = vmul.f32 %v280, %v231
      %v344 = vmul.f32 %v280, %v232
      %v345 = vmul.f32 %v280, %v233
      %v346 = vmul.f32 %v281, %v226
      %v347 = vmul.f32 %v281, %v227
      %v348 = vmul.f32 %v281, %v228
      %v349 = vmul.f32 %v281, %v229
      %v350 = vmul.f32 %v281, %v230
      %v351 = vmul.f32 %v281, %v231
      %v352 = vmul.f32 %v281, %v232
      %v353 = vmul.f32 %v281, %v233
      %s354 = scalar_lea.vmem %s1, 8
      %v355 = vld [vmem:[%s354] sm:$0x1]
      %v356 = vld [vmem:[%s354 + $0x1] sm:$0x1]
      %v357 = vld [vmem:[%s354 + $0x2] sm:$0x1]
      %v358 = vld [vmem:[%s354 + $0x3] sm:$0x1]
      %v359 = vld [vmem:[%s354 + $0x4] sm:$0x1]
      %v360 = vld [vmem:[%s354 + $0x5] sm:$0x1]
      %v361 = vld [vmem:[%s354 + $0x6] sm:$0x1]
      %v362 = vld [vmem:[%s354 + $0x7] sm:$0x1]
      %v371 = vperm.slane %v355, 0
      %v372 = vperm.slane %v356, 0
      %v373 = vperm.slane %v357, 0
      %v374 = vperm.slane %v358, 0
      %v375 = vperm.slane %v359, 0
      %v376 = vperm.slane %v360, 0
      %v377 = vperm.slane %v361, 0
      %v378 = vperm.slane %v362, 0
      %v387 = vmul.f32 %v371, %v234
      %v388 = vmul.f32 %v371, %v235
      %v389 = vmul.f32 %v371, %v236
      %v390 = vmul.f32 %v371, %v237
      %v391 = vmul.f32 %v371, %v238
      %v392 = vmul.f32 %v371, %v239
      %v393 = vmul.f32 %v371, %v240
      %v394 = vmul.f32 %v371, %v241
      %v395 = vmul.f32 %v372, %v234
      %v396 = vmul.f32 %v372, %v235
      %v397 = vmul.f32 %v372, %v236
      %v398 = vmul.f32 %v372, %v237
      %v399 = vmul.f32 %v372, %v238
      %v400 = vmul.f32 %v372, %v239
      %v401 = vmul.f32 %v372, %v240
      %v402 = vmul.f32 %v372, %v241
      %v403 = vmul.f32 %v373, %v234
      %v404 = vmul.f32 %v373, %v235
      %v405 = vmul.f32 %v373, %v236
      %v406 = vmul.f32 %v373, %v237
      %v407 = vmul.f32 %v373, %v238
      %v408 = vmul.f32 %v373, %v239
      %v409 = vmul.f32 %v373, %v240
      %v410 = vmul.f32 %v373, %v241
      %v411 = vmul.f32 %v374, %v234
      %v412 = vmul.f32 %v374, %v235
      %v413 = vmul.f32 %v374, %v236
      %v414 = vmul.f32 %v374, %v237
      %v415 = vmul.f32 %v374, %v238
      %v416 = vmul.f32 %v374, %v239
      %v417 = vmul.f32 %v374, %v240
      %v418 = vmul.f32 %v374, %v241
      %v419 = vmul.f32 %v375, %v234
      %v420 = vmul.f32 %v375, %v235
      %v421 = vmul.f32 %v375, %v236
      %v422 = vmul.f32 %v375, %v237
      %v423 = vmul.f32 %v375, %v238
      %v424 = vmul.f32 %v375, %v239
      %v425 = vmul.f32 %v375, %v240
      %v426 = vmul.f32 %v375, %v241
      %v427 = vmul.f32 %v376, %v234
      %v428 = vmul.f32 %v376, %v235
      %v429 = vmul.f32 %v376, %v236
      %v430 = vmul.f32 %v376, %v237
      %v431 = vmul.f32 %v376, %v238
      %v432 = vmul.f32 %v376, %v239
      %v433 = vmul.f32 %v376, %v240
      %v434 = vmul.f32 %v376, %v241
      %v435 = vmul.f32 %v377, %v234
      %v436 = vmul.f32 %v377, %v235
      %v437 = vmul.f32 %v377, %v236
      %v438 = vmul.f32 %v377, %v237
      %v439 = vmul.f32 %v377, %v238
      %v440 = vmul.f32 %v377, %v239
      %v441 = vmul.f32 %v377, %v240
      %v442 = vmul.f32 %v377, %v241
      %v443 = vmul.f32 %v378, %v234
      %v444 = vmul.f32 %v378, %v235
      %v445 = vmul.f32 %v378, %v236
      %v446 = vmul.f32 %v378, %v237
      %v447 = vmul.f32 %v378, %v238
      %v448 = vmul.f32 %v378, %v239
      %v449 = vmul.f32 %v378, %v240
      %v450 = vmul.f32 %v378, %v241
      %v451 = vadd.f32 %v290, %v387
      %v452 = vadd.f32 %v291, %v388
      %v453 = vadd.f32 %v292, %v389
      %v454 = vadd.f32 %v293, %v390
      %v455 = vadd.f32 %v294, %v391
      %v456 = vadd.f32 %v295, %v392
      %v457 = vadd.f32 %v296, %v393
      %v458 = vadd.f32 %v297, %v394
      %v459 = vadd.f32 %v298, %v395
      %v460 = vadd.f32 %v299, %v396
      %v461 = vadd.f32 %v300, %v397
      %v462 = vadd.f32 %v301, %v398
      %v463 = vadd.f32 %v302, %v399
      %v464 = vadd.f32 %v303, %v400
      %v465 = vadd.f32 %v304, %v401
      %v466 = vadd.f32 %v305, %v402
      %v467 = vadd.f32 %v306, %v403
      %v468 = vadd.f32 %v307, %v404
      %v469 = vadd.f32 %v308, %v405
      %v470 = vadd.f32 %v309, %v406
      %v471 = vadd.f32 %v310, %v407
      %v472 = vadd.f32 %v311, %v408
      %v473 = vadd.f32 %v312, %v409
      %v474 = vadd.f32 %v313, %v410
      %v475 = vadd.f32 %v314, %v411
      %v476 = vadd.f32 %v315, %v412
      %v477 = vadd.f32 %v316, %v413
      %v478 = vadd.f32 %v317, %v414
      %v479 = vadd.f32 %v318, %v415
      %v480 = vadd.f32 %v319, %v416
      %v481 = vadd.f32 %v320, %v417
      %v482 = vadd.f32 %v321, %v418
      %v483 = vadd.f32 %v322, %v419
      %v484 = vadd.f32 %v323, %v420
      %v485 = vadd.f32 %v324, %v421
      %v486 = vadd.f32 %v325, %v422
      %v487 = vadd.f32 %v326, %v423
      %v488 = vadd.f32 %v327, %v424
      %v489 = vadd.f32 %v328, %v425
      %v490 = vadd.f32 %v329, %v426
      %v491 = vadd.f32 %v330, %v427
      %v492 = vadd.f32 %v331, %v428
      %v493 = vadd.f32 %v332, %v429
      %v494 = vadd.f32 %v333, %v430
      %v495 = vadd.f32 %v334, %v431
      %v496 = vadd.f32 %v335, %v432
      %v497 = vadd.f32 %v336, %v433
      %v498 = vadd.f32 %v337, %v434
      %v499 = vadd.f32 %v338, %v435
      %v500 = vadd.f32 %v339, %v436
      %v501 = vadd.f32 %v340, %v437
      %v502 = vadd.f32 %v341, %v438
      %v503 = vadd.f32 %v342, %v439
      %v504 = vadd.f32 %v343, %v440
      %v505 = vadd.f32 %v344, %v441
      %v506 = vadd.f32 %v345, %v442
      %v507 = vadd.f32 %v346, %v443
      %v508 = vadd.f32 %v347, %v444
      %v509 = vadd.f32 %v348, %v445
      %v510 = vadd.f32 %v349, %v446
      %v511 = vadd.f32 %v350, %v447
      %v512 = vadd.f32 %v351, %v448
      %v513 = vadd.f32 %v352, %v449
      %v514 = vadd.f32 %v353, %v450
      %s515 = scalar_lea.vmem %s1, 16
      %v516 = vld [vmem:[%s515] sm:$0x1]
      %v517 = vld [vmem:[%s515 + $0x1] sm:$0x1]
      %v518 = vld [vmem:[%s515 + $0x2] sm:$0x1]
      %v519 = vld [vmem:[%s515 + $0x3] sm:$0x1]
      %v520 = vld [vmem:[%s515 + $0x4] sm:$0x1]
      %v521 = vld [vmem:[%s515 + $0x5] sm:$0x1]
      %v522 = vld [vmem:[%s515 + $0x6] sm:$0x1]
      %v523 = vld [vmem:[%s515 + $0x7] sm:$0x1]
      %v532 = vperm.slane %v516, 0
      %v533 = vperm.slane %v517, 0
      %v534 = vperm.slane %v518, 0
      %v535 = vperm.slane %v519, 0
      %v536 = vperm.slane %v520, 0
      %v537 = vperm.slane %v521, 0
      %v538 = vperm.slane %v522, 0
      %v539 = vperm.slane %v523, 0
      %v548 = vmul.f32 %v532, %v242
      %v549 = vmul.f32 %v532, %v243
      %v550 = vmul.f32 %v532, %v244
      %v551 = vmul.f32 %v532, %v245
      %v552 = vmul.f32 %v532, %v246
      %v553 = vmul.f32 %v532, %v247
      %v554 = vmul.f32 %v532, %v248
      %v555 = vmul.f32 %v532, %v249
      %v556 = vmul.f32 %v533, %v242
      %v557 = vmul.f32 %v533, %v243
      %v558 = vmul.f32 %v533, %v244
      %v559 = vmul.f32 %v533, %v245
      %v560 = vmul.f32 %v533, %v246
      %v561 = vmul.f32 %v533, %v247
      %v562 = vmul.f32 %v533, %v248
      %v563 = vmul.f32 %v533, %v249
      %v564 = vmul.f32 %v534, %v242
      %v565 = vmul.f32 %v534, %v243
      %v566 = vmul.f32 %v534, %v244
      %v567 = vmul.f32 %v534, %v245
      %v568 = vmul.f32 %v534, %v246
      %v569 = vmul.f32 %v534, %v247
      %v570 = vmul.f32 %v534, %v248
      %v571 = vmul.f32 %v534, %v249
      %v572 = vmul.f32 %v535, %v242
      %v573 = vmul.f32 %v535, %v243
      %v574 = vmul.f32 %v535, %v244
      %v575 = vmul.f32 %v535, %v245
      %v576 = vmul.f32 %v535, %v246
      %v577 = vmul.f32 %v535, %v247
      %v578 = vmul.f32 %v535, %v248
      %v579 = vmul.f32 %v535, %v249
      %v580 = vmul.f32 %v536, %v242
      %v581 = vmul.f32 %v536, %v243
      %v582 = vmul.f32 %v536, %v244
      %v583 = vmul.f32 %v536, %v245
      %v584 = vmul.f32 %v536, %v246
      %v585 = vmul.f32 %v536, %v247
      %v586 = vmul.f32 %v536, %v248
      %v587 = vmul.f32 %v536, %v249
      %v588 = vmul.f32 %v537, %v242
      %v589 = vmul.f32 %v537, %v243
      %v590 = vmul.f32 %v537, %v244
      %v591 = vmul.f32 %v537, %v245
      %v592 = vmul.f32 %v537, %v246
      %v593 = vmul.f32 %v537, %v247
      %v594 = vmul.f32 %v537, %v248
      %v595 = vmul.f32 %v537, %v249
      %v596 = vmul.f32 %v538, %v242
      %v597 = vmul.f32 %v538, %v243
      %v598 = vmul.f32 %v538, %v244
      %v599 = vmul.f32 %v538, %v245
      %v600 = vmul.f32 %v538, %v246
      %v601 = vmul.f32 %v538, %v247
      %v602 = vmul.f32 %v538, %v248
      %v603 = vmul.f32 %v538, %v249
      %v604 = vmul.f32 %v539, %v242
      %v605 = vmul.f32 %v539, %v243
      %v606 = vmul.f32 %v539, %v244
      %v607 = vmul.f32 %v539, %v245
      %v608 = vmul.f32 %v539, %v246
      %v609 = vmul.f32 %v539, %v247
      %v610 = vmul.f32 %v539, %v248
      %v611 = vmul.f32 %v539, %v249
      %v612 = vadd.f32 %v451, %v548
      %v613 = vadd.f32 %v452, %v549
      %v614 = vadd.f32 %v453, %v550
      %v615 = vadd.f32 %v454, %v551
      %v616 = vadd.f32 %v455, %v552
      %v617 = vadd.f32 %v456, %v553
      %v618 = vadd.f32 %v457, %v554
      %v619 = vadd.f32 %v458, %v555
      %v620 = vadd.f32 %v459, %v556
      %v621 = vadd.f32 %v460, %v557
      %v622 = vadd.f32 %v461, %v558
      %v623 = vadd.f32 %v462, %v559
      %v624 = vadd.f32 %v463, %v560
      %v625 = vadd.f32 %v464, %v561
      %v626 = vadd.f32 %v465, %v562
      %v627 = vadd.f32 %v466, %v563
      %v628 = vadd.f32 %v467, %v564
      %v629 = vadd.f32 %v468, %v565
      %v630 = vadd.f32 %v469, %v566
      %v631 = vadd.f32 %v470, %v567
      %v632 = vadd.f32 %v471, %v568
      %v633 = vadd.f32 %v472, %v569
      %v634 = vadd.f32 %v473, %v570
      %v635 = vadd.f32 %v474, %v571
      %v636 = vadd.f32 %v475, %v572
      %v637 = vadd.f32 %v476, %v573
      %v638 = vadd.f32 %v477, %v574
      %v639 = vadd.f32 %v478, %v575
      %v640 = vadd.f32 %v479, %v576
      %v641 = vadd.f32 %v480, %v577
      %v642 = vadd.f32 %v481, %v578
      %v643 = vadd.f32 %v482, %v579
      %v644 = vadd.f32 %v483, %v580
      %v645 = vadd.f32 %v484, %v581
      %v646 = vadd.f32 %v485, %v582
      %v647 = vadd.f32 %v486, %v583
      %v648 = vadd.f32 %v487, %v584
      %v649 = vadd.f32 %v488, %v585
      %v650 = vadd.f32 %v489, %v586
      %v651 = vadd.f32 %v490, %v587
      %v652 = vadd.f32 %v491, %v588
      %v653 = vadd.f32 %v492, %v589
      %v654 = vadd.f32 %v493, %v590
      %v655 = vadd.f32 %v494, %v591
      %v656 = vadd.f32 %v495, %v592
      %v657 = vadd.f32 %v496, %v593
      %v658 = vadd.f32 %v497, %v594
      %v659 = vadd.f32 %v498, %v595
      %v660 = vadd.f32 %v499, %v596
      %v661 = vadd.f32 %v500, %v597
      %v662 = vadd.f32 %v501, %v598
      %v663 = vadd.f32 %v502, %v599
      %v664 = vadd.f32 %v503, %v600
      %v665 = vadd.f32 %v504, %v601
      %v666 = vadd.f32 %v505, %v602
      %v667 = vadd.f32 %v506, %v603
      %v668 = vadd.f32 %v507, %v604
      %v669 = vadd.f32 %v508, %v605
      %v670 = vadd.f32 %v509, %v606
      %v671 = vadd.f32 %v510, %v607
      %v672 = vadd.f32 %v511, %v608
      %v673 = vadd.f32 %v512, %v609
      %v674 = vadd.f32 %v513, %v610
      %v675 = vadd.f32 %v514, %v611
      %s676 = scalar_lea.vmem %s1, 24
      %v677 = vld [vmem:[%s676] sm:$0x1]
      %v678 = vld [vmem:[%s676 + $0x1] sm:$0x1]
      %v679 = vld [vmem:[%s676 + $0x2] sm:$0x1]
      %v680 = vld [vmem:[%s676 + $0x3] sm:$0x1]
      %v681 = vld [vmem:[%s676 + $0x4] sm:$0x1]
      %v682 = vld [vmem:[%s676 + $0x5] sm:$0x1]
      %v683 = vld [vmem:[%s676 + $0x6] sm:$0x1]
      %v684 = vld [vmem:[%s676 + $0x7] sm:$0x1]
      %v693 = vperm.slane %v677, 0
      %v694 = vperm.slane %v678, 0
      %v695 = vperm.slane %v679, 0
      %v696 = vperm.slane %v680, 0
      %v697 = vperm.slane %v681, 0
      %v698 = vperm.slane %v682, 0
      %v699 = vperm.slane %v683, 0
      %v700 = vperm.slane %v684, 0
      %v709 = vmul.f32 %v693, %v250
      %v710 = vmul.f32 %v693, %v251
      %v711 = vmul.f32 %v693, %v252
      %v712 = vmul.f32 %v693, %v253
      %v713 = vmul.f32 %v693, %v254
      %v714 = vmul.f32 %v693, %v255
      %v715 = vmul.f32 %v693, %v256
      %v716 = vmul.f32 %v693, %v257
      %v717 = vmul.f32 %v694, %v250
      %v718 = vmul.f32 %v694, %v251
      %v719 = vmul.f32 %v694, %v252
      %v720 = vmul.f32 %v694, %v253
      %v721 = vmul.f32 %v694, %v254
      %v722 = vmul.f32 %v694, %v255
      %v723 = vmul.f32 %v694, %v256
      %v724 = vmul.f32 %v694, %v257
      %v725 = vmul.f32 %v695, %v250
      %v726 = vmul.f32 %v695, %v251
      %v727 = vmul.f32 %v695, %v252
      %v728 = vmul.f32 %v695, %v253
      %v729 = vmul.f32 %v695, %v254
      %v730 = vmul.f32 %v695, %v255
      %v731 = vmul.f32 %v695, %v256
      %v732 = vmul.f32 %v695, %v257
      %v733 = vmul.f32 %v696, %v250
      %v734 = vmul.f32 %v696, %v251
      %v735 = vmul.f32 %v696, %v252
      %v736 = vmul.f32 %v696, %v253
      %v737 = vmul.f32 %v696, %v254
      %v738 = vmul.f32 %v696, %v255
      %v739 = vmul.f32 %v696, %v256
      %v740 = vmul.f32 %v696, %v257
      %v741 = vmul.f32 %v697, %v250
      %v742 = vmul.f32 %v697, %v251
      %v743 = vmul.f32 %v697, %v252
      %v744 = vmul.f32 %v697, %v253
      %v745 = vmul.f32 %v697, %v254
      %v746 = vmul.f32 %v697, %v255
      %v747 = vmul.f32 %v697, %v256
      %v748 = vmul.f32 %v697, %v257
      %v749 = vmul.f32 %v698, %v250
      %v750 = vmul.f32 %v698, %v251
      %v751 = vmul.f32 %v698, %v252
      %v752 = vmul.f32 %v698, %v253
      %v753 = vmul.f32 %v698, %v254
      %v754 = vmul.f32 %v698, %v255
      %v755 = vmul.f32 %v698, %v256
      %v756 = vmul.f32 %v698, %v257
      %v757 = vmul.f32 %v699, %v250
      %v758 = vmul.f32 %v699, %v251
      %v759 = vmul.f32 %v699, %v252
      %v760 = vmul.f32 %v699, %v253
      %v761 = vmul.f32 %v699, %v254
      %v762 = vmul.f32 %v699, %v255
      %v763 = vmul.f32 %v699, %v256
      %v764 = vmul.f32 %v699, %v257
      %v765 = vmul.f32 %v700, %v250
      %v766 = vmul.f32 %v700, %v251
      %v767 = vmul.f32 %v700, %v252
      %v768 = vmul.f32 %v700, %v253
      %v769 = vmul.f32 %v700, %v254
      %v770 = vmul.f32 %v700, %v255
      %v771 = vmul.f32 %v700, %v256
      %v772 = vmul.f32 %v700, %v257
      %v773 = vadd.f32 %v612, %v709
      %v774 = vadd.f32 %v613, %v710
      %v775 = vadd.f32 %v614, %v711
      %v776 = vadd.f32 %v615, %v712
      %v777 = vadd.f32 %v616, %v713
      %v778 = vadd.f32 %v617, %v714
      %v779 = vadd.f32 %v618, %v715
      %v780 = vadd.f32 %v619, %v716
      %v781 = vadd.f32 %v620, %v717
      %v782 = vadd.f32 %v621, %v718
      %v783 = vadd.f32 %v622, %v719
      %v784 = vadd.f32 %v623, %v720
      %v785 = vadd.f32 %v624, %v721
      %v786 = vadd.f32 %v625, %v722
      %v787 = vadd.f32 %v626, %v723
      %v788 = vadd.f32 %v627, %v724
      %v789 = vadd.f32 %v628, %v725
      %v790 = vadd.f32 %v629, %v726
      %v791 = vadd.f32 %v630, %v727
      %v792 = vadd.f32 %v631, %v728
      %v793 = vadd.f32 %v632, %v729
      %v794 = vadd.f32 %v633, %v730
      %v795 = vadd.f32 %v634, %v731
      %v796 = vadd.f32 %v635, %v732
      %v797 = vadd.f32 %v636, %v733
      %v798 = vadd.f32 %v637, %v734
      %v799 = vadd.f32 %v638, %v735
      %v800 = vadd.f32 %v639, %v736
      %v801 = vadd.f32 %v640, %v737
      %v802 = vadd.f32 %v641, %v738
      %v803 = vadd.f32 %v642, %v739
      %v804 = vadd.f32 %v643, %v740
      %v805 = vadd.f32 %v644, %v741
      %v806 = vadd.f32 %v645, %v742
      %v807 = vadd.f32 %v646, %v743
      %v808 = vadd.f32 %v647, %v744
      %v809 = vadd.f32 %v648, %v745
      %v810 = vadd.f32 %v649, %v746
      %v811 = vadd.f32 %v650, %v747
      %v812 = vadd.f32 %v651, %v748
      %v813 = vadd.f32 %v652, %v749
      %v814 = vadd.f32 %v653, %v750
      %v815 = vadd.f32 %v654, %v751
      %v816 = vadd.f32 %v655, %v752
      %v817 = vadd.f32 %v656, %v753
      %v818 = vadd.f32 %v657, %v754
      %v819 = vadd.f32 %v658, %v755
      %v820 = vadd.f32 %v659, %v756
      %v821 = vadd.f32 %v660, %v757
      %v822 = vadd.f32 %v661, %v758
      %v823 = vadd.f32 %v662, %v759
      %v824 = vadd.f32 %v663, %v760
      %v825 = vadd.f32 %v664, %v761
      %v826 = vadd.f32 %v665, %v762
      %v827 = vadd.f32 %v666, %v763
      %v828 = vadd.f32 %v667, %v764
      %v829 = vadd.f32 %v668, %v765
      %v830 = vadd.f32 %v669, %v766
      %v831 = vadd.f32 %v670, %v767
      %v832 = vadd.f32 %v671, %v768
      %v833 = vadd.f32 %v672, %v769
      %v834 = vadd.f32 %v673, %v770
      %v835 = vadd.f32 %v674, %v771
      %v836 = vadd.f32 %v675, %v772
      %s837 = scalar_lea.vmem %s1, 32
      %v838 = vld [vmem:[%s837] sm:$0x1]
      %v839 = vld [vmem:[%s837 + $0x1] sm:$0x1]
      %v840 = vld [vmem:[%s837 + $0x2] sm:$0x1]
      %v841 = vld [vmem:[%s837 + $0x3] sm:$0x1]
      %v842 = vld [vmem:[%s837 + $0x4] sm:$0x1]
      %v843 = vld [vmem:[%s837 + $0x5] sm:$0x1]
      %v844 = vld [vmem:[%s837 + $0x6] sm:$0x1]
      %v845 = vld [vmem:[%s837 + $0x7] sm:$0x1]
      %v854 = vperm.slane %v838, 0
      %v855 = vperm.slane %v839, 0
      %v856 = vperm.slane %v840, 0
      %v857 = vperm.slane %v841, 0
      %v858 = vperm.slane %v842, 0
      %v859 = vperm.slane %v843, 0
      %v860 = vperm.slane %v844, 0
      %v861 = vperm.slane %v845, 0
      %v870 = vadd.f32 %v773, %v854
      %v871 = vadd.f32 %v774, %v854
      %v872 = vadd.f32 %v775, %v854
      %v873 = vadd.f32 %v776, %v854
      %v874 = vadd.f32 %v777, %v854
      %v875 = vadd.f32 %v778, %v854
      %v876 = vadd.f32 %v779, %v854
      %v877 = vadd.f32 %v780, %v854
      %v878 = vadd.f32 %v781, %v855
      %v879 = vadd.f32 %v782, %v855
      %v880 = vadd.f32 %v783, %v855
      %v881 = vadd.f32 %v784, %v855
      %v882 = vadd.f32 %v785, %v855
      %v883 = vadd.f32 %v786, %v855
      %v884 = vadd.f32 %v787, %v855
      %v885 = vadd.f32 %v788, %v855
      %v886 = vadd.f32 %v789, %v856
      %v887 = vadd.f32 %v790, %v856
      %v888 = vadd.f32 %v791, %v856
      %v889 = vadd.f32 %v792, %v856
      %v890 = vadd.f32 %v793, %v856
      %v891 = vadd.f32 %v794, %v856
      %v892 = vadd.f32 %v795, %v856
      %v893 = vadd.f32 %v796, %v856
      %v894 = vadd.f32 %v797, %v857
      %v895 = vadd.f32 %v798, %v857
      %v896 = vadd.f32 %v799, %v857
      %v897 = vadd.f32 %v800, %v857
      %v898 = vadd.f32 %v801, %v857
      %v899 = vadd.f32 %v802, %v857
      %v900 = vadd.f32 %v803, %v857
      %v901 = vadd.f32 %v804, %v857
      %v902 = vadd.f32 %v805, %v858
      %v903 = vadd.f32 %v806, %v858
      %v904 = vadd.f32 %v807, %v858
      %v905 = vadd.f32 %v808, %v858
      %v906 = vadd.f32 %v809, %v858
      %v907 = vadd.f32 %v810, %v858
      %v908 = vadd.f32 %v811, %v858
      %v909 = vadd.f32 %v812, %v858
      %v910 = vadd.f32 %v813, %v859
      %v911 = vadd.f32 %v814, %v859
      %v912 = vadd.f32 %v815, %v859
      %v913 = vadd.f32 %v816, %v859
      %v914 = vadd.f32 %v817, %v859
      %v915 = vadd.f32 %v818, %v859
      %v916 = vadd.f32 %v819, %v859
      %v917 = vadd.f32 %v820, %v859
      %v918 = vadd.f32 %v821, %v860
      %v919 = vadd.f32 %v822, %v860
      %v920 = vadd.f32 %v823, %v860
      %v921 = vadd.f32 %v824, %v860
      %v922 = vadd.f32 %v825, %v860
      %v923 = vadd.f32 %v826, %v860
      %v924 = vadd.f32 %v827, %v860
      %v925 = vadd.f32 %v828, %v860
      %v926 = vadd.f32 %v829, %v861
      %v927 = vadd.f32 %v830, %v861
      %v928 = vadd.f32 %v831, %v861
      %v929 = vadd.f32 %v832, %v861
      %v930 = vadd.f32 %v833, %v861
      %v931 = vadd.f32 %v834, %v861
      %v932 = vadd.f32 %v835, %v861
      %v933 = vadd.f32 %v836, %v861
      %s934 = scalar_lea.vmem %s1, 40
      %v935 = vld [vmem:[%s934] sm:$0x1]
      %v936 = vld [vmem:[%s934 + $0x1] sm:$0x1]
      %v937 = vld [vmem:[%s934 + $0x2] sm:$0x1]
      %v938 = vld [vmem:[%s934 + $0x3] sm:$0x1]
      %v939 = vld [vmem:[%s934 + $0x4] sm:$0x1]
      %v940 = vld [vmem:[%s934 + $0x5] sm:$0x1]
      %v941 = vld [vmem:[%s934 + $0x6] sm:$0x1]
      %v942 = vld [vmem:[%s934 + $0x7] sm:$0x1]
      %s943 = scalar_lea.vmem %s1, 48
      %v944 = vld [vmem:[%s943] sm:$0x1]
      %v945 = vld [vmem:[%s943 + $0x1] sm:$0x1]
      %v946 = vld [vmem:[%s943 + $0x2] sm:$0x1]
      %v947 = vld [vmem:[%s943 + $0x3] sm:$0x1]
      %v948 = vld [vmem:[%s943 + $0x4] sm:$0x1]
      %v949 = vld [vmem:[%s943 + $0x5] sm:$0x1]
      %v950 = vld [vmem:[%s943 + $0x6] sm:$0x1]
      %v951 = vld [vmem:[%s943 + $0x7] sm:$0x1]
      %vm952 = vcmask 261120
      %v953 = vsel %vm952, %v870, 0.0
      %v954 = vsel %vm952, %v878, 0.0
      %v955 = vadd.f32 %v953, %v954
      %v956 = vsel %vm952, %v886, 0.0
      %v957 = vadd.f32 %v955, %v956
      %v958 = vsel %vm952, %v894, 0.0
      %v959 = vadd.f32 %v957, %v958
      %v960 = vsel %vm952, %v902, 0.0
      %v961 = vadd.f32 %v959, %v960
      %v962 = vsel %vm952, %v910, 0.0
      %v963 = vadd.f32 %v961, %v962
      %v964 = vsel %vm952, %v918, 0.0
      %v965 = vadd.f32 %v963, %v964
      %v966 = vsel %vm952, %v926, 0.0
      %v967 = vadd.f32 %v965, %v966
      %v968 = vsel %vm952, %v871, 0.0
      %v969 = vsel %vm952, %v879, 0.0
      %v970 = vadd.f32 %v968, %v969
      %v971 = vsel %vm952, %v887, 0.0
      %v972 = vadd.f32 %v970, %v971
      %v973 = vsel %vm952, %v895, 0.0
      %v974 = vadd.f32 %v972, %v973
      %v975 = vsel %vm952, %v903, 0.0
      %v976 = vadd.f32 %v974, %v975
      %v977 = vsel %vm952, %v911, 0.0
      %v978 = vadd.f32 %v976, %v977
      %v979 = vsel %vm952, %v919, 0.0
      %v980 = vadd.f32 %v978, %v979
      %v981 = vsel %vm952, %v927, 0.0
      %v982 = vadd.f32 %v980, %v981
      %v983 = vsel %vm952, %v872, 0.0
      %v984 = vsel %vm952, %v880, 0.0
      %v985 = vadd.f32 %v983, %v984
      %v986 = vsel %vm952, %v888, 0.0
      %v987 = vadd.f32 %v985, %v986
      %v988 = vsel %vm952, %v896, 0.0
      %v989 = vadd.f32 %v987, %v988
      %v990 = vsel %vm952, %v904, 0.0
      %v991 = vadd.f32 %v989, %v990
      %v992 = vsel %vm952, %v912, 0.0
      %v993 = vadd.f32 %v991, %v992
      %v994 = vsel %vm952, %v920, 0.0
      %v995 = vadd.f32 %v993, %v994
      %v996 = vsel %vm952, %v928, 0.0
      %v997 = vadd.f32 %v995, %v996
      %v998 = vsel %vm952, %v873, 0.0
      %v999 = vsel %vm952, %v881, 0.0
      %v1000 = vadd.f32 %v998, %v999
      %v1001 = vsel %vm952, %v889, 0.0
      %v1002 = vadd.f32 %v1000, %v1001
      %v1003 = vsel %vm952, %v897, 0.0
      %v1004 = vadd.f32 %v1002, %v1003
      %v1005 = vsel %vm952, %v905, 0.0
      %v1006 = vadd.f32 %v1004, %v1005
      %v1007 = vsel %vm952, %v913, 0.0
      %v1008 = vadd.f32 %v1006, %v1007
      %v1009 = vsel %vm952, %v921, 0.0
      %v1010 = vadd.f32 %v1008, %v1009
      %v1011 = vsel %vm952, %v929, 0.0
      %v1012 = vadd.f32 %v1010, %v1011
      %v1013 = vsel %vm952, %v874, 0.0
      %v1014 = vsel %vm952, %v882, 0.0
      %v1015 = vadd.f32 %v1013, %v1014
      %v1016 = vsel %vm952, %v890, 0.0
      %v1017 = vadd.f32 %v1015, %v1016
      %v1018 = vsel %vm952, %v898, 0.0
      %v1019 = vadd.f32 %v1017, %v1018
      %v1020 = vsel %vm952, %v906, 0.0
      %v1021 = vadd.f32 %v1019, %v1020
      %v1022 = vsel %vm952, %v914, 0.0
      %v1023 = vadd.f32 %v1021, %v1022
      %v1024 = vsel %vm952, %v922, 0.0
      %v1025 = vadd.f32 %v1023, %v1024
      %v1026 = vsel %vm952, %v930, 0.0
      %v1027 = vadd.f32 %v1025, %v1026
      %v1028 = vsel %vm952, %v875, 0.0
      %v1029 = vsel %vm952, %v883, 0.0
      %v1030 = vadd.f32 %v1028, %v1029
      %v1031 = vsel %vm952, %v891, 0.0
      %v1032 = vadd.f32 %v1030, %v1031
      %v1033 = vsel %vm952, %v899, 0.0
      %v1034 = vadd.f32 %v1032, %v1033
      %v1035 = vsel %vm952, %v907, 0.0
      %v1036 = vadd.f32 %v1034, %v1035
      %v1037 = vsel %vm952, %v915, 0.0
      %v1038 = vadd.f32 %v1036, %v1037
      %v1039 = vsel %vm952, %v923, 0.0
      %v1040 = vadd.f32 %v1038, %v1039
      %v1041 = vsel %vm952, %v931, 0.0
      %v1042 = vadd.f32 %v1040, %v1041
      %v1043 = vsel %vm952, %v876, 0.0
      %v1044 = vsel %vm952, %v884, 0.0
      %v1045 = vadd.f32 %v1043, %v1044
      %v1046 = vsel %vm952, %v892, 0.0
      %v1047 = vadd.f32 %v1045, %v1046
      %v1048 = vsel %vm952, %v900, 0.0
      %v1049 = vadd.f32 %v1047, %v1048
      %v1050 = vsel %vm952, %v908, 0.0
      %v1051 = vadd.f32 %v1049, %v1050
      %v1052 = vsel %vm952, %v916, 0.0
      %v1053 = vadd.f32 %v1051, %v1052
      %v1054 = vsel %vm952, %v924, 0.0
      %v1055 = vadd.f32 %v1053, %v1054
      %v1056 = vsel %vm952, %v932, 0.0
      %v1057 = vadd.f32 %v1055, %v1056
      %v1058 = vsel %vm952, %v877, 0.0
      %v1059 = vsel %vm952, %v885, 0.0
      %v1060 = vadd.f32 %v1058, %v1059
      %v1061 = vsel %vm952, %v893, 0.0
      %v1062 = vadd.f32 %v1060, %v1061
      %v1063 = vsel %vm952, %v901, 0.0
      %v1064 = vadd.f32 %v1062, %v1063
      %v1065 = vsel %vm952, %v909, 0.0
      %v1066 = vadd.f32 %v1064, %v1065
      %v1067 = vsel %vm952, %v917, 0.0
      %v1068 = vadd.f32 %v1066, %v1067
      %v1069 = vsel %vm952, %v925, 0.0
      %v1070 = vadd.f32 %v1068, %v1069
      %v1071 = vsel %vm952, %v933, 0.0
      %v1072 = vadd.f32 %v1070, %v1071
      %v1073 = vsel %vm952, %v967, 0.0
      %1074 = vadd.xlane.f32.xlu0 %v1073
      %v1075 = vpop.xlane.xlu0 %1074
      %v1076 = vsel %vm952, %v982, 0.0
      %1077 = vadd.xlane.f32.xlu0 %v1076
      %v1078 = vpop.xlane.xlu0 %1077
      %v1079 = vsel %vm952, %v997, 0.0
      %1080 = vadd.xlane.f32.xlu0 %v1079
      %v1081 = vpop.xlane.xlu0 %1080
      %v1082 = vsel %vm952, %v1012, 0.0
      %1083 = vadd.xlane.f32.xlu0 %v1082
      %v1084 = vpop.xlane.xlu0 %1083
      %v1085 = vsel %vm952, %v1027, 0.0
      %1086 = vadd.xlane.f32.xlu0 %v1085
      %v1087 = vpop.xlane.xlu0 %1086
      %v1088 = vsel %vm952, %v1042, 0.0
      %1089 = vadd.xlane.f32.xlu0 %v1088
      %v1090 = vpop.xlane.xlu0 %1089
      %v1091 = vsel %vm952, %v1057, 0.0
      %1092 = vadd.xlane.f32.xlu0 %v1091
      %v1093 = vpop.xlane.xlu0 %1092
      %v1094 = vsel %vm952, %v1072, 0.0
      %1095 = vadd.xlane.f32.xlu0 %v1094
      %v1096 = vpop.xlane.xlu0 %1095
      %v1097 = vmul.f32 %v1075, 0.00390625
      %v1098 = vmul.f32 %v1078, 0.00390625
      %v1099 = vmul.f32 %v1081, 0.00390625
      %v1100 = vmul.f32 %v1084, 0.00390625
      %v1101 = vmul.f32 %v1087, 0.00390625
      %v1102 = vmul.f32 %v1090, 0.00390625
      %v1103 = vmul.f32 %v1093, 0.00390625
      %v1104 = vmul.f32 %v1096, 0.00390625
      %v1105 = vmul.f32 %v870, %v870
      %v1106 = vmul.f32 %v871, %v871
      %v1107 = vmul.f32 %v872, %v872
      %v1108 = vmul.f32 %v873, %v873
      %v1109 = vmul.f32 %v874, %v874
      %v1110 = vmul.f32 %v875, %v875
      %v1111 = vmul.f32 %v876, %v876
      %v1112 = vmul.f32 %v877, %v877
      %v1113 = vmul.f32 %v878, %v878
      %v1114 = vmul.f32 %v879, %v879
      %v1115 = vmul.f32 %v880, %v880
      %v1116 = vmul.f32 %v881, %v881
      %v1117 = vmul.f32 %v882, %v882
      %v1118 = vmul.f32 %v883, %v883
      %v1119 = vmul.f32 %v884, %v884
      %v1120 = vmul.f32 %v885, %v885
      %v1121 = vmul.f32 %v886, %v886
      %v1122 = vmul.f32 %v887, %v887
      %v1123 = vmul.f32 %v888, %v888
      %v1124 = vmul.f32 %v889, %v889
      %v1125 = vmul.f32 %v890, %v890
      %v1126 = vmul.f32 %v891, %v891
      %v1127 = vmul.f32 %v892, %v892
      %v1128 = vmul.f32 %v893, %v893
      %v1129 = vmul.f32 %v894, %v894
      %v1130 = vmul.f32 %v895, %v895
      %v1131 = vmul.f32 %v896, %v896
      %v1132 = vmul.f32 %v897, %v897
      %v1133 = vmul.f32 %v898, %v898
      %v1134 = vmul.f32 %v899, %v899
      %v1135 = vmul.f32 %v900, %v900
      %v1136 = vmul.f32 %v901, %v901
      %v1137 = vmul.f32 %v902, %v902
      %v1138 = vmul.f32 %v903, %v903
      %v1139 = vmul.f32 %v904, %v904
      %v1140 = vmul.f32 %v905, %v905
      %v1141 = vmul.f32 %v906, %v906
      %v1142 = vmul.f32 %v907, %v907
      %v1143 = vmul.f32 %v908, %v908
      %v1144 = vmul.f32 %v909, %v909
      %v1145 = vmul.f32 %v910, %v910
      %v1146 = vmul.f32 %v911, %v911
      %v1147 = vmul.f32 %v912, %v912
      %v1148 = vmul.f32 %v913, %v913
      %v1149 = vmul.f32 %v914, %v914
      %v1150 = vmul.f32 %v915, %v915
      %v1151 = vmul.f32 %v916, %v916
      %v1152 = vmul.f32 %v917, %v917
      %v1153 = vmul.f32 %v918, %v918
      %v1154 = vmul.f32 %v919, %v919
      %v1155 = vmul.f32 %v920, %v920
      %v1156 = vmul.f32 %v921, %v921
      %v1157 = vmul.f32 %v922, %v922
      %v1158 = vmul.f32 %v923, %v923
      %v1159 = vmul.f32 %v924, %v924
      %v1160 = vmul.f32 %v925, %v925
      %v1161 = vmul.f32 %v926, %v926
      %v1162 = vmul.f32 %v927, %v927
      %v1163 = vmul.f32 %v928, %v928
      %v1164 = vmul.f32 %v929, %v929
      %v1165 = vmul.f32 %v930, %v930
      %v1166 = vmul.f32 %v931, %v931
      %v1167 = vmul.f32 %v932, %v932
      %v1168 = vmul.f32 %v933, %v933
      %v1169 = vsel %vm952, %v1105, 0.0
      %v1170 = vsel %vm952, %v1113, 0.0
      %v1171 = vadd.f32 %v1169, %v1170
      %v1172 = vsel %vm952, %v1121, 0.0
      %v1173 = vadd.f32 %v1171, %v1172
      %v1174 = vsel %vm952, %v1129, 0.0
      %v1175 = vadd.f32 %v1173, %v1174
      %v1176 = vsel %vm952, %v1137, 0.0
      %v1177 = vadd.f32 %v1175, %v1176
      %v1178 = vsel %vm952, %v1145, 0.0
      %v1179 = vadd.f32 %v1177, %v1178
      %v1180 = vsel %vm952, %v1153, 0.0
      %v1181 = vadd.f32 %v1179, %v1180
      %v1182 = vsel %vm952, %v1161, 0.0
      %v1183 = vadd.f32 %v1181, %v1182
      %v1184 = vsel %vm952, %v1106, 0.0
      %v1185 = vsel %vm952, %v1114, 0.0
      %v1186 = vadd.f32 %v1184, %v1185
      %v1187 = vsel %vm952, %v1122, 0.0
      %v1188 = vadd.f32 %v1186, %v1187
      %v1189 = vsel %vm952, %v1130, 0.0
      %v1190 = vadd.f32 %v1188, %v1189
      %v1191 = vsel %vm952, %v1138, 0.0
      %v1192 = vadd.f32 %v1190, %v1191
      %v1193 = vsel %vm952, %v1146, 0.0
      %v1194 = vadd.f32 %v1192, %v1193
      %v1195 = vsel %vm952, %v1154, 0.0
      %v1196 = vadd.f32 %v1194, %v1195
      %v1197 = vsel %vm952, %v1162, 0.0
      %v1198 = vadd.f32 %v1196, %v1197
      %v1199 = vsel %vm952, %v1107, 0.0
      %v1200 = vsel %vm952, %v1115, 0.0
      %v1201 = vadd.f32 %v1199, %v1200
      %v1202 = vsel %vm952, %v1123, 0.0
      %v1203 = vadd.f32 %v1201, %v1202
      %v1204 = vsel %vm952, %v1131, 0.0
      %v1205 = vadd.f32 %v1203, %v1204
      %v1206 = vsel %vm952, %v1139, 0.0
      %v1207 = vadd.f32 %v1205, %v1206
      %v1208 = vsel %vm952, %v1147, 0.0
      %v1209 = vadd.f32 %v1207, %v1208
      %v1210 = vsel %vm952, %v1155, 0.0
      %v1211 = vadd.f32 %v1209, %v1210
      %v1212 = vsel %vm952, %v1163, 0.0
      %v1213 = vadd.f32 %v1211, %v1212
      %v1214 = vsel %vm952, %v1108, 0.0
      %v1215 = vsel %vm952, %v1116, 0.0
      %v1216 = vadd.f32 %v1214, %v1215
      %v1217 = vsel %vm952, %v1124, 0.0
      %v1218 = vadd.f32 %v1216, %v1217
      %v1219 = vsel %vm952, %v1132, 0.0
      %v1220 = vadd.f32 %v1218, %v1219
      %v1221 = vsel %vm952, %v1140, 0.0
      %v1222 = vadd.f32 %v1220, %v1221
      %v1223 = vsel %vm952, %v1148, 0.0
      %v1224 = vadd.f32 %v1222, %v1223
      %v1225 = vsel %vm952, %v1156, 0.0
      %v1226 = vadd.f32 %v1224, %v1225
      %v1227 = vsel %vm952, %v1164, 0.0
      %v1228 = vadd.f32 %v1226, %v1227
      %v1229 = vsel %vm952, %v1109, 0.0
      %v1230 = vsel %vm952, %v1117, 0.0
      %v1231 = vadd.f32 %v1229, %v1230
      %v1232 = vsel %vm952, %v1125, 0.0
      %v1233 = vadd.f32 %v1231, %v1232
      %v1234 = vsel %vm952, %v1133, 0.0
      %v1235 = vadd.f32 %v1233, %v1234
      %v1236 = vsel %vm952, %v1141, 0.0
      %v1237 = vadd.f32 %v1235, %v1236
      %v1238 = vsel %vm952, %v1149, 0.0
      %v1239 = vadd.f32 %v1237, %v1238
      %v1240 = vsel %vm952, %v1157, 0.0
      %v1241 = vadd.f32 %v1239, %v1240
      %v1242 = vsel %vm952, %v1165, 0.0
      %v1243 = vadd.f32 %v1241, %v1242
      %v1244 = vsel %vm952, %v1110, 0.0
      %v1245 = vsel %vm952, %v1118, 0.0
      %v1246 = vadd.f32 %v1244, %v1245
      %v1247 = vsel %vm952, %v1126, 0.0
      %v1248 = vadd.f32 %v1246, %v1247
      %v1249 = vsel %vm952, %v1134, 0.0
      %v1250 = vadd.f32 %v1248, %v1249
      %v1251 = vsel %vm952, %v1142, 0.0
      %v1252 = vadd.f32 %v1250, %v1251
      %v1253 = vsel %vm952, %v1150, 0.0
      %v1254 = vadd.f32 %v1252, %v1253
      %v1255 = vsel %vm952, %v1158, 0.0
      %v1256 = vadd.f32 %v1254, %v1255
      %v1257 = vsel %vm952, %v1166, 0.0
      %v1258 = vadd.f32 %v1256, %v1257
      %v1259 = vsel %vm952, %v1111, 0.0
      %v1260 = vsel %vm952, %v1119, 0.0
      %v1261 = vadd.f32 %v1259, %v1260
      %v1262 = vsel %vm952, %v1127, 0.0
      %v1263 = vadd.f32 %v1261, %v1262
      %v1264 = vsel %vm952, %v1135, 0.0
      %v1265 = vadd.f32 %v1263, %v1264
      %v1266 = vsel %vm952, %v1143, 0.0
      %v1267 = vadd.f32 %v1265, %v1266
      %v1268 = vsel %vm952, %v1151, 0.0
      %v1269 = vadd.f32 %v1267, %v1268
      %v1270 = vsel %vm952, %v1159, 0.0
      %v1271 = vadd.f32 %v1269, %v1270
      %v1272 = vsel %vm952, %v1167, 0.0
      %v1273 = vadd.f32 %v1271, %v1272
      %v1274 = vsel %vm952, %v1112, 0.0
      %v1275 = vsel %vm952, %v1120, 0.0
      %v1276 = vadd.f32 %v1274, %v1275
      %v1277 = vsel %vm952, %v1128, 0.0
      %v1278 = vadd.f32 %v1276, %v1277
      %v1279 = vsel %vm952, %v1136, 0.0
      %v1280 = vadd.f32 %v1278, %v1279
      %v1281 = vsel %vm952, %v1144, 0.0
      %v1282 = vadd.f32 %v1280, %v1281
      %v1283 = vsel %vm952, %v1152, 0.0
      %v1284 = vadd.f32 %v1282, %v1283
      %v1285 = vsel %vm952, %v1160, 0.0
      %v1286 = vadd.f32 %v1284, %v1285
      %v1287 = vsel %vm952, %v1168, 0.0
      %v1288 = vadd.f32 %v1286, %v1287
      %v1289 = vsel %vm952, %v1183, 0.0
      %1290 = vadd.xlane.f32.xlu0 %v1289
      %v1291 = vpop.xlane.xlu0 %1290
      %v1292 = vsel %vm952, %v1198, 0.0
      %1293 = vadd.xlane.f32.xlu0 %v1292
      %v1294 = vpop.xlane.xlu0 %1293
      %v1295 = vsel %vm952, %v1213, 0.0
      %1296 = vadd.xlane.f32.xlu0 %v1295
      %v1297 = vpop.xlane.xlu0 %1296
      %v1298 = vsel %vm952, %v1228, 0.0
      %1299 = vadd.xlane.f32.xlu0 %v1298
      %v1300 = vpop.xlane.xlu0 %1299
      %v1301 = vsel %vm952, %v1243, 0.0
      %1302 = vadd.xlane.f32.xlu0 %v1301
      %v1303 = vpop.xlane.xlu0 %1302
      %v1304 = vsel %vm952, %v1258, 0.0
      %1305 = vadd.xlane.f32.xlu0 %v1304
      %v1306 = vpop.xlane.xlu0 %1305
      %v1307 = vsel %vm952, %v1273, 0.0
      %1308 = vadd.xlane.f32.xlu0 %v1307
      %v1309 = vpop.xlane.xlu0 %1308
      %v1310 = vsel %vm952, %v1288, 0.0
      %1311 = vadd.xlane.f32.xlu0 %v1310
      %v1312 = vpop.xlane.xlu0 %1311
      %v1313 = vmul.f32 %v1291, 0.00390625
      %v1314 = vmul.f32 %v1294, 0.00390625
      %v1315 = vmul.f32 %v1297, 0.00390625
      %v1316 = vmul.f32 %v1300, 0.00390625
      %v1317 = vmul.f32 %v1303, 0.00390625
      %v1318 = vmul.f32 %v1306, 0.00390625
      %v1319 = vmul.f32 %v1309, 0.00390625
      %v1320 = vmul.f32 %v1312, 0.00390625
      %v1321 = vmul.f32 %v1097, %v1097
      %v1322 = vmul.f32 %v1098, %v1098
      %v1323 = vmul.f32 %v1099, %v1099
      %v1324 = vmul.f32 %v1100, %v1100
      %v1325 = vmul.f32 %v1101, %v1101
      %v1326 = vmul.f32 %v1102, %v1102
      %v1327 = vmul.f32 %v1103, %v1103
      %v1328 = vmul.f32 %v1104, %v1104
      %v1329 = vsub.f32 %v1313, %v1321
      %v1330 = vsub.f32 %v1314, %v1322
      %v1331 = vsub.f32 %v1315, %v1323
      %v1332 = vsub.f32 %v1316, %v1324
      %v1333 = vsub.f32 %v1317, %v1325
      %v1334 = vsub.f32 %v1318, %v1326
      %v1335 = vsub.f32 %v1319, %v1327
      %v1336 = vsub.f32 %v1320, %v1328
      %v1337 = vmax.f32 %v1329, 0.0
      %v1338 = vmax.f32 %v1330, 0.0
      %v1339 = vmax.f32 %v1331, 0.0
      %v1340 = vmax.f32 %v1332, 0.0
      %v1341 = vmax.f32 %v1333, 0.0
      %v1342 = vmax.f32 %v1334, 0.0
      %v1343 = vmax.f32 %v1335, 0.0
      %v1344 = vmax.f32 %v1336, 0.0
      %v1345 = vadd.f32 %v1337, 1e-05
      %v1346 = vadd.f32 %v1338, 1e-05
      %v1347 = vadd.f32 %v1339, 1e-05
      %v1348 = vadd.f32 %v1340, 1e-05
      %v1349 = vadd.f32 %v1341, 1e-05
      %v1350 = vadd.f32 %v1342, 1e-05
      %v1351 = vadd.f32 %v1343, 1e-05
      %v1352 = vadd.f32 %v1344, 1e-05
      %v1353 = vrsqrt.pop %v1345
      %v1354 = vmul.f32 %v1353, %v1345
      %v1355 = vmul.f32 %v1354, %v1353
      %v1356 = vmul.f32 0.5, %v1355
      %v1357 = vsub.f32 1.5, %v1356
      %v1358 = vmul.f32 %v1353, %v1357
      %vm1359 = vweird.f32 %v1345
      %vm1360 = vweird.f32 %v1353
      %vm1361 = vmor %vm1359, %vm1360
      %v1362 = vsel %vm1361, %v1353, %v1358
      %v1363 = vrsqrt.pop %v1346
      %v1364 = vmul.f32 %v1363, %v1346
      %v1365 = vmul.f32 %v1364, %v1363
      %v1366 = vmul.f32 0.5, %v1365
      %v1367 = vsub.f32 1.5, %v1366
      %v1368 = vmul.f32 %v1363, %v1367
      %vm1369 = vweird.f32 %v1346
      %vm1370 = vweird.f32 %v1363
      %vm1371 = vmor %vm1369, %vm1370
      %v1372 = vsel %vm1371, %v1363, %v1368
      %v1373 = vrsqrt.pop %v1347
      %v1374 = vmul.f32 %v1373, %v1347
      %v1375 = vmul.f32 %v1374, %v1373
      %v1376 = vmul.f32 0.5, %v1375
      %v1377 = vsub.f32 1.5, %v1376
      %v1378 = vmul.f32 %v1373, %v1377
      %vm1379 = vweird.f32 %v1347
      %vm1380 = vweird.f32 %v1373
      %vm1381 = vmor %vm1379, %vm1380
      %v1382 = vsel %vm1381, %v1373, %v1378
      %v1383 = vrsqrt.pop %v1348
      %v1384 = vmul.f32 %v1383, %v1348
      %v1385 = vmul.f32 %v1384, %v1383
      %v1386 = vmul.f32 0.5, %v1385
      %v1387 = vsub.f32 1.5, %v1386
      %v1388 = vmul.f32 %v1383, %v1387
      %vm1389 = vweird.f32 %v1348
      %vm1390 = vweird.f32 %v1383
      %vm1391 = vmor %vm1389, %vm1390
      %v1392 = vsel %vm1391, %v1383, %v1388
      %v1393 = vrsqrt.pop %v1349
      %v1394 = vmul.f32 %v1393, %v1349
      %v1395 = vmul.f32 %v1394, %v1393
      %v1396 = vmul.f32 0.5, %v1395
      %v1397 = vsub.f32 1.5, %v1396
      %v1398 = vmul.f32 %v1393, %v1397
      %vm1399 = vweird.f32 %v1349
      %vm1400 = vweird.f32 %v1393
      %vm1401 = vmor %vm1399, %vm1400
      %v1402 = vsel %vm1401, %v1393, %v1398
      %v1403 = vrsqrt.pop %v1350
      %v1404 = vmul.f32 %v1403, %v1350
      %v1405 = vmul.f32 %v1404, %v1403
      %v1406 = vmul.f32 0.5, %v1405
      %v1407 = vsub.f32 1.5, %v1406
      %v1408 = vmul.f32 %v1403, %v1407
      %vm1409 = vweird.f32 %v1350
      %vm1410 = vweird.f32 %v1403
      %vm1411 = vmor %vm1409, %vm1410
      %v1412 = vsel %vm1411, %v1403, %v1408
      %v1413 = vrsqrt.pop %v1351
      %v1414 = vmul.f32 %v1413, %v1351
      %v1415 = vmul.f32 %v1414, %v1413
      %v1416 = vmul.f32 0.5, %v1415
      %v1417 = vsub.f32 1.5, %v1416
      %v1418 = vmul.f32 %v1413, %v1417
      %vm1419 = vweird.f32 %v1351
      %vm1420 = vweird.f32 %v1413
      %vm1421 = vmor %vm1419, %vm1420
      %v1422 = vsel %vm1421, %v1413, %v1418
      %v1423 = vrsqrt.pop %v1352
      %v1424 = vmul.f32 %v1423, %v1352
      %v1425 = vmul.f32 %v1424, %v1423
      %v1426 = vmul.f32 0.5, %v1425
      %v1427 = vsub.f32 1.5, %v1426
      %v1428 = vmul.f32 %v1423, %v1427
      %vm1429 = vweird.f32 %v1352
      %vm1430 = vweird.f32 %v1423
      %vm1431 = vmor %vm1429, %vm1430
      %v1432 = vsel %vm1431, %v1423, %v1428
      %v1433 = vsub.f32 %v870, %v1097
      %v1434 = vsub.f32 %v871, %v1098
      %v1435 = vsub.f32 %v872, %v1099
      %v1436 = vsub.f32 %v873, %v1100
      %v1437 = vsub.f32 %v874, %v1101
      %v1438 = vsub.f32 %v875, %v1102
      %v1439 = vsub.f32 %v876, %v1103
      %v1440 = vsub.f32 %v877, %v1104
      %v1441 = vsub.f32 %v878, %v1097
      %v1442 = vsub.f32 %v879, %v1098
      %v1443 = vsub.f32 %v880, %v1099
      %v1444 = vsub.f32 %v881, %v1100
      %v1445 = vsub.f32 %v882, %v1101
      %v1446 = vsub.f32 %v883, %v1102
      %v1447 = vsub.f32 %v884, %v1103
      %v1448 = vsub.f32 %v885, %v1104
      %v1449 = vsub.f32 %v886, %v1097
      %v1450 = vsub.f32 %v887, %v1098
      %v1451 = vsub.f32 %v888, %v1099
      %v1452 = vsub.f32 %v889, %v1100
      %v1453 = vsub.f32 %v890, %v1101
      %v1454 = vsub.f32 %v891, %v1102
      %v1455 = vsub.f32 %v892, %v1103
      %v1456 = vsub.f32 %v893, %v1104
      %v1457 = vsub.f32 %v894, %v1097
      %v1458 = vsub.f32 %v895, %v1098
      %v1459 = vsub.f32 %v896, %v1099
      %v1460 = vsub.f32 %v897, %v1100
      %v1461 = vsub.f32 %v898, %v1101
      %v1462 = vsub.f32 %v899, %v1102
      %v1463 = vsub.f32 %v900, %v1103
      %v1464 = vsub.f32 %v901, %v1104
      %v1465 = vsub.f32 %v902, %v1097
      %v1466 = vsub.f32 %v903, %v1098
      %v1467 = vsub.f32 %v904, %v1099
      %v1468 = vsub.f32 %v905, %v1100
      %v1469 = vsub.f32 %v906, %v1101
      %v1470 = vsub.f32 %v907, %v1102
      %v1471 = vsub.f32 %v908, %v1103
      %v1472 = vsub.f32 %v909, %v1104
      %v1473 = vsub.f32 %v910, %v1097
      %v1474 = vsub.f32 %v911, %v1098
      %v1475 = vsub.f32 %v912, %v1099
      %v1476 = vsub.f32 %v913, %v1100
      %v1477 = vsub.f32 %v914, %v1101
      %v1478 = vsub.f32 %v915, %v1102
      %v1479 = vsub.f32 %v916, %v1103
      %v1480 = vsub.f32 %v917, %v1104
      %v1481 = vsub.f32 %v918, %v1097
      %v1482 = vsub.f32 %v919, %v1098
      %v1483 = vsub.f32 %v920, %v1099
      %v1484 = vsub.f32 %v921, %v1100
      %v1485 = vsub.f32 %v922, %v1101
      %v1486 = vsub.f32 %v923, %v1102
      %v1487 = vsub.f32 %v924, %v1103
      %v1488 = vsub.f32 %v925, %v1104
      %v1489 = vsub.f32 %v926, %v1097
      %v1490 = vsub.f32 %v927, %v1098
      %v1491 = vsub.f32 %v928, %v1099
      %v1492 = vsub.f32 %v929, %v1100
      %v1493 = vsub.f32 %v930, %v1101
      %v1494 = vsub.f32 %v931, %v1102
      %v1495 = vsub.f32 %v932, %v1103
      %v1496 = vsub.f32 %v933, %v1104
      %v1497 = vmul.f32 %v1433, %v1362
      %v1498 = vmul.f32 %v1434, %v1372
      %v1499 = vmul.f32 %v1435, %v1382
      %v1500 = vmul.f32 %v1436, %v1392
      %v1501 = vmul.f32 %v1437, %v1402
      %v1502 = vmul.f32 %v1438, %v1412
      %v1503 = vmul.f32 %v1439, %v1422
      %v1504 = vmul.f32 %v1440, %v1432
      %v1505 = vmul.f32 %v1441, %v1362
      %v1506 = vmul.f32 %v1442, %v1372
      %v1507 = vmul.f32 %v1443, %v1382
      %v1508 = vmul.f32 %v1444, %v1392
      %v1509 = vmul.f32 %v1445, %v1402
      %v1510 = vmul.f32 %v1446, %v1412
      %v1511 = vmul.f32 %v1447, %v1422
      %v1512 = vmul.f32 %v1448, %v1432
      %v1513 = vmul.f32 %v1449, %v1362
      %v1514 = vmul.f32 %v1450, %v1372
      %v1515 = vmul.f32 %v1451, %v1382
      %v1516 = vmul.f32 %v1452, %v1392
      %v1517 = vmul.f32 %v1453, %v1402
      %v1518 = vmul.f32 %v1454, %v1412
      %v1519 = vmul.f32 %v1455, %v1422
      %v1520 = vmul.f32 %v1456, %v1432
      %v1521 = vmul.f32 %v1457, %v1362
      %v1522 = vmul.f32 %v1458, %v1372
      %v1523 = vmul.f32 %v1459, %v1382
      %v1524 = vmul.f32 %v1460, %v1392
      %v1525 = vmul.f32 %v1461, %v1402
      %v1526 = vmul.f32 %v1462, %v1412
      %v1527 = vmul.f32 %v1463, %v1422
      %v1528 = vmul.f32 %v1464, %v1432
      %v1529 = vmul.f32 %v1465, %v1362
      %v1530 = vmul.f32 %v1466, %v1372
      %v1531 = vmul.f32 %v1467, %v1382
      %v1532 = vmul.f32 %v1468, %v1392
      %v1533 = vmul.f32 %v1469, %v1402
      %v1534 = vmul.f32 %v1470, %v1412
      %v1535 = vmul.f32 %v1471, %v1422
      %v1536 = vmul.f32 %v1472, %v1432
      %v1537 = vmul.f32 %v1473, %v1362
      %v1538 = vmul.f32 %v1474, %v1372
      %v1539 = vmul.f32 %v1475, %v1382
      %v1540 = vmul.f32 %v1476, %v1392
      %v1541 = vmul.f32 %v1477, %v1402
      %v1542 = vmul.f32 %v1478, %v1412
      %v1543 = vmul.f32 %v1479, %v1422
      %v1544 = vmul.f32 %v1480, %v1432
      %v1545 = vmul.f32 %v1481, %v1362
      %v1546 = vmul.f32 %v1482, %v1372
      %v1547 = vmul.f32 %v1483, %v1382
      %v1548 = vmul.f32 %v1484, %v1392
      %v1549 = vmul.f32 %v1485, %v1402
      %v1550 = vmul.f32 %v1486, %v1412
      %v1551 = vmul.f32 %v1487, %v1422
      %v1552 = vmul.f32 %v1488, %v1432
      %v1553 = vmul.f32 %v1489, %v1362
      %v1554 = vmul.f32 %v1490, %v1372
      %v1555 = vmul.f32 %v1491, %v1382
      %v1556 = vmul.f32 %v1492, %v1392
      %v1557 = vmul.f32 %v1493, %v1402
      %v1558 = vmul.f32 %v1494, %v1412
      %v1559 = vmul.f32 %v1495, %v1422
      %v1560 = vmul.f32 %v1496, %v1432
      %v1569 = vperm.slane %v935, 0
      %v1570 = vperm.slane %v936, 0
      %v1571 = vperm.slane %v937, 0
      %v1572 = vperm.slane %v938, 0
      %v1573 = vperm.slane %v939, 0
      %v1574 = vperm.slane %v940, 0
      %v1575 = vperm.slane %v941, 0
      %v1576 = vperm.slane %v942, 0
      %v1585 = vmul.f32 %v1497, %v1569
      %v1586 = vmul.f32 %v1498, %v1569
      %v1587 = vmul.f32 %v1499, %v1569
      %v1588 = vmul.f32 %v1500, %v1569
      %v1589 = vmul.f32 %v1501, %v1569
      %v1590 = vmul.f32 %v1502, %v1569
      %v1591 = vmul.f32 %v1503, %v1569
      %v1592 = vmul.f32 %v1504, %v1569
      %v1593 = vmul.f32 %v1505, %v1570
      %v1594 = vmul.f32 %v1506, %v1570
      %v1595 = vmul.f32 %v1507, %v1570
      %v1596 = vmul.f32 %v1508, %v1570
      %v1597 = vmul.f32 %v1509, %v1570
      %v1598 = vmul.f32 %v1510, %v1570
      %v1599 = vmul.f32 %v1511, %v1570
      %v1600 = vmul.f32 %v1512, %v1570
      %v1601 = vmul.f32 %v1513, %v1571
      %v1602 = vmul.f32 %v1514, %v1571
      %v1603 = vmul.f32 %v1515, %v1571
      %v1604 = vmul.f32 %v1516, %v1571
      %v1605 = vmul.f32 %v1517, %v1571
      %v1606 = vmul.f32 %v1518, %v1571
      %v1607 = vmul.f32 %v1519, %v1571
      %v1608 = vmul.f32 %v1520, %v1571
      %v1609 = vmul.f32 %v1521, %v1572
      %v1610 = vmul.f32 %v1522, %v1572
      %v1611 = vmul.f32 %v1523, %v1572
      %v1612 = vmul.f32 %v1524, %v1572
      %v1613 = vmul.f32 %v1525, %v1572
      %v1614 = vmul.f32 %v1526, %v1572
      %v1615 = vmul.f32 %v1527, %v1572
      %v1616 = vmul.f32 %v1528, %v1572
      %v1617 = vmul.f32 %v1529, %v1573
      %v1618 = vmul.f32 %v1530, %v1573
      %v1619 = vmul.f32 %v1531, %v1573
      %v1620 = vmul.f32 %v1532, %v1573
      %v1621 = vmul.f32 %v1533, %v1573
      %v1622 = vmul.f32 %v1534, %v1573
      %v1623 = vmul.f32 %v1535, %v1573
      %v1624 = vmul.f32 %v1536, %v1573
      %v1625 = vmul.f32 %v1537, %v1574
      %v1626 = vmul.f32 %v1538, %v1574
      %v1627 = vmul.f32 %v1539, %v1574
      %v1628 = vmul.f32 %v1540, %v1574
      %v1629 = vmul.f32 %v1541, %v1574
      %v1630 = vmul.f32 %v1542, %v1574
      %v1631 = vmul.f32 %v1543, %v1574
      %v1632 = vmul.f32 %v1544, %v1574
      %v1633 = vmul.f32 %v1545, %v1575
      %v1634 = vmul.f32 %v1546, %v1575
      %v1635 = vmul.f32 %v1547, %v1575
      %v1636 = vmul.f32 %v1548, %v1575
      %v1637 = vmul.f32 %v1549, %v1575
      %v1638 = vmul.f32 %v1550, %v1575
      %v1639 = vmul.f32 %v1551, %v1575
      %v1640 = vmul.f32 %v1552, %v1575
      %v1641 = vmul.f32 %v1553, %v1576
      %v1642 = vmul.f32 %v1554, %v1576
      %v1643 = vmul.f32 %v1555, %v1576
      %v1644 = vmul.f32 %v1556, %v1576
      %v1645 = vmul.f32 %v1557, %v1576
      %v1646 = vmul.f32 %v1558, %v1576
      %v1647 = vmul.f32 %v1559, %v1576
      %v1648 = vmul.f32 %v1560, %v1576
      %v1657 = vperm.slane %v944, 0
      %v1658 = vperm.slane %v945, 0
      %v1659 = vperm.slane %v946, 0
      %v1660 = vperm.slane %v947, 0
      %v1661 = vperm.slane %v948, 0
      %v1662 = vperm.slane %v949, 0
      %v1663 = vperm.slane %v950, 0
      %v1664 = vperm.slane %v951, 0
      %v1673 = vadd.f32 %v1585, %v1657
      %v1674 = vadd.f32 %v1586, %v1657
      %v1675 = vadd.f32 %v1587, %v1657
      %v1676 = vadd.f32 %v1588, %v1657
      %v1677 = vadd.f32 %v1589, %v1657
      %v1678 = vadd.f32 %v1590, %v1657
      %v1679 = vadd.f32 %v1591, %v1657
      %v1680 = vadd.f32 %v1592, %v1657
      %v1681 = vadd.f32 %v1593, %v1658
      %v1682 = vadd.f32 %v1594, %v1658
      %v1683 = vadd.f32 %v1595, %v1658
      %v1684 = vadd.f32 %v1596, %v1658
      %v1685 = vadd.f32 %v1597, %v1658
      %v1686 = vadd.f32 %v1598, %v1658
      %v1687 = vadd.f32 %v1599, %v1658
      %v1688 = vadd.f32 %v1600, %v1658
      %v1689 = vadd.f32 %v1601, %v1659
      %v1690 = vadd.f32 %v1602, %v1659
      %v1691 = vadd.f32 %v1603, %v1659
      %v1692 = vadd.f32 %v1604, %v1659
      %v1693 = vadd.f32 %v1605, %v1659
      %v1694 = vadd.f32 %v1606, %v1659
      %v1695 = vadd.f32 %v1607, %v1659
      %v1696 = vadd.f32 %v1608, %v1659
      %v1697 = vadd.f32 %v1609, %v1660
      %v1698 = vadd.f32 %v1610, %v1660
      %v1699 = vadd.f32 %v1611, %v1660
      %v1700 = vadd.f32 %v1612, %v1660
      %v1701 = vadd.f32 %v1613, %v1660
      %v1702 = vadd.f32 %v1614, %v1660
      %v1703 = vadd.f32 %v1615, %v1660
      %v1704 = vadd.f32 %v1616, %v1660
      %v1705 = vadd.f32 %v1617, %v1661
      %v1706 = vadd.f32 %v1618, %v1661
      %v1707 = vadd.f32 %v1619, %v1661
      %v1708 = vadd.f32 %v1620, %v1661
      %v1709 = vadd.f32 %v1621, %v1661
      %v1710 = vadd.f32 %v1622, %v1661
      %v1711 = vadd.f32 %v1623, %v1661
      %v1712 = vadd.f32 %v1624, %v1661
      %v1713 = vadd.f32 %v1625, %v1662
      %v1714 = vadd.f32 %v1626, %v1662
      %v1715 = vadd.f32 %v1627, %v1662
      %v1716 = vadd.f32 %v1628, %v1662
      %v1717 = vadd.f32 %v1629, %v1662
      %v1718 = vadd.f32 %v1630, %v1662
      %v1719 = vadd.f32 %v1631, %v1662
      %v1720 = vadd.f32 %v1632, %v1662
      %v1721 = vadd.f32 %v1633, %v1663
      %v1722 = vadd.f32 %v1634, %v1663
      %v1723 = vadd.f32 %v1635, %v1663
      %v1724 = vadd.f32 %v1636, %v1663
      %v1725 = vadd.f32 %v1637, %v1663
      %v1726 = vadd.f32 %v1638, %v1663
      %v1727 = vadd.f32 %v1639, %v1663
      %v1728 = vadd.f32 %v1640, %v1663
      %v1729 = vadd.f32 %v1641, %v1664
      %v1730 = vadd.f32 %v1642, %v1664
      %v1731 = vadd.f32 %v1643, %v1664
      %v1732 = vadd.f32 %v1644, %v1664
      %v1733 = vadd.f32 %v1645, %v1664
      %v1734 = vadd.f32 %v1646, %v1664
      %v1735 = vadd.f32 %v1647, %v1664
      %v1736 = vadd.f32 %v1648, %v1664
      %v1737 = vpack.c.bf16 %v1674, %v1673
      %v1738 = vpack.c.bf16 %v1676, %v1675
      %v1739 = vpack.c.bf16 %v1678, %v1677
      %v1740 = vpack.c.bf16 %v1680, %v1679
      %v1741 = vpack.c.bf16 %v1682, %v1681
      %v1742 = vpack.c.bf16 %v1684, %v1683
      %v1743 = vpack.c.bf16 %v1686, %v1685
      %v1744 = vpack.c.bf16 %v1688, %v1687
      %v1745 = vpack.c.bf16 %v1690, %v1689
      %v1746 = vpack.c.bf16 %v1692, %v1691
      %v1747 = vpack.c.bf16 %v1694, %v1693
      %v1748 = vpack.c.bf16 %v1696, %v1695
      %v1749 = vpack.c.bf16 %v1698, %v1697
      %v1750 = vpack.c.bf16 %v1700, %v1699
      %v1751 = vpack.c.bf16 %v1702, %v1701
      %v1752 = vpack.c.bf16 %v1704, %v1703
      %v1753 = vpack.c.bf16 %v1706, %v1705
      %v1754 = vpack.c.bf16 %v1708, %v1707
      %v1755 = vpack.c.bf16 %v1710, %v1709
      %v1756 = vpack.c.bf16 %v1712, %v1711
      %v1757 = vpack.c.bf16 %v1714, %v1713
      %v1758 = vpack.c.bf16 %v1716, %v1715
      %v1759 = vpack.c.bf16 %v1718, %v1717
      %v1760 = vpack.c.bf16 %v1720, %v1719
      %v1761 = vpack.c.bf16 %v1722, %v1721
      %v1762 = vpack.c.bf16 %v1724, %v1723
      %v1763 = vpack.c.bf16 %v1726, %v1725
      %v1764 = vpack.c.bf16 %v1728, %v1727
      %v1765 = vpack.c.bf16 %v1730, %v1729
      %v1766 = vpack.c.bf16 %v1732, %v1731
      %v1767 = vpack.c.bf16 %v1734, %v1733
      %v1768 = vpack.c.bf16 %v1736, %v1735
      %v1769 = vld [vmem:[%s3] sm:$0xf]
      %v1770 = vld [vmem:[%s3 + $0x4] sm:$0xf]
      %v1771 = vld [vmem:[%s3 + $0x8] sm:$0xf]
      %v1772 = vld [vmem:[%s3 + $0xc] sm:$0xf]
      %v1773 = vld [vmem:[%s2] sm:$0x1]
      %v1775 = vperm.slane %v1773, 0
      %v1781 = vunpack.c.l.b16 %v1769
      %v1782 = vunpack.c.l.b16 %v1770
      %v1783 = vunpack.c.l.b16 %v1771
      %v1784 = vunpack.c.l.b16 %v1772
      %v1785 = vpack.c.b16 %v1782, %v1781
      %v1786 = vpack.c.b16 %v1784, %v1783
      %v1790 = vsel %vm952, %v1737, 0
      %v1793 = vsel %vm952, %v1738, 0
      %v1796 = vsel %vm952, %v1739, 0
      %v1799 = vsel %vm952, %v1740, 0
      %v1802 = vsel %vm952, %v1741, 0
      %v1805 = vsel %vm952, %v1742, 0
      %v1808 = vsel %vm952, %v1743, 0
      %v1811 = vsel %vm952, %v1744, 0
      %v1814 = vsel %vm952, %v1745, 0
      %v1817 = vsel %vm952, %v1746, 0
      %v1820 = vsel %vm952, %v1747, 0
      %v1823 = vsel %vm952, %v1748, 0
      %v1826 = vsel %vm952, %v1749, 0
      %v1829 = vsel %vm952, %v1750, 0
      %v1832 = vsel %vm952, %v1751, 0
      %v1835 = vsel %vm952, %v1752, 0
      %v1838 = vsel %vm952, %v1753, 0
      %v1841 = vsel %vm952, %v1754, 0
      %v1844 = vsel %vm952, %v1755, 0
      %v1847 = vsel %vm952, %v1756, 0
      %v1850 = vsel %vm952, %v1757, 0
      %v1853 = vsel %vm952, %v1758, 0
      %v1856 = vsel %vm952, %v1759, 0
      %v1859 = vsel %vm952, %v1760, 0
      %v1862 = vsel %vm952, %v1761, 0
      %v1865 = vsel %vm952, %v1762, 0
      %v1868 = vsel %vm952, %v1763, 0
      %v1871 = vsel %vm952, %v1764, 0
      %v1874 = vsel %vm952, %v1765, 0
      %v1877 = vsel %vm952, %v1766, 0
      %v1880 = vsel %vm952, %v1767, 0
      %v1883 = vsel %vm952, %v1768, 0
      %1885 = vmatpush.bf16.msra.mxu0 0
      %1886 = vmatpush.bf16.msra.mxu0 0
      %1887 = vmatpush.bf16.msra.mxu0 0
      %1888 = vmatpush.bf16.msra.mxu0 0
      %1889 = vmatpush.bf16.msra.mxu0 0
      %1890 = vmatpush.bf16.msra.mxu0 0
      %1891 = vmatpush.bf16.msra.mxu0 %v1786
      %1892 = vmatpush.bf16.msra.mxu0 %v1785
      %1893 = vmatmul.bf16.gmra.mxu0 %v1790
      %v1894 = vpop.f32.mrf.mxu0
      %v1895 = vadd.f32 %v1775, %v1894
      %v1896 = vpop.f32.mrf.mxu0
      %v1897 = vadd.f32 %v1775, %v1896
      %1898 = vmatmul.bf16.gmra.mxu0 %v1793
      %v1899 = vpop.f32.mrf.mxu0
      %v1900 = vadd.f32 %v1775, %v1899
      %v1901 = vpop.f32.mrf.mxu0
      %v1902 = vadd.f32 %v1775, %v1901
      %1903 = vmatmul.bf16.gmra.mxu0 %v1796
      %v1904 = vpop.f32.mrf.mxu0
      %v1905 = vadd.f32 %v1775, %v1904
      %v1906 = vpop.f32.mrf.mxu0
      %v1907 = vadd.f32 %v1775, %v1906
      %1908 = vmatmul.bf16.gmra.mxu0 %v1799
      %v1909 = vpop.f32.mrf.mxu0
      %v1910 = vadd.f32 %v1775, %v1909
      %v1911 = vpop.f32.mrf.mxu0
      %v1912 = vadd.f32 %v1775, %v1911
      %1913 = vmatmul.bf16.gmra.mxu0 %v1802
      %v1914 = vpop.f32.mrf.mxu0
      %v1915 = vadd.f32 %v1775, %v1914
      %v1916 = vpop.f32.mrf.mxu0
      %v1917 = vadd.f32 %v1775, %v1916
      %1918 = vmatmul.bf16.gmra.mxu0 %v1805
      %v1919 = vpop.f32.mrf.mxu0
      %v1920 = vadd.f32 %v1775, %v1919
      %v1921 = vpop.f32.mrf.mxu0
      %v1922 = vadd.f32 %v1775, %v1921
      %1923 = vmatmul.bf16.gmra.mxu0 %v1808
      %v1924 = vpop.f32.mrf.mxu0
      %v1925 = vadd.f32 %v1775, %v1924
      %v1926 = vpop.f32.mrf.mxu0
      %v1927 = vadd.f32 %v1775, %v1926
      %1928 = vmatmul.bf16.gmra.mxu0 %v1811
      %v1929 = vpop.f32.mrf.mxu0
      %v1930 = vadd.f32 %v1775, %v1929
      %v1931 = vpop.f32.mrf.mxu0
      %v1932 = vadd.f32 %v1775, %v1931
      %1933 = vmatmul.bf16.gmra.mxu0 %v1814
      %v1934 = vpop.f32.mrf.mxu0
      %v1935 = vadd.f32 %v1775, %v1934
      %v1936 = vpop.f32.mrf.mxu0
      %v1937 = vadd.f32 %v1775, %v1936
      %1938 = vmatmul.bf16.gmra.mxu0 %v1817
      %v1939 = vpop.f32.mrf.mxu0
      %v1940 = vadd.f32 %v1775, %v1939
      %v1941 = vpop.f32.mrf.mxu0
      %v1942 = vadd.f32 %v1775, %v1941
      %1943 = vmatmul.bf16.gmra.mxu0 %v1820
      %v1944 = vpop.f32.mrf.mxu0
      %v1945 = vadd.f32 %v1775, %v1944
      %v1946 = vpop.f32.mrf.mxu0
      %v1947 = vadd.f32 %v1775, %v1946
      %1948 = vmatmul.bf16.gmra.mxu0 %v1823
      %v1949 = vpop.f32.mrf.mxu0
      %v1950 = vadd.f32 %v1775, %v1949
      %v1951 = vpop.f32.mrf.mxu0
      %v1952 = vadd.f32 %v1775, %v1951
      %1953 = vmatmul.bf16.gmra.mxu0 %v1826
      %v1954 = vpop.f32.mrf.mxu0
      %v1955 = vadd.f32 %v1775, %v1954
      %v1956 = vpop.f32.mrf.mxu0
      %v1957 = vadd.f32 %v1775, %v1956
      %1958 = vmatmul.bf16.gmra.mxu0 %v1829
      %v1959 = vpop.f32.mrf.mxu0
      %v1960 = vadd.f32 %v1775, %v1959
      %v1961 = vpop.f32.mrf.mxu0
      %v1962 = vadd.f32 %v1775, %v1961
      %1963 = vmatmul.bf16.gmra.mxu0 %v1832
      %v1964 = vpop.f32.mrf.mxu0
      %v1965 = vadd.f32 %v1775, %v1964
      %v1966 = vpop.f32.mrf.mxu0
      %v1967 = vadd.f32 %v1775, %v1966
      %1968 = vmatmul.bf16.gmra.mxu0 %v1835
      %v1969 = vpop.f32.mrf.mxu0
      %v1970 = vadd.f32 %v1775, %v1969
      %v1971 = vpop.f32.mrf.mxu0
      %v1972 = vadd.f32 %v1775, %v1971
      %1973 = vmatmul.bf16.gmra.mxu0 %v1838
      %v1974 = vpop.f32.mrf.mxu0
      %v1975 = vadd.f32 %v1775, %v1974
      %v1976 = vpop.f32.mrf.mxu0
      %v1977 = vadd.f32 %v1775, %v1976
      %1978 = vmatmul.bf16.gmra.mxu0 %v1841
      %v1979 = vpop.f32.mrf.mxu0
      %v1980 = vadd.f32 %v1775, %v1979
      %v1981 = vpop.f32.mrf.mxu0
      %v1982 = vadd.f32 %v1775, %v1981
      %1983 = vmatmul.bf16.gmra.mxu0 %v1844
      %v1984 = vpop.f32.mrf.mxu0
      %v1985 = vadd.f32 %v1775, %v1984
      %v1986 = vpop.f32.mrf.mxu0
      %v1987 = vadd.f32 %v1775, %v1986
      %1988 = vmatmul.bf16.gmra.mxu0 %v1847
      %v1989 = vpop.f32.mrf.mxu0
      %v1990 = vadd.f32 %v1775, %v1989
      %v1991 = vpop.f32.mrf.mxu0
      %v1992 = vadd.f32 %v1775, %v1991
      %1993 = vmatmul.bf16.gmra.mxu0 %v1850
      %v1994 = vpop.f32.mrf.mxu0
      %v1995 = vadd.f32 %v1775, %v1994
      %v1996 = vpop.f32.mrf.mxu0
      %v1997 = vadd.f32 %v1775, %v1996
      %1998 = vmatmul.bf16.gmra.mxu0 %v1853
      %v1999 = vpop.f32.mrf.mxu0
      %v2000 = vadd.f32 %v1775, %v1999
      %v2001 = vpop.f32.mrf.mxu0
      %v2002 = vadd.f32 %v1775, %v2001
      %2003 = vmatmul.bf16.gmra.mxu0 %v1856
      %v2004 = vpop.f32.mrf.mxu0
      %v2005 = vadd.f32 %v1775, %v2004
      %v2006 = vpop.f32.mrf.mxu0
      %v2007 = vadd.f32 %v1775, %v2006
      %2008 = vmatmul.bf16.gmra.mxu0 %v1859
      %v2009 = vpop.f32.mrf.mxu0
      %v2010 = vadd.f32 %v1775, %v2009
      %v2011 = vpop.f32.mrf.mxu0
      %v2012 = vadd.f32 %v1775, %v2011
      %2013 = vmatmul.bf16.gmra.mxu0 %v1862
      %v2014 = vpop.f32.mrf.mxu0
      %v2015 = vadd.f32 %v1775, %v2014
      %v2016 = vpop.f32.mrf.mxu0
      %v2017 = vadd.f32 %v1775, %v2016
      %2018 = vmatmul.bf16.gmra.mxu0 %v1865
      %v2019 = vpop.f32.mrf.mxu0
      %v2020 = vadd.f32 %v1775, %v2019
      %v2021 = vpop.f32.mrf.mxu0
      %v2022 = vadd.f32 %v1775, %v2021
      %2023 = vmatmul.bf16.gmra.mxu0 %v1868
      %v2024 = vpop.f32.mrf.mxu0
      %v2025 = vadd.f32 %v1775, %v2024
      %v2026 = vpop.f32.mrf.mxu0
      %v2027 = vadd.f32 %v1775, %v2026
      %2028 = vmatmul.bf16.gmra.mxu0 %v1871
      %v2029 = vpop.f32.mrf.mxu0
      %v2030 = vadd.f32 %v1775, %v2029
      %v2031 = vpop.f32.mrf.mxu0
      %v2032 = vadd.f32 %v1775, %v2031
      %2033 = vmatmul.bf16.gmra.mxu0 %v1874
      %v2034 = vpop.f32.mrf.mxu0
      %v2035 = vadd.f32 %v1775, %v2034
      %v2036 = vpop.f32.mrf.mxu0
      %v2037 = vadd.f32 %v1775, %v2036
      %2038 = vmatmul.bf16.gmra.mxu0 %v1877
      %v2039 = vpop.f32.mrf.mxu0
      %v2040 = vadd.f32 %v1775, %v2039
      %v2041 = vpop.f32.mrf.mxu0
      %v2042 = vadd.f32 %v1775, %v2041
      %2043 = vmatmul.bf16.gmra.mxu0 %v1880
      %v2044 = vpop.f32.mrf.mxu0
      %v2045 = vadd.f32 %v1775, %v2044
      %v2046 = vpop.f32.mrf.mxu0
      %v2047 = vadd.f32 %v1775, %v2046
      %2048 = vmatmul.bf16.gmra.mxu0 %v1883
      %v2049 = vpop.f32.mrf.mxu0
      %v2050 = vadd.f32 %v1775, %v2049
      %v2051 = vpop.f32.mrf.mxu0
      %v2052 = vadd.f32 %v1775, %v2051
      %2053 = vdwg.mxu0
      %v2054 = vpack.c.bf16 %v1895, %v1895
      %v2055 = vpack.c.bf16 %v1897, %v1897
      %v2056 = vpack.c.bf16 %v1900, %v1900
      %v2057 = vpack.c.bf16 %v1902, %v1902
      %v2058 = vpack.c.bf16 %v1905, %v1905
      %v2059 = vpack.c.bf16 %v1907, %v1907
      %v2060 = vpack.c.bf16 %v1910, %v1910
      %v2061 = vpack.c.bf16 %v1912, %v1912
      %v2062 = vpack.c.bf16 %v1915, %v1915
      %v2063 = vpack.c.bf16 %v1917, %v1917
      %v2064 = vpack.c.bf16 %v1920, %v1920
      %v2065 = vpack.c.bf16 %v1922, %v1922
      %v2066 = vpack.c.bf16 %v1925, %v1925
      %v2067 = vpack.c.bf16 %v1927, %v1927
      %v2068 = vpack.c.bf16 %v1930, %v1930
      %v2069 = vpack.c.bf16 %v1932, %v1932
      %v2070 = vpack.c.bf16 %v1935, %v1935
      %v2071 = vpack.c.bf16 %v1937, %v1937
      %v2072 = vpack.c.bf16 %v1940, %v1940
      %v2073 = vpack.c.bf16 %v1942, %v1942
      %v2074 = vpack.c.bf16 %v1945, %v1945
      %v2075 = vpack.c.bf16 %v1947, %v1947
      %v2076 = vpack.c.bf16 %v1950, %v1950
      %v2077 = vpack.c.bf16 %v1952, %v1952
      %v2078 = vpack.c.bf16 %v1955, %v1955
      %v2079 = vpack.c.bf16 %v1957, %v1957
      %v2080 = vpack.c.bf16 %v1960, %v1960
      %v2081 = vpack.c.bf16 %v1962, %v1962
      %v2082 = vpack.c.bf16 %v1965, %v1965
      %v2083 = vpack.c.bf16 %v1967, %v1967
      %v2084 = vpack.c.bf16 %v1970, %v1970
      %v2085 = vpack.c.bf16 %v1972, %v1972
      %v2086 = vpack.c.bf16 %v1975, %v1975
      %v2087 = vpack.c.bf16 %v1977, %v1977
      %v2088 = vpack.c.bf16 %v1980, %v1980
      %v2089 = vpack.c.bf16 %v1982, %v1982
      %v2090 = vpack.c.bf16 %v1985, %v1985
      %v2091 = vpack.c.bf16 %v1987, %v1987
      %v2092 = vpack.c.bf16 %v1990, %v1990
      %v2093 = vpack.c.bf16 %v1992, %v1992
      %v2094 = vpack.c.bf16 %v1995, %v1995
      %v2095 = vpack.c.bf16 %v1997, %v1997
      %v2096 = vpack.c.bf16 %v2000, %v2000
      %v2097 = vpack.c.bf16 %v2002, %v2002
      %v2098 = vpack.c.bf16 %v2005, %v2005
      %v2099 = vpack.c.bf16 %v2007, %v2007
      %v2100 = vpack.c.bf16 %v2010, %v2010
      %v2101 = vpack.c.bf16 %v2012, %v2012
      %v2102 = vpack.c.bf16 %v2015, %v2015
      %v2103 = vpack.c.bf16 %v2017, %v2017
      %v2104 = vpack.c.bf16 %v2020, %v2020
      %v2105 = vpack.c.bf16 %v2022, %v2022
      %v2106 = vpack.c.bf16 %v2025, %v2025
      %v2107 = vpack.c.bf16 %v2027, %v2027
      %v2108 = vpack.c.bf16 %v2030, %v2030
      %v2109 = vpack.c.bf16 %v2032, %v2032
      %v2110 = vpack.c.bf16 %v2035, %v2035
      %v2111 = vpack.c.bf16 %v2037, %v2037
      %v2112 = vpack.c.bf16 %v2040, %v2040
      %v2113 = vpack.c.bf16 %v2042, %v2042
      %v2114 = vpack.c.bf16 %v2045, %v2045
      %v2115 = vpack.c.bf16 %v2047, %v2047
      %v2116 = vpack.c.bf16 %v2050, %v2050
      %v2117 = vpack.c.bf16 %v2052, %v2052
      %v2126 = vunpack.c.l.b16 %v2054
      %v2127 = vunpack.c.l.b16 %v2055
      %v2128 = vunpack.c.l.b16 %v2056
      %v2129 = vunpack.c.l.b16 %v2057
      %v2130 = vunpack.c.l.b16 %v2058
      %v2131 = vunpack.c.l.b16 %v2059
      %v2132 = vunpack.c.l.b16 %v2060
      %v2133 = vunpack.c.l.b16 %v2061
      %v2134 = vpack.c.b16 %v2127, %v2126
      %v2135 = vpack.c.b16 %v2129, %v2128
      %v2136 = vpack.c.b16 %v2131, %v2130
      %v2137 = vpack.c.b16 %v2133, %v2132
      %2138 = vrot.lane.b32.xlu0 %v2134, 96
      %v2139 = vpop.permute.xlu0 %2138
      %2140 = vrot.lane.b32.xlu0 %v2135, 96
      %v2141 = vpop.permute.xlu0 %2140
      %2142 = vrot.lane.b32.xlu0 %v2136, 96
      %v2143 = vpop.permute.xlu0 %2142
      %2144 = vrot.lane.b32.xlu0 %v2137, 96
      %v2145 = vpop.permute.xlu0 %2144
      %v2147 = vsel %vm952, %v2134, 0
      %v2150 = vsel %vm952, %v2135, 0
      %v2153 = vsel %vm952, %v2136, 0
      %v2156 = vsel %vm952, %v2137, 0
      %v2159 = vsel %vm952, %v2139, 0
      %v2162 = vsel %vm952, %v2141, 0
      %v2165 = vsel %vm952, %v2143, 0
      %v2168 = vsel %vm952, %v2145, 0
      %2170 = vmatpush.bf16.xpose.msra.mxu0 0
      %2171 = vmatpush.bf16.xpose.msra.mxu0 0
      %2172 = vmatpush.bf16.xpose.msra.mxu0 0
      %2173 = vmatpush.bf16.xpose.msra.mxu0 0
      %2174 = vmatpush.bf16.xpose.msra.mxu0 %v2168
      %2175 = vmatpush.bf16.xpose.msra.mxu0 %v2165
      %2176 = vmatpush.bf16.xpose.msra.mxu0 %v2162
      %2177 = vmatpush.bf16.xpose.msra.mxu0 %v2159
      %2178 = vmatmul.bf16.gmra.mxu0 %v2147
      %v2179 = vpop.f32.mrf.mxu0
      %v2180 = vadd.f32 0.0, %v2179
      %v2181 = vpop.f32.mrf.mxu0
      %v2182 = vadd.f32 0.0, %v2181
      %2183 = vmatmul.bf16.gmra.mxu0 %v2150
      %v2184 = vpop.f32.mrf.mxu0
      %v2185 = vadd.f32 0.0, %v2184
      %v2186 = vpop.f32.mrf.mxu0
      %v2187 = vadd.f32 0.0, %v2186
      %2188 = vmatmul.bf16.gmra.mxu0 %v2153
      %v2189 = vpop.f32.mrf.mxu0
      %v2190 = vadd.f32 0.0, %v2189
      %v2191 = vpop.f32.mrf.mxu0
      %v2192 = vadd.f32 0.0, %v2191
      %2193 = vmatmul.bf16.gmra.mxu0 %v2156
      %v2194 = vpop.f32.mrf.mxu0
      %v2195 = vadd.f32 0.0, %v2194
      %v2196 = vpop.f32.mrf.mxu0
      %v2197 = vadd.f32 0.0, %v2196
      %2198 = vdwg.mxu0
      %v2207 = vunpack.c.l.b16 %v2062
      %v2208 = vunpack.c.l.b16 %v2063
      %v2209 = vunpack.c.l.b16 %v2064
      %v2210 = vunpack.c.l.b16 %v2065
      %v2211 = vunpack.c.l.b16 %v2066
      %v2212 = vunpack.c.l.b16 %v2067
      %v2213 = vunpack.c.l.b16 %v2068
      %v2214 = vunpack.c.l.b16 %v2069
      %v2215 = vpack.c.b16 %v2208, %v2207
      %v2216 = vpack.c.b16 %v2210, %v2209
      %v2217 = vpack.c.b16 %v2212, %v2211
      %v2218 = vpack.c.b16 %v2214, %v2213
      %2219 = vrot.lane.b32.xlu0 %v2215, 96
      %v2220 = vpop.permute.xlu0 %2219
      %2221 = vrot.lane.b32.xlu0 %v2216, 96
      %v2222 = vpop.permute.xlu0 %2221
      %2223 = vrot.lane.b32.xlu0 %v2217, 96
      %v2224 = vpop.permute.xlu0 %2223
      %2225 = vrot.lane.b32.xlu0 %v2218, 96
      %v2226 = vpop.permute.xlu0 %2225
      %v2228 = vsel %vm952, %v2215, 0
      %v2231 = vsel %vm952, %v2216, 0
      %v2234 = vsel %vm952, %v2217, 0
      %v2237 = vsel %vm952, %v2218, 0
      %v2240 = vsel %vm952, %v2220, 0
      %v2243 = vsel %vm952, %v2222, 0
      %v2246 = vsel %vm952, %v2224, 0
      %v2249 = vsel %vm952, %v2226, 0
      %2251 = vmatpush.bf16.xpose.msra.mxu0 0
      %2252 = vmatpush.bf16.xpose.msra.mxu0 0
      %2253 = vmatpush.bf16.xpose.msra.mxu0 0
      %2254 = vmatpush.bf16.xpose.msra.mxu0 0
      %2255 = vmatpush.bf16.xpose.msra.mxu0 %v2249
      %2256 = vmatpush.bf16.xpose.msra.mxu0 %v2246
      %2257 = vmatpush.bf16.xpose.msra.mxu0 %v2243
      %2258 = vmatpush.bf16.xpose.msra.mxu0 %v2240
      %2259 = vmatmul.bf16.gmra.mxu0 %v2228
      %v2260 = vpop.f32.mrf.mxu0
      %v2261 = vadd.f32 0.0, %v2260
      %v2262 = vpop.f32.mrf.mxu0
      %v2263 = vadd.f32 0.0, %v2262
      %2264 = vmatmul.bf16.gmra.mxu0 %v2231
      %v2265 = vpop.f32.mrf.mxu0
      %v2266 = vadd.f32 0.0, %v2265
      %v2267 = vpop.f32.mrf.mxu0
      %v2268 = vadd.f32 0.0, %v2267
      %2269 = vmatmul.bf16.gmra.mxu0 %v2234
      %v2270 = vpop.f32.mrf.mxu0
      %v2271 = vadd.f32 0.0, %v2270
      %v2272 = vpop.f32.mrf.mxu0
      %v2273 = vadd.f32 0.0, %v2272
      %2274 = vmatmul.bf16.gmra.mxu0 %v2237
      %v2275 = vpop.f32.mrf.mxu0
      %v2276 = vadd.f32 0.0, %v2275
      %v2277 = vpop.f32.mrf.mxu0
      %v2278 = vadd.f32 0.0, %v2277
      %2279 = vdwg.mxu0
      %v2288 = vunpack.c.l.b16 %v2070
      %v2289 = vunpack.c.l.b16 %v2071
      %v2290 = vunpack.c.l.b16 %v2072
      %v2291 = vunpack.c.l.b16 %v2073
      %v2292 = vunpack.c.l.b16 %v2074
      %v2293 = vunpack.c.l.b16 %v2075
      %v2294 = vunpack.c.l.b16 %v2076
      %v2295 = vunpack.c.l.b16 %v2077
      %v2296 = vpack.c.b16 %v2289, %v2288
      %v2297 = vpack.c.b16 %v2291, %v2290
      %v2298 = vpack.c.b16 %v2293, %v2292
      %v2299 = vpack.c.b16 %v2295, %v2294
      %2300 = vrot.lane.b32.xlu0 %v2296, 96
      %v2301 = vpop.permute.xlu0 %2300
      %2302 = vrot.lane.b32.xlu0 %v2297, 96
      %v2303 = vpop.permute.xlu0 %2302
      %2304 = vrot.lane.b32.xlu0 %v2298, 96
      %v2305 = vpop.permute.xlu0 %2304
      %2306 = vrot.lane.b32.xlu0 %v2299, 96
      %v2307 = vpop.permute.xlu0 %2306
      %v2309 = vsel %vm952, %v2296, 0
      %v2312 = vsel %vm952, %v2297, 0
      %v2315 = vsel %vm952, %v2298, 0
      %v2318 = vsel %vm952, %v2299, 0
      %v2321 = vsel %vm952, %v2301, 0
      %v2324 = vsel %vm952, %v2303, 0
      %v2327 = vsel %vm952, %v2305, 0
      %v2330 = vsel %vm952, %v2307, 0
      %2332 = vmatpush.bf16.xpose.msra.mxu0 0
      %2333 = vmatpush.bf16.xpose.msra.mxu0 0
      %2334 = vmatpush.bf16.xpose.msra.mxu0 0
      %2335 = vmatpush.bf16.xpose.msra.mxu0 0
      %2336 = vmatpush.bf16.xpose.msra.mxu0 %v2330
      %2337 = vmatpush.bf16.xpose.msra.mxu0 %v2327
      %2338 = vmatpush.bf16.xpose.msra.mxu0 %v2324
      %2339 = vmatpush.bf16.xpose.msra.mxu0 %v2321
      %2340 = vmatmul.bf16.gmra.mxu0 %v2309
      %v2341 = vpop.f32.mrf.mxu0
      %v2342 = vadd.f32 0.0, %v2341
      %v2343 = vpop.f32.mrf.mxu0
      %v2344 = vadd.f32 0.0, %v2343
      %2345 = vmatmul.bf16.gmra.mxu0 %v2312
      %v2346 = vpop.f32.mrf.mxu0
      %v2347 = vadd.f32 0.0, %v2346
      %v2348 = vpop.f32.mrf.mxu0
      %v2349 = vadd.f32 0.0, %v2348
      %2350 = vmatmul.bf16.gmra.mxu0 %v2315
      %v2351 = vpop.f32.mrf.mxu0
      %v2352 = vadd.f32 0.0, %v2351
      %v2353 = vpop.f32.mrf.mxu0
      %v2354 = vadd.f32 0.0, %v2353
      %2355 = vmatmul.bf16.gmra.mxu0 %v2318
      %v2356 = vpop.f32.mrf.mxu0
      %v2357 = vadd.f32 0.0, %v2356
      %v2358 = vpop.f32.mrf.mxu0
      %v2359 = vadd.f32 0.0, %v2358
      %2360 = vdwg.mxu0
      %v2369 = vunpack.c.l.b16 %v2078
      %v2370 = vunpack.c.l.b16 %v2079
      %v2371 = vunpack.c.l.b16 %v2080
      %v2372 = vunpack.c.l.b16 %v2081
      %v2373 = vunpack.c.l.b16 %v2082
      %v2374 = vunpack.c.l.b16 %v2083
      %v2375 = vunpack.c.l.b16 %v2084
      %v2376 = vunpack.c.l.b16 %v2085
      %v2377 = vpack.c.b16 %v2370, %v2369
      %v2378 = vpack.c.b16 %v2372, %v2371
      %v2379 = vpack.c.b16 %v2374, %v2373
      %v2380 = vpack.c.b16 %v2376, %v2375
      %2381 = vrot.lane.b32.xlu0 %v2377, 96
      %v2382 = vpop.permute.xlu0 %2381
      %2383 = vrot.lane.b32.xlu0 %v2378, 96
      %v2384 = vpop.permute.xlu0 %2383
      %2385 = vrot.lane.b32.xlu0 %v2379, 96
      %v2386 = vpop.permute.xlu0 %2385
      %2387 = vrot.lane.b32.xlu0 %v2380, 96
      %v2388 = vpop.permute.xlu0 %2387
      %v2390 = vsel %vm952, %v2377, 0
      %v2393 = vsel %vm952, %v2378, 0
      %v2396 = vsel %vm952, %v2379, 0
      %v2399 = vsel %vm952, %v2380, 0
      %v2402 = vsel %vm952, %v2382, 0
      %v2405 = vsel %vm952, %v2384, 0
      %v2408 = vsel %vm952, %v2386, 0
      %v2411 = vsel %vm952, %v2388, 0
      %2413 = vmatpush.bf16.xpose.msra.mxu0 0
      %2414 = vmatpush.bf16.xpose.msra.mxu0 0
      %2415 = vmatpush.bf16.xpose.msra.mxu0 0
      %2416 = vmatpush.bf16.xpose.msra.mxu0 0
      %2417 = vmatpush.bf16.xpose.msra.mxu0 %v2411
      %2418 = vmatpush.bf16.xpose.msra.mxu0 %v2408
      %2419 = vmatpush.bf16.xpose.msra.mxu0 %v2405
      %2420 = vmatpush.bf16.xpose.msra.mxu0 %v2402
      %2421 = vmatmul.bf16.gmra.mxu0 %v2390
      %v2422 = vpop.f32.mrf.mxu0
      %v2423 = vadd.f32 0.0, %v2422
      %v2424 = vpop.f32.mrf.mxu0
      %v2425 = vadd.f32 0.0, %v2424
      %2426 = vmatmul.bf16.gmra.mxu0 %v2393
      %v2427 = vpop.f32.mrf.mxu0
      %v2428 = vadd.f32 0.0, %v2427
      %v2429 = vpop.f32.mrf.mxu0
      %v2430 = vadd.f32 0.0, %v2429
      %2431 = vmatmul.bf16.gmra.mxu0 %v2396
      %v2432 = vpop.f32.mrf.mxu0
      %v2433 = vadd.f32 0.0, %v2432
      %v2434 = vpop.f32.mrf.mxu0
      %v2435 = vadd.f32 0.0, %v2434
      %2436 = vmatmul.bf16.gmra.mxu0 %v2399
      %v2437 = vpop.f32.mrf.mxu0
      %v2438 = vadd.f32 0.0, %v2437
      %v2439 = vpop.f32.mrf.mxu0
      %v2440 = vadd.f32 0.0, %v2439
      %2441 = vdwg.mxu0
      %v2450 = vunpack.c.l.b16 %v2086
      %v2451 = vunpack.c.l.b16 %v2087
      %v2452 = vunpack.c.l.b16 %v2088
      %v2453 = vunpack.c.l.b16 %v2089
      %v2454 = vunpack.c.l.b16 %v2090
      %v2455 = vunpack.c.l.b16 %v2091
      %v2456 = vunpack.c.l.b16 %v2092
      %v2457 = vunpack.c.l.b16 %v2093
      %v2458 = vpack.c.b16 %v2451, %v2450
      %v2459 = vpack.c.b16 %v2453, %v2452
      %v2460 = vpack.c.b16 %v2455, %v2454
      %v2461 = vpack.c.b16 %v2457, %v2456
      %2462 = vrot.lane.b32.xlu0 %v2458, 96
      %v2463 = vpop.permute.xlu0 %2462
      %2464 = vrot.lane.b32.xlu0 %v2459, 96
      %v2465 = vpop.permute.xlu0 %2464
      %2466 = vrot.lane.b32.xlu0 %v2460, 96
      %v2467 = vpop.permute.xlu0 %2466
      %2468 = vrot.lane.b32.xlu0 %v2461, 96
      %v2469 = vpop.permute.xlu0 %2468
      %v2471 = vsel %vm952, %v2458, 0
      %v2474 = vsel %vm952, %v2459, 0
      %v2477 = vsel %vm952, %v2460, 0
      %v2480 = vsel %vm952, %v2461, 0
      %v2483 = vsel %vm952, %v2463, 0
      %v2486 = vsel %vm952, %v2465, 0
      %v2489 = vsel %vm952, %v2467, 0
      %v2492 = vsel %vm952, %v2469, 0
      %2494 = vmatpush.bf16.xpose.msra.mxu0 0
      %2495 = vmatpush.bf16.xpose.msra.mxu0 0
      %2496 = vmatpush.bf16.xpose.msra.mxu0 0
      %2497 = vmatpush.bf16.xpose.msra.mxu0 0
      %2498 = vmatpush.bf16.xpose.msra.mxu0 %v2492
      %2499 = vmatpush.bf16.xpose.msra.mxu0 %v2489
      %2500 = vmatpush.bf16.xpose.msra.mxu0 %v2486
      %2501 = vmatpush.bf16.xpose.msra.mxu0 %v2483
      %2502 = vmatmul.bf16.gmra.mxu0 %v2471
      %v2503 = vpop.f32.mrf.mxu0
      %v2504 = vadd.f32 0.0, %v2503
      %v2505 = vpop.f32.mrf.mxu0
      %v2506 = vadd.f32 0.0, %v2505
      %2507 = vmatmul.bf16.gmra.mxu0 %v2474
      %v2508 = vpop.f32.mrf.mxu0
      %v2509 = vadd.f32 0.0, %v2508
      %v2510 = vpop.f32.mrf.mxu0
      %v2511 = vadd.f32 0.0, %v2510
      %2512 = vmatmul.bf16.gmra.mxu0 %v2477
      %v2513 = vpop.f32.mrf.mxu0
      %v2514 = vadd.f32 0.0, %v2513
      %v2515 = vpop.f32.mrf.mxu0
      %v2516 = vadd.f32 0.0, %v2515
      %2517 = vmatmul.bf16.gmra.mxu0 %v2480
      %v2518 = vpop.f32.mrf.mxu0
      %v2519 = vadd.f32 0.0, %v2518
      %v2520 = vpop.f32.mrf.mxu0
      %v2521 = vadd.f32 0.0, %v2520
      %2522 = vdwg.mxu0
      %v2531 = vunpack.c.l.b16 %v2094
      %v2532 = vunpack.c.l.b16 %v2095
      %v2533 = vunpack.c.l.b16 %v2096
      %v2534 = vunpack.c.l.b16 %v2097
      %v2535 = vunpack.c.l.b16 %v2098
      %v2536 = vunpack.c.l.b16 %v2099
      %v2537 = vunpack.c.l.b16 %v2100
      %v2538 = vunpack.c.l.b16 %v2101
      %v2539 = vpack.c.b16 %v2532, %v2531
      %v2540 = vpack.c.b16 %v2534, %v2533
      %v2541 = vpack.c.b16 %v2536, %v2535
      %v2542 = vpack.c.b16 %v2538, %v2537
      %2543 = vrot.lane.b32.xlu0 %v2539, 96
      %v2544 = vpop.permute.xlu0 %2543
      %2545 = vrot.lane.b32.xlu0 %v2540, 96
      %v2546 = vpop.permute.xlu0 %2545
      %2547 = vrot.lane.b32.xlu0 %v2541, 96
      %v2548 = vpop.permute.xlu0 %2547
      %2549 = vrot.lane.b32.xlu0 %v2542, 96
      %v2550 = vpop.permute.xlu0 %2549
      %v2552 = vsel %vm952, %v2539, 0
      %v2555 = vsel %vm952, %v2540, 0
      %v2558 = vsel %vm952, %v2541, 0
      %v2561 = vsel %vm952, %v2542, 0
      %v2564 = vsel %vm952, %v2544, 0
      %v2567 = vsel %vm952, %v2546, 0
      %v2570 = vsel %vm952, %v2548, 0
      %v2573 = vsel %vm952, %v2550, 0
      %2575 = vmatpush.bf16.xpose.msra.mxu0 0
      %2576 = vmatpush.bf16.xpose.msra.mxu0 0
      %2577 = vmatpush.bf16.xpose.msra.mxu0 0
      %2578 = vmatpush.bf16.xpose.msra.mxu0 0
      %2579 = vmatpush.bf16.xpose.msra.mxu0 %v2573
      %2580 = vmatpush.bf16.xpose.msra.mxu0 %v2570
      %2581 = vmatpush.bf16.xpose.msra.mxu0 %v2567
      %2582 = vmatpush.bf16.xpose.msra.mxu0 %v2564
      %2583 = vmatmul.bf16.gmra.mxu0 %v2552
      %v2584 = vpop.f32.mrf.mxu0
      %v2585 = vadd.f32 0.0, %v2584
      %v2586 = vpop.f32.mrf.mxu0
      %v2587 = vadd.f32 0.0, %v2586
      %2588 = vmatmul.bf16.gmra.mxu0 %v2555
      %v2589 = vpop.f32.mrf.mxu0
      %v2590 = vadd.f32 0.0, %v2589
      %v2591 = vpop.f32.mrf.mxu0
      %v2592 = vadd.f32 0.0, %v2591
      %2593 = vmatmul.bf16.gmra.mxu0 %v2558
      %v2594 = vpop.f32.mrf.mxu0
      %v2595 = vadd.f32 0.0, %v2594
      %v2596 = vpop.f32.mrf.mxu0
      %v2597 = vadd.f32 0.0, %v2596
      %2598 = vmatmul.bf16.gmra.mxu0 %v2561
      %v2599 = vpop.f32.mrf.mxu0
      %v2600 = vadd.f32 0.0, %v2599
      %v2601 = vpop.f32.mrf.mxu0
      %v2602 = vadd.f32 0.0, %v2601
      %2603 = vdwg.mxu0
      %v2612 = vunpack.c.l.b16 %v2102
      %v2613 = vunpack.c.l.b16 %v2103
      %v2614 = vunpack.c.l.b16 %v2104
      %v2615 = vunpack.c.l.b16 %v2105
      %v2616 = vunpack.c.l.b16 %v2106
      %v2617 = vunpack.c.l.b16 %v2107
      %v2618 = vunpack.c.l.b16 %v2108
      %v2619 = vunpack.c.l.b16 %v2109
      %v2620 = vpack.c.b16 %v2613, %v2612
      %v2621 = vpack.c.b16 %v2615, %v2614
      %v2622 = vpack.c.b16 %v2617, %v2616
      %v2623 = vpack.c.b16 %v2619, %v2618
      %2624 = vrot.lane.b32.xlu0 %v2620, 96
      %v2625 = vpop.permute.xlu0 %2624
      %2626 = vrot.lane.b32.xlu0 %v2621, 96
      %v2627 = vpop.permute.xlu0 %2626
      %2628 = vrot.lane.b32.xlu0 %v2622, 96
      %v2629 = vpop.permute.xlu0 %2628
      %2630 = vrot.lane.b32.xlu0 %v2623, 96
      %v2631 = vpop.permute.xlu0 %2630
      %v2633 = vsel %vm952, %v2620, 0
      %v2636 = vsel %vm952, %v2621, 0
      %v2639 = vsel %vm952, %v2622, 0
      %v2642 = vsel %vm952, %v2623, 0
      %v2645 = vsel %vm952, %v2625, 0
      %v2648 = vsel %vm952, %v2627, 0
      %v2651 = vsel %vm952, %v2629, 0
      %v2654 = vsel %vm952, %v2631, 0
      %2656 = vmatpush.bf16.xpose.msra.mxu0 0
      %2657 = vmatpush.bf16.xpose.msra.mxu0 0
      %2658 = vmatpush.bf16.xpose.msra.mxu0 0
      %2659 = vmatpush.bf16.xpose.msra.mxu0 0
      %2660 = vmatpush.bf16.xpose.msra.mxu0 %v2654
      %2661 = vmatpush.bf16.xpose.msra.mxu0 %v2651
      %2662 = vmatpush.bf16.xpose.msra.mxu0 %v2648
      %2663 = vmatpush.bf16.xpose.msra.mxu0 %v2645
      %2664 = vmatmul.bf16.gmra.mxu0 %v2633
      %v2665 = vpop.f32.mrf.mxu0
      %v2666 = vadd.f32 0.0, %v2665
      %v2667 = vpop.f32.mrf.mxu0
      %v2668 = vadd.f32 0.0, %v2667
      %2669 = vmatmul.bf16.gmra.mxu0 %v2636
      %v2670 = vpop.f32.mrf.mxu0
      %v2671 = vadd.f32 0.0, %v2670
      %v2672 = vpop.f32.mrf.mxu0
      %v2673 = vadd.f32 0.0, %v2672
      %2674 = vmatmul.bf16.gmra.mxu0 %v2639
      %v2675 = vpop.f32.mrf.mxu0
      %v2676 = vadd.f32 0.0, %v2675
      %v2677 = vpop.f32.mrf.mxu0
      %v2678 = vadd.f32 0.0, %v2677
      %2679 = vmatmul.bf16.gmra.mxu0 %v2642
      %v2680 = vpop.f32.mrf.mxu0
      %v2681 = vadd.f32 0.0, %v2680
      %v2682 = vpop.f32.mrf.mxu0
      %v2683 = vadd.f32 0.0, %v2682
      %2684 = vdwg.mxu0
      %v2693 = vunpack.c.l.b16 %v2110
      %v2694 = vunpack.c.l.b16 %v2111
      %v2695 = vunpack.c.l.b16 %v2112
      %v2696 = vunpack.c.l.b16 %v2113
      %v2697 = vunpack.c.l.b16 %v2114
      %v2698 = vunpack.c.l.b16 %v2115
      %v2699 = vunpack.c.l.b16 %v2116
      %v2700 = vunpack.c.l.b16 %v2117
      %v2701 = vpack.c.b16 %v2694, %v2693
      %v2702 = vpack.c.b16 %v2696, %v2695
      %v2703 = vpack.c.b16 %v2698, %v2697
      %v2704 = vpack.c.b16 %v2700, %v2699
      %2705 = vrot.lane.b32.xlu0 %v2701, 96
      %v2706 = vpop.permute.xlu0 %2705
      %2707 = vrot.lane.b32.xlu0 %v2702, 96
      %v2708 = vpop.permute.xlu0 %2707
      %2709 = vrot.lane.b32.xlu0 %v2703, 96
      %v2710 = vpop.permute.xlu0 %2709
      %2711 = vrot.lane.b32.xlu0 %v2704, 96
      %v2712 = vpop.permute.xlu0 %2711
      %v2714 = vsel %vm952, %v2701, 0
      %v2717 = vsel %vm952, %v2702, 0
      %v2720 = vsel %vm952, %v2703, 0
      %v2723 = vsel %vm952, %v2704, 0
      %v2726 = vsel %vm952, %v2706, 0
      %v2729 = vsel %vm952, %v2708, 0
      %v2732 = vsel %vm952, %v2710, 0
      %v2735 = vsel %vm952, %v2712, 0
      %2737 = vmatpush.bf16.xpose.msra.mxu0 0
      %2738 = vmatpush.bf16.xpose.msra.mxu0 0
      %2739 = vmatpush.bf16.xpose.msra.mxu0 0
      %2740 = vmatpush.bf16.xpose.msra.mxu0 0
      %2741 = vmatpush.bf16.xpose.msra.mxu0 %v2735
      %2742 = vmatpush.bf16.xpose.msra.mxu0 %v2732
      %2743 = vmatpush.bf16.xpose.msra.mxu0 %v2729
      %2744 = vmatpush.bf16.xpose.msra.mxu0 %v2726
      %2745 = vmatmul.bf16.gmra.mxu0 %v2714
      %v2746 = vpop.f32.mrf.mxu0
      %v2747 = vadd.f32 0.0, %v2746
      %v2748 = vpop.f32.mrf.mxu0
      %v2749 = vadd.f32 0.0, %v2748
      %2750 = vmatmul.bf16.gmra.mxu0 %v2717
      %v2751 = vpop.f32.mrf.mxu0
      %v2752 = vadd.f32 0.0, %v2751
      %v2753 = vpop.f32.mrf.mxu0
      %v2754 = vadd.f32 0.0, %v2753
      %2755 = vmatmul.bf16.gmra.mxu0 %v2720
      %v2756 = vpop.f32.mrf.mxu0
      %v2757 = vadd.f32 0.0, %v2756
      %v2758 = vpop.f32.mrf.mxu0
      %v2759 = vadd.f32 0.0, %v2758
      %2760 = vmatmul.bf16.gmra.mxu0 %v2723
      %v2761 = vpop.f32.mrf.mxu0
      %v2762 = vadd.f32 0.0, %v2761
      %v2763 = vpop.f32.mrf.mxu0
      %v2764 = vadd.f32 0.0, %v2763
      %2765 = vdwg.mxu0
      %vm2766 = vcmask 523264
      %v2767 = vsel %vm2766, %v2180, -inf
      %2768 = vmax.xlane.f32.xlu0 %v2767
      %v2769 = vpop.xlane.xlu0 %2768
      %v2770 = vsel %vm2766, %v2182, -inf
      %2771 = vmax.xlane.f32.xlu0 %v2770
      %v2772 = vpop.xlane.xlu0 %2771
      %v2773 = vsel %vm2766, %v2185, -inf
      %2774 = vmax.xlane.f32.xlu0 %v2773
      %v2775 = vpop.xlane.xlu0 %2774
      %v2776 = vsel %vm2766, %v2187, -inf
      %2777 = vmax.xlane.f32.xlu0 %v2776
      %v2778 = vpop.xlane.xlu0 %2777
      %v2779 = vsel %vm2766, %v2190, -inf
      %2780 = vmax.xlane.f32.xlu0 %v2779
      %v2781 = vpop.xlane.xlu0 %2780
      %v2782 = vsel %vm2766, %v2192, -inf
      %2783 = vmax.xlane.f32.xlu0 %v2782
      %v2784 = vpop.xlane.xlu0 %2783
      %v2785 = vsel %vm2766, %v2195, -inf
      %2786 = vmax.xlane.f32.xlu0 %v2785
      %v2787 = vpop.xlane.xlu0 %2786
      %v2788 = vsel %vm2766, %v2197, -inf
      %2789 = vmax.xlane.f32.xlu0 %v2788
      %v2790 = vpop.xlane.xlu0 %2789
      %v2791 = vsel %vm2766, %v2261, -inf
      %2792 = vmax.xlane.f32.xlu0 %v2791
      %v2793 = vpop.xlane.xlu0 %2792
      %v2794 = vsel %vm2766, %v2263, -inf
      %2795 = vmax.xlane.f32.xlu0 %v2794
      %v2796 = vpop.xlane.xlu0 %2795
      %v2797 = vsel %vm2766, %v2266, -inf
      %2798 = vmax.xlane.f32.xlu0 %v2797
      %v2799 = vpop.xlane.xlu0 %2798
      %v2800 = vsel %vm2766, %v2268, -inf
      %2801 = vmax.xlane.f32.xlu0 %v2800
      %v2802 = vpop.xlane.xlu0 %2801
      %v2803 = vsel %vm2766, %v2271, -inf
      %2804 = vmax.xlane.f32.xlu0 %v2803
      %v2805 = vpop.xlane.xlu0 %2804
      %v2806 = vsel %vm2766, %v2273, -inf
      %2807 = vmax.xlane.f32.xlu0 %v2806
      %v2808 = vpop.xlane.xlu0 %2807
      %v2809 = vsel %vm2766, %v2276, -inf
      %2810 = vmax.xlane.f32.xlu0 %v2809
      %v2811 = vpop.xlane.xlu0 %2810
      %v2812 = vsel %vm2766, %v2278, -inf
      %2813 = vmax.xlane.f32.xlu0 %v2812
      %v2814 = vpop.xlane.xlu0 %2813
      %v2815 = vsel %vm2766, %v2342, -inf
      %2816 = vmax.xlane.f32.xlu0 %v2815
      %v2817 = vpop.xlane.xlu0 %2816
      %v2818 = vsel %vm2766, %v2344, -inf
      %2819 = vmax.xlane.f32.xlu0 %v2818
      %v2820 = vpop.xlane.xlu0 %2819
      %v2821 = vsel %vm2766, %v2347, -inf
      %2822 = vmax.xlane.f32.xlu0 %v2821
      %v2823 = vpop.xlane.xlu0 %2822
      %v2824 = vsel %vm2766, %v2349, -inf
      %2825 = vmax.xlane.f32.xlu0 %v2824
      %v2826 = vpop.xlane.xlu0 %2825
      %v2827 = vsel %vm2766, %v2352, -inf
      %2828 = vmax.xlane.f32.xlu0 %v2827
      %v2829 = vpop.xlane.xlu0 %2828
      %v2830 = vsel %vm2766, %v2354, -inf
      %2831 = vmax.xlane.f32.xlu0 %v2830
      %v2832 = vpop.xlane.xlu0 %2831
      %v2833 = vsel %vm2766, %v2357, -inf
      %2834 = vmax.xlane.f32.xlu0 %v2833
      %v2835 = vpop.xlane.xlu0 %2834
      %v2836 = vsel %vm2766, %v2359, -inf
      %2837 = vmax.xlane.f32.xlu0 %v2836
      %v2838 = vpop.xlane.xlu0 %2837
      %v2839 = vsel %vm2766, %v2423, -inf
      %2840 = vmax.xlane.f32.xlu0 %v2839
      %v2841 = vpop.xlane.xlu0 %2840
      %v2842 = vsel %vm2766, %v2425, -inf
      %2843 = vmax.xlane.f32.xlu0 %v2842
      %v2844 = vpop.xlane.xlu0 %2843
      %v2845 = vsel %vm2766, %v2428, -inf
      %2846 = vmax.xlane.f32.xlu0 %v2845
      %v2847 = vpop.xlane.xlu0 %2846
      %v2848 = vsel %vm2766, %v2430, -inf
      %2849 = vmax.xlane.f32.xlu0 %v2848
      %v2850 = vpop.xlane.xlu0 %2849
      %v2851 = vsel %vm2766, %v2433, -inf
      %2852 = vmax.xlane.f32.xlu0 %v2851
      %v2853 = vpop.xlane.xlu0 %2852
      %v2854 = vsel %vm2766, %v2435, -inf
      %2855 = vmax.xlane.f32.xlu0 %v2854
      %v2856 = vpop.xlane.xlu0 %2855
      %v2857 = vsel %vm2766, %v2438, -inf
      %2858 = vmax.xlane.f32.xlu0 %v2857
      %v2859 = vpop.xlane.xlu0 %2858
      %v2860 = vsel %vm2766, %v2440, -inf
      %2861 = vmax.xlane.f32.xlu0 %v2860
      %v2862 = vpop.xlane.xlu0 %2861
      %v2863 = vsel %vm2766, %v2504, -inf
      %2864 = vmax.xlane.f32.xlu0 %v2863
      %v2865 = vpop.xlane.xlu0 %2864
      %v2866 = vsel %vm2766, %v2506, -inf
      %2867 = vmax.xlane.f32.xlu0 %v2866
      %v2868 = vpop.xlane.xlu0 %2867
      %v2869 = vsel %vm2766, %v2509, -inf
      %2870 = vmax.xlane.f32.xlu0 %v2869
      %v2871 = vpop.xlane.xlu0 %2870
      %v2872 = vsel %vm2766, %v2511, -inf
      %2873 = vmax.xlane.f32.xlu0 %v2872
      %v2874 = vpop.xlane.xlu0 %2873
      %v2875 = vsel %vm2766, %v2514, -inf
      %2876 = vmax.xlane.f32.xlu0 %v2875
      %v2877 = vpop.xlane.xlu0 %2876
      %v2878 = vsel %vm2766, %v2516, -inf
      %2879 = vmax.xlane.f32.xlu0 %v2878
      %v2880 = vpop.xlane.xlu0 %2879
      %v2881 = vsel %vm2766, %v2519, -inf
      %2882 = vmax.xlane.f32.xlu0 %v2881
      %v2883 = vpop.xlane.xlu0 %2882
      %v2884 = vsel %vm2766, %v2521, -inf
      %2885 = vmax.xlane.f32.xlu0 %v2884
      %v2886 = vpop.xlane.xlu0 %2885
      %v2887 = vsel %vm2766, %v2585, -inf
      %2888 = vmax.xlane.f32.xlu0 %v2887
      %v2889 = vpop.xlane.xlu0 %2888
      %v2890 = vsel %vm2766, %v2587, -inf
      %2891 = vmax.xlane.f32.xlu0 %v2890
      %v2892 = vpop.xlane.xlu0 %2891
      %v2893 = vsel %vm2766, %v2590, -inf
      %2894 = vmax.xlane.f32.xlu0 %v2893
      %v2895 = vpop.xlane.xlu0 %2894
      %v2896 = vsel %vm2766, %v2592, -inf
      %2897 = vmax.xlane.f32.xlu0 %v2896
      %v2898 = vpop.xlane.xlu0 %2897
      %v2899 = vsel %vm2766, %v2595, -inf
      %2900 = vmax.xlane.f32.xlu0 %v2899
      %v2901 = vpop.xlane.xlu0 %2900
      %v2902 = vsel %vm2766, %v2597, -inf
      %2903 = vmax.xlane.f32.xlu0 %v2902
      %v2904 = vpop.xlane.xlu0 %2903
      %v2905 = vsel %vm2766, %v2600, -inf
      %2906 = vmax.xlane.f32.xlu0 %v2905
      %v2907 = vpop.xlane.xlu0 %2906
      %v2908 = vsel %vm2766, %v2602, -inf
      %2909 = vmax.xlane.f32.xlu0 %v2908
      %v2910 = vpop.xlane.xlu0 %2909
      %v2911 = vsel %vm2766, %v2666, -inf
      %2912 = vmax.xlane.f32.xlu0 %v2911
      %v2913 = vpop.xlane.xlu0 %2912
      %v2914 = vsel %vm2766, %v2668, -inf
      %2915 = vmax.xlane.f32.xlu0 %v2914
      %v2916 = vpop.xlane.xlu0 %2915
      %v2917 = vsel %vm2766, %v2671, -inf
      %2918 = vmax.xlane.f32.xlu0 %v2917
      %v2919 = vpop.xlane.xlu0 %2918
      %v2920 = vsel %vm2766, %v2673, -inf
      %2921 = vmax.xlane.f32.xlu0 %v2920
      %v2922 = vpop.xlane.xlu0 %2921
      %v2923 = vsel %vm2766, %v2676, -inf
      %2924 = vmax.xlane.f32.xlu0 %v2923
      %v2925 = vpop.xlane.xlu0 %2924
      %v2926 = vsel %vm2766, %v2678, -inf
      %2927 = vmax.xlane.f32.xlu0 %v2926
      %v2928 = vpop.xlane.xlu0 %2927
      %v2929 = vsel %vm2766, %v2681, -inf
      %2930 = vmax.xlane.f32.xlu0 %v2929
      %v2931 = vpop.xlane.xlu0 %2930
      %v2932 = vsel %vm2766, %v2683, -inf
      %2933 = vmax.xlane.f32.xlu0 %v2932
      %v2934 = vpop.xlane.xlu0 %2933
      %v2935 = vsel %vm2766, %v2747, -inf
      %2936 = vmax.xlane.f32.xlu0 %v2935
      %v2937 = vpop.xlane.xlu0 %2936
      %v2938 = vsel %vm2766, %v2749, -inf
      %2939 = vmax.xlane.f32.xlu0 %v2938
      %v2940 = vpop.xlane.xlu0 %2939
      %v2941 = vsel %vm2766, %v2752, -inf
      %2942 = vmax.xlane.f32.xlu0 %v2941
      %v2943 = vpop.xlane.xlu0 %2942
      %v2944 = vsel %vm2766, %v2754, -inf
      %2945 = vmax.xlane.f32.xlu0 %v2944
      %v2946 = vpop.xlane.xlu0 %2945
      %v2947 = vsel %vm2766, %v2757, -inf
      %2948 = vmax.xlane.f32.xlu0 %v2947
      %v2949 = vpop.xlane.xlu0 %2948
      %v2950 = vsel %vm2766, %v2759, -inf
      %2951 = vmax.xlane.f32.xlu0 %v2950
      %v2952 = vpop.xlane.xlu0 %2951
      %v2953 = vsel %vm2766, %v2762, -inf
      %2954 = vmax.xlane.f32.xlu0 %v2953
      %v2955 = vpop.xlane.xlu0 %2954
      %v2956 = vsel %vm2766, %v2764, -inf
      %2957 = vmax.xlane.f32.xlu0 %v2956
      %v2958 = vpop.xlane.xlu0 %2957
      %v2959 = vsub.f32 %v2180, %v2769
      %v2960 = vsub.f32 %v2182, %v2772
      %v2961 = vsub.f32 %v2185, %v2775
      %v2962 = vsub.f32 %v2187, %v2778
      %v2963 = vsub.f32 %v2190, %v2781
      %v2964 = vsub.f32 %v2192, %v2784
      %v2965 = vsub.f32 %v2195, %v2787
      %v2966 = vsub.f32 %v2197, %v2790
      %v2967 = vsub.f32 %v2261, %v2793
      %v2968 = vsub.f32 %v2263, %v2796
      %v2969 = vsub.f32 %v2266, %v2799
      %v2970 = vsub.f32 %v2268, %v2802
      %v2971 = vsub.f32 %v2271, %v2805
      %v2972 = vsub.f32 %v2273, %v2808
      %v2973 = vsub.f32 %v2276, %v2811
      %v2974 = vsub.f32 %v2278, %v2814
      %v2975 = vsub.f32 %v2342, %v2817
      %v2976 = vsub.f32 %v2344, %v2820
      %v2977 = vsub.f32 %v2347, %v2823
      %v2978 = vsub.f32 %v2349, %v2826
      %v2979 = vsub.f32 %v2352, %v2829
      %v2980 = vsub.f32 %v2354, %v2832
      %v2981 = vsub.f32 %v2357, %v2835
      %v2982 = vsub.f32 %v2359, %v2838
      %v2983 = vsub.f32 %v2423, %v2841
      %v2984 = vsub.f32 %v2425, %v2844
      %v2985 = vsub.f32 %v2428, %v2847
      %v2986 = vsub.f32 %v2430, %v2850
      %v2987 = vsub.f32 %v2433, %v2853
      %v2988 = vsub.f32 %v2435, %v2856
      %v2989 = vsub.f32 %v2438, %v2859
      %v2990 = vsub.f32 %v2440, %v2862
      %v2991 = vsub.f32 %v2504, %v2865
      %v2992 = vsub.f32 %v2506, %v2868
      %v2993 = vsub.f32 %v2509, %v2871
      %v2994 = vsub.f32 %v2511, %v2874
      %v2995 = vsub.f32 %v2514, %v2877
      %v2996 = vsub.f32 %v2516, %v2880
      %v2997 = vsub.f32 %v2519, %v2883
      %v2998 = vsub.f32 %v2521, %v2886
      %v2999 = vsub.f32 %v2585, %v2889
      %v3000 = vsub.f32 %v2587, %v2892
      %v3001 = vsub.f32 %v2590, %v2895
      %v3002 = vsub.f32 %v2592, %v2898
      %v3003 = vsub.f32 %v2595, %v2901
      %v3004 = vsub.f32 %v2597, %v2904
      %v3005 = vsub.f32 %v2600, %v2907
      %v3006 = vsub.f32 %v2602, %v2910
      %v3007 = vsub.f32 %v2666, %v2913
      %v3008 = vsub.f32 %v2668, %v2916
      %v3009 = vsub.f32 %v2671, %v2919
      %v3010 = vsub.f32 %v2673, %v2922
      %v3011 = vsub.f32 %v2676, %v2925
      %v3012 = vsub.f32 %v2678, %v2928
      %v3013 = vsub.f32 %v2681, %v2931
      %v3014 = vsub.f32 %v2683, %v2934
      %v3015 = vsub.f32 %v2747, %v2937
      %v3016 = vsub.f32 %v2749, %v2940
      %v3017 = vsub.f32 %v2752, %v2943
      %v3018 = vsub.f32 %v2754, %v2946
      %v3019 = vsub.f32 %v2757, %v2949
      %v3020 = vsub.f32 %v2759, %v2952
      %v3021 = vsub.f32 %v2762, %v2955
      %v3022 = vsub.f32 %v2764, %v2958
      %v3023 = vmul.f32 %v2959, 1.442695
      %v3024 = vpow.pop %v3023
      %v3025 = vmul.f32 %v2960, 1.442695
      %v3026 = vpow.pop %v3025
      %v3027 = vmul.f32 %v2961, 1.442695
      %v3028 = vpow.pop %v3027
      %v3029 = vmul.f32 %v2962, 1.442695
      %v3030 = vpow.pop %v3029
      %v3031 = vmul.f32 %v2963, 1.442695
      %v3032 = vpow.pop %v3031
      %v3033 = vmul.f32 %v2964, 1.442695
      %v3034 = vpow.pop %v3033
      %v3035 = vmul.f32 %v2965, 1.442695
      %v3036 = vpow.pop %v3035
      %v3037 = vmul.f32 %v2966, 1.442695
      %v3038 = vpow.pop %v3037
      %v3039 = vmul.f32 %v2967, 1.442695
      %v3040 = vpow.pop %v3039
      %v3041 = vmul.f32 %v2968, 1.442695
      %v3042 = vpow.pop %v3041
      %v3043 = vmul.f32 %v2969, 1.442695
      %v3044 = vpow.pop %v3043
      %v3045 = vmul.f32 %v2970, 1.442695
      %v3046 = vpow.pop %v3045
      %v3047 = vmul.f32 %v2971, 1.442695
      %v3048 = vpow.pop %v3047
      %v3049 = vmul.f32 %v2972, 1.442695
      %v3050 = vpow.pop %v3049
      %v3051 = vmul.f32 %v2973, 1.442695
      %v3052 = vpow.pop %v3051
      %v3053 = vmul.f32 %v2974, 1.442695
      %v3054 = vpow.pop %v3053
      %v3055 = vmul.f32 %v2975, 1.442695
      %v3056 = vpow.pop %v3055
      %v3057 = vmul.f32 %v2976, 1.442695
      %v3058 = vpow.pop %v3057
      %v3059 = vmul.f32 %v2977, 1.442695
      %v3060 = vpow.pop %v3059
      %v3061 = vmul.f32 %v2978, 1.442695
      %v3062 = vpow.pop %v3061
      %v3063 = vmul.f32 %v2979, 1.442695
      %v3064 = vpow.pop %v3063
      %v3065 = vmul.f32 %v2980, 1.442695
      %v3066 = vpow.pop %v3065
      %v3067 = vmul.f32 %v2981, 1.442695
      %v3068 = vpow.pop %v3067
      %v3069 = vmul.f32 %v2982, 1.442695
      %v3070 = vpow.pop %v3069
      %v3071 = vmul.f32 %v2983, 1.442695
      %v3072 = vpow.pop %v3071
      %v3073 = vmul.f32 %v2984, 1.442695
      %v3074 = vpow.pop %v3073
      %v3075 = vmul.f32 %v2985, 1.442695
      %v3076 = vpow.pop %v3075
      %v3077 = vmul.f32 %v2986, 1.442695
      %v3078 = vpow.pop %v3077
      %v3079 = vmul.f32 %v2987, 1.442695
      %v3080 = vpow.pop %v3079
      %v3081 = vmul.f32 %v2988, 1.442695
      %v3082 = vpow.pop %v3081
      %v3083 = vmul.f32 %v2989, 1.442695
      %v3084 = vpow.pop %v3083
      %v3085 = vmul.f32 %v2990, 1.442695
      %v3086 = vpow.pop %v3085
      %v3087 = vmul.f32 %v2991, 1.442695
      %v3088 = vpow.pop %v3087
      %v3089 = vmul.f32 %v2992, 1.442695
      %v3090 = vpow.pop %v3089
      %v3091 = vmul.f32 %v2993, 1.442695
      %v3092 = vpow.pop %v3091
      %v3093 = vmul.f32 %v2994, 1.442695
      %v3094 = vpow.pop %v3093
      %v3095 = vmul.f32 %v2995, 1.442695
      %v3096 = vpow.pop %v3095
      %v3097 = vmul.f32 %v2996, 1.442695
      %v3098 = vpow.pop %v3097
      %v3099 = vmul.f32 %v2997, 1.442695
      %v3100 = vpow.pop %v3099
      %v3101 = vmul.f32 %v2998, 1.442695
      %v3102 = vpow.pop %v3101
      %v3103 = vmul.f32 %v2999, 1.442695
      %v3104 = vpow.pop %v3103
      %v3105 = vmul.f32 %v3000, 1.442695
      %v3106 = vpow.pop %v3105
      %v3107 = vmul.f32 %v3001, 1.442695
      %v3108 = vpow.pop %v3107
      %v3109 = vmul.f32 %v3002, 1.442695
      %v3110 = vpow.pop %v3109
      %v3111 = vmul.f32 %v3003, 1.442695
      %v3112 = vpow.pop %v3111
      %v3113 = vmul.f32 %v3004, 1.442695
      %v3114 = vpow.pop %v3113
      %v3115 = vmul.f32 %v3005, 1.442695
      %v3116 = vpow.pop %v3115
      %v3117 = vmul.f32 %v3006, 1.442695
      %v3118 = vpow.pop %v3117
      %v3119 = vmul.f32 %v3007, 1.442695
      %v3120 = vpow.pop %v3119
      %v3121 = vmul.f32 %v3008, 1.442695
      %v3122 = vpow.pop %v3121
      %v3123 = vmul.f32 %v3009, 1.442695
      %v3124 = vpow.pop %v3123
      %v3125 = vmul.f32 %v3010, 1.442695
      %v3126 = vpow.pop %v3125
      %v3127 = vmul.f32 %v3011, 1.442695
      %v3128 = vpow.pop %v3127
      %v3129 = vmul.f32 %v3012, 1.442695
      %v3130 = vpow.pop %v3129
      %v3131 = vmul.f32 %v3013, 1.442695
      %v3132 = vpow.pop %v3131
      %v3133 = vmul.f32 %v3014, 1.442695
      %v3134 = vpow.pop %v3133
      %v3135 = vmul.f32 %v3015, 1.442695
      %v3136 = vpow.pop %v3135
      %v3137 = vmul.f32 %v3016, 1.442695
      %v3138 = vpow.pop %v3137
      %v3139 = vmul.f32 %v3017, 1.442695
      %v3140 = vpow.pop %v3139
      %v3141 = vmul.f32 %v3018, 1.442695
      %v3142 = vpow.pop %v3141
      %v3143 = vmul.f32 %v3019, 1.442695
      %v3144 = vpow.pop %v3143
      %v3145 = vmul.f32 %v3020, 1.442695
      %v3146 = vpow.pop %v3145
      %v3147 = vmul.f32 %v3021, 1.442695
      %v3148 = vpow.pop %v3147
      %v3149 = vmul.f32 %v3022, 1.442695
      %v3150 = vpow.pop %v3149
      %v3151 = vsel %vm2766, %v3024, 0.0
      %3152 = vadd.xlane.f32.xlu0 %v3151
      %v3153 = vpop.xlane.xlu0 %3152
      %v3154 = vsel %vm2766, %v3026, 0.0
      %3155 = vadd.xlane.f32.xlu0 %v3154
      %v3156 = vpop.xlane.xlu0 %3155
      %v3157 = vsel %vm2766, %v3028, 0.0
      %3158 = vadd.xlane.f32.xlu0 %v3157
      %v3159 = vpop.xlane.xlu0 %3158
      %v3160 = vsel %vm2766, %v3030, 0.0
      %3161 = vadd.xlane.f32.xlu0 %v3160
      %v3162 = vpop.xlane.xlu0 %3161
      %v3163 = vsel %vm2766, %v3032, 0.0
      %3164 = vadd.xlane.f32.xlu0 %v3163
      %v3165 = vpop.xlane.xlu0 %3164
      %v3166 = vsel %vm2766, %v3034, 0.0
      %3167 = vadd.xlane.f32.xlu0 %v3166
      %v3168 = vpop.xlane.xlu0 %3167
      %v3169 = vsel %vm2766, %v3036, 0.0
      %3170 = vadd.xlane.f32.xlu0 %v3169
      %v3171 = vpop.xlane.xlu0 %3170
      %v3172 = vsel %vm2766, %v3038, 0.0
      %3173 = vadd.xlane.f32.xlu0 %v3172
      %v3174 = vpop.xlane.xlu0 %3173
      %v3175 = vsel %vm2766, %v3040, 0.0
      %3176 = vadd.xlane.f32.xlu0 %v3175
      %v3177 = vpop.xlane.xlu0 %3176
      %v3178 = vsel %vm2766, %v3042, 0.0
      %3179 = vadd.xlane.f32.xlu0 %v3178
      %v3180 = vpop.xlane.xlu0 %3179
      %v3181 = vsel %vm2766, %v3044, 0.0
      %3182 = vadd.xlane.f32.xlu0 %v3181
      %v3183 = vpop.xlane.xlu0 %3182
      %v3184 = vsel %vm2766, %v3046, 0.0
      %3185 = vadd.xlane.f32.xlu0 %v3184
      %v3186 = vpop.xlane.xlu0 %3185
      %v3187 = vsel %vm2766, %v3048, 0.0
      %3188 = vadd.xlane.f32.xlu0 %v3187
      %v3189 = vpop.xlane.xlu0 %3188
      %v3190 = vsel %vm2766, %v3050, 0.0
      %3191 = vadd.xlane.f32.xlu0 %v3190
      %v3192 = vpop.xlane.xlu0 %3191
      %v3193 = vsel %vm2766, %v3052, 0.0
      %3194 = vadd.xlane.f32.xlu0 %v3193
      %v3195 = vpop.xlane.xlu0 %3194
      %v3196 = vsel %vm2766, %v3054, 0.0
      %3197 = vadd.xlane.f32.xlu0 %v3196
      %v3198 = vpop.xlane.xlu0 %3197
      %v3199 = vsel %vm2766, %v3056, 0.0
      %3200 = vadd.xlane.f32.xlu0 %v3199
      %v3201 = vpop.xlane.xlu0 %3200
      %v3202 = vsel %vm2766, %v3058, 0.0
      %3203 = vadd.xlane.f32.xlu0 %v3202
      %v3204 = vpop.xlane.xlu0 %3203
      %v3205 = vsel %vm2766, %v3060, 0.0
      %3206 = vadd.xlane.f32.xlu0 %v3205
      %v3207 = vpop.xlane.xlu0 %3206
      %v3208 = vsel %vm2766, %v3062, 0.0
      %3209 = vadd.xlane.f32.xlu0 %v3208
      %v3210 = vpop.xlane.xlu0 %3209
      %v3211 = vsel %vm2766, %v3064, 0.0
      %3212 = vadd.xlane.f32.xlu0 %v3211
      %v3213 = vpop.xlane.xlu0 %3212
      %v3214 = vsel %vm2766, %v3066, 0.0
      %3215 = vadd.xlane.f32.xlu0 %v3214
      %v3216 = vpop.xlane.xlu0 %3215
      %v3217 = vsel %vm2766, %v3068, 0.0
      %3218 = vadd.xlane.f32.xlu0 %v3217
      %v3219 = vpop.xlane.xlu0 %3218
      %v3220 = vsel %vm2766, %v3070, 0.0
      %3221 = vadd.xlane.f32.xlu0 %v3220
      %v3222 = vpop.xlane.xlu0 %3221
      %v3223 = vsel %vm2766, %v3072, 0.0
      %3224 = vadd.xlane.f32.xlu0 %v3223
      %v3225 = vpop.xlane.xlu0 %3224
      %v3226 = vsel %vm2766, %v3074, 0.0
      %3227 = vadd.xlane.f32.xlu0 %v3226
      %v3228 = vpop.xlane.xlu0 %3227
      %v3229 = vsel %vm2766, %v3076, 0.0
      %3230 = vadd.xlane.f32.xlu0 %v3229
      %v3231 = vpop.xlane.xlu0 %3230
      %v3232 = vsel %vm2766, %v3078, 0.0
      %3233 = vadd.xlane.f32.xlu0 %v3232
      %v3234 = vpop.xlane.xlu0 %3233
      %v3235 = vsel %vm2766, %v3080, 0.0
      %3236 = vadd.xlane.f32.xlu0 %v3235
      %v3237 = vpop.xlane.xlu0 %3236
      %v3238 = vsel %vm2766, %v3082, 0.0
      %3239 = vadd.xlane.f32.xlu0 %v3238
      %v3240 = vpop.xlane.xlu0 %3239
      %v3241 = vsel %vm2766, %v3084, 0.0
      %3242 = vadd.xlane.f32.xlu0 %v3241
      %v3243 = vpop.xlane.xlu0 %3242
      %v3244 = vsel %vm2766, %v3086, 0.0
      %3245 = vadd.xlane.f32.xlu0 %v3244
      %v3246 = vpop.xlane.xlu0 %3245
      %v3247 = vsel %vm2766, %v3088, 0.0
      %3248 = vadd.xlane.f32.xlu0 %v3247
      %v3249 = vpop.xlane.xlu0 %3248
      %v3250 = vsel %vm2766, %v3090, 0.0
      %3251 = vadd.xlane.f32.xlu0 %v3250
      %v3252 = vpop.xlane.xlu0 %3251
      %v3253 = vsel %vm2766, %v3092, 0.0
      %3254 = vadd.xlane.f32.xlu0 %v3253
      %v3255 = vpop.xlane.xlu0 %3254
      %v3256 = vsel %vm2766, %v3094, 0.0
      %3257 = vadd.xlane.f32.xlu0 %v3256
      %v3258 = vpop.xlane.xlu0 %3257
      %v3259 = vsel %vm2766, %v3096, 0.0
      %3260 = vadd.xlane.f32.xlu0 %v3259
      %v3261 = vpop.xlane.xlu0 %3260
      %v3262 = vsel %vm2766, %v3098, 0.0
      %3263 = vadd.xlane.f32.xlu0 %v3262
      %v3264 = vpop.xlane.xlu0 %3263
      %v3265 = vsel %vm2766, %v3100, 0.0
      %3266 = vadd.xlane.f32.xlu0 %v3265
      %v3267 = vpop.xlane.xlu0 %3266
      %v3268 = vsel %vm2766, %v3102, 0.0
      %3269 = vadd.xlane.f32.xlu0 %v3268
      %v3270 = vpop.xlane.xlu0 %3269
      %v3271 = vsel %vm2766, %v3104, 0.0
      %3272 = vadd.xlane.f32.xlu0 %v3271
      %v3273 = vpop.xlane.xlu0 %3272
      %v3274 = vsel %vm2766, %v3106, 0.0
      %3275 = vadd.xlane.f32.xlu0 %v3274
      %v3276 = vpop.xlane.xlu0 %3275
      %v3277 = vsel %vm2766, %v3108, 0.0
      %3278 = vadd.xlane.f32.xlu0 %v3277
      %v3279 = vpop.xlane.xlu0 %3278
      %v3280 = vsel %vm2766, %v3110, 0.0
      %3281 = vadd.xlane.f32.xlu0 %v3280
      %v3282 = vpop.xlane.xlu0 %3281
      %v3283 = vsel %vm2766, %v3112, 0.0
      %3284 = vadd.xlane.f32.xlu0 %v3283
      %v3285 = vpop.xlane.xlu0 %3284
      %v3286 = vsel %vm2766, %v3114, 0.0
      %3287 = vadd.xlane.f32.xlu0 %v3286
      %v3288 = vpop.xlane.xlu0 %3287
      %v3289 = vsel %vm2766, %v3116, 0.0
      %3290 = vadd.xlane.f32.xlu0 %v3289
      %v3291 = vpop.xlane.xlu0 %3290
      %v3292 = vsel %vm2766, %v3118, 0.0
      %3293 = vadd.xlane.f32.xlu0 %v3292
      %v3294 = vpop.xlane.xlu0 %3293
      %v3295 = vsel %vm2766, %v3120, 0.0
      %3296 = vadd.xlane.f32.xlu0 %v3295
      %v3297 = vpop.xlane.xlu0 %3296
      %v3298 = vsel %vm2766, %v3122, 0.0
      %3299 = vadd.xlane.f32.xlu0 %v3298
      %v3300 = vpop.xlane.xlu0 %3299
      %v3301 = vsel %vm2766, %v3124, 0.0
      %3302 = vadd.xlane.f32.xlu0 %v3301
      %v3303 = vpop.xlane.xlu0 %3302
      %v3304 = vsel %vm2766, %v3126, 0.0
      %3305 = vadd.xlane.f32.xlu0 %v3304
      %v3306 = vpop.xlane.xlu0 %3305
      %v3307 = vsel %vm2766, %v3128, 0.0
      %3308 = vadd.xlane.f32.xlu0 %v3307
      %v3309 = vpop.xlane.xlu0 %3308
      %v3310 = vsel %vm2766, %v3130, 0.0
      %3311 = vadd.xlane.f32.xlu0 %v3310
      %v3312 = vpop.xlane.xlu0 %3311
      %v3313 = vsel %vm2766, %v3132, 0.0
      %3314 = vadd.xlane.f32.xlu0 %v3313
      %v3315 = vpop.xlane.xlu0 %3314
      %v3316 = vsel %vm2766, %v3134, 0.0
      %3317 = vadd.xlane.f32.xlu0 %v3316
      %v3318 = vpop.xlane.xlu0 %3317
      %v3319 = vsel %vm2766, %v3136, 0.0
      %3320 = vadd.xlane.f32.xlu0 %v3319
      %v3321 = vpop.xlane.xlu0 %3320
      %v3322 = vsel %vm2766, %v3138, 0.0
      %3323 = vadd.xlane.f32.xlu0 %v3322
      %v3324 = vpop.xlane.xlu0 %3323
      %v3325 = vsel %vm2766, %v3140, 0.0
      %3326 = vadd.xlane.f32.xlu0 %v3325
      %v3327 = vpop.xlane.xlu0 %3326
      %v3328 = vsel %vm2766, %v3142, 0.0
      %3329 = vadd.xlane.f32.xlu0 %v3328
      %v3330 = vpop.xlane.xlu0 %3329
      %v3331 = vsel %vm2766, %v3144, 0.0
      %3332 = vadd.xlane.f32.xlu0 %v3331
      %v3333 = vpop.xlane.xlu0 %3332
      %v3334 = vsel %vm2766, %v3146, 0.0
      %3335 = vadd.xlane.f32.xlu0 %v3334
      %v3336 = vpop.xlane.xlu0 %3335
      %v3337 = vsel %vm2766, %v3148, 0.0
      %3338 = vadd.xlane.f32.xlu0 %v3337
      %v3339 = vpop.xlane.xlu0 %3338
      %v3340 = vsel %vm2766, %v3150, 0.0
      %3341 = vadd.xlane.f32.xlu0 %v3340
      %v3342 = vpop.xlane.xlu0 %3341
      %v3343 = vrcp.pop %v3153
      %v3344 = vrcp.pop %v3156
      %v3345 = vrcp.pop %v3159
      %v3346 = vrcp.pop %v3162
      %v3347 = vrcp.pop %v3165
      %v3348 = vrcp.pop %v3168
      %v3349 = vrcp.pop %v3171
      %v3350 = vrcp.pop %v3174
      %v3351 = vrcp.pop %v3177
      %v3352 = vrcp.pop %v3180
      %v3353 = vrcp.pop %v3183
      %v3354 = vrcp.pop %v3186
      %v3355 = vrcp.pop %v3189
      %v3356 = vrcp.pop %v3192
      %v3357 = vrcp.pop %v3195
      %v3358 = vrcp.pop %v3198
      %v3359 = vrcp.pop %v3201
      %v3360 = vrcp.pop %v3204
      %v3361 = vrcp.pop %v3207
      %v3362 = vrcp.pop %v3210
      %v3363 = vrcp.pop %v3213
      %v3364 = vrcp.pop %v3216
      %v3365 = vrcp.pop %v3219
      %v3366 = vrcp.pop %v3222
      %v3367 = vrcp.pop %v3225
      %v3368 = vrcp.pop %v3228
      %v3369 = vrcp.pop %v3231
      %v3370 = vrcp.pop %v3234
      %v3371 = vrcp.pop %v3237
      %v3372 = vrcp.pop %v3240
      %v3373 = vrcp.pop %v3243
      %v3374 = vrcp.pop %v3246
      %v3375 = vrcp.pop %v3249
      %v3376 = vrcp.pop %v3252
      %v3377 = vrcp.pop %v3255
      %v3378 = vrcp.pop %v3258
      %v3379 = vrcp.pop %v3261
      %v3380 = vrcp.pop %v3264
      %v3381 = vrcp.pop %v3267
      %v3382 = vrcp.pop %v3270
      %v3383 = vrcp.pop %v3273
      %v3384 = vrcp.pop %v3276
      %v3385 = vrcp.pop %v3279
      %v3386 = vrcp.pop %v3282
      %v3387 = vrcp.pop %v3285
      %v3388 = vrcp.pop %v3288
      %v3389 = vrcp.pop %v3291
      %v3390 = vrcp.pop %v3294
      %v3391 = vrcp.pop %v3297
      %v3392 = vrcp.pop %v3300
      %v3393 = vrcp.pop %v3303
      %v3394 = vrcp.pop %v3306
      %v3395 = vrcp.pop %v3309
      %v3396 = vrcp.pop %v3312
      %v3397 = vrcp.pop %v3315
      %v3398 = vrcp.pop %v3318
      %v3399 = vrcp.pop %v3321
      %v3400 = vrcp.pop %v3324
      %v3401 = vrcp.pop %v3327
      %v3402 = vrcp.pop %v3330
      %v3403 = vrcp.pop %v3333
      %v3404 = vrcp.pop %v3336
      %v3405 = vrcp.pop %v3339
      %v3406 = vrcp.pop %v3342
      %v3407 = vmul.f32 %v3024, %v3343
      %v3408 = vmul.f32 %v3026, %v3344
      %v3409 = vmul.f32 %v3028, %v3345
      %v3410 = vmul.f32 %v3030, %v3346
      %v3411 = vmul.f32 %v3032, %v3347
      %v3412 = vmul.f32 %v3034, %v3348
      %v3413 = vmul.f32 %v3036, %v3349
      %v3414 = vmul.f32 %v3038, %v3350
      %v3415 = vmul.f32 %v3040, %v3351
      %v3416 = vmul.f32 %v3042, %v3352
      %v3417 = vmul.f32 %v3044, %v3353
      %v3418 = vmul.f32 %v3046, %v3354
      %v3419 = vmul.f32 %v3048, %v3355
      %v3420 = vmul.f32 %v3050, %v3356
      %v3421 = vmul.f32 %v3052, %v3357
      %v3422 = vmul.f32 %v3054, %v3358
      %v3423 = vmul.f32 %v3056, %v3359
      %v3424 = vmul.f32 %v3058, %v3360
      %v3425 = vmul.f32 %v3060, %v3361
      %v3426 = vmul.f32 %v3062, %v3362
      %v3427 = vmul.f32 %v3064, %v3363
      %v3428 = vmul.f32 %v3066, %v3364
      %v3429 = vmul.f32 %v3068, %v3365
      %v3430 = vmul.f32 %v3070, %v3366
      %v3431 = vmul.f32 %v3072, %v3367
      %v3432 = vmul.f32 %v3074, %v3368
      %v3433 = vmul.f32 %v3076, %v3369
      %v3434 = vmul.f32 %v3078, %v3370
      %v3435 = vmul.f32 %v3080, %v3371
      %v3436 = vmul.f32 %v3082, %v3372
      %v3437 = vmul.f32 %v3084, %v3373
      %v3438 = vmul.f32 %v3086, %v3374
      %v3439 = vmul.f32 %v3088, %v3375
      %v3440 = vmul.f32 %v3090, %v3376
      %v3441 = vmul.f32 %v3092, %v3377
      %v3442 = vmul.f32 %v3094, %v3378
      %v3443 = vmul.f32 %v3096, %v3379
      %v3444 = vmul.f32 %v3098, %v3380
      %v3445 = vmul.f32 %v3100, %v3381
      %v3446 = vmul.f32 %v3102, %v3382
      %v3447 = vmul.f32 %v3104, %v3383
      %v3448 = vmul.f32 %v3106, %v3384
      %v3449 = vmul.f32 %v3108, %v3385
      %v3450 = vmul.f32 %v3110, %v3386
      %v3451 = vmul.f32 %v3112, %v3387
      %v3452 = vmul.f32 %v3114, %v3388
      %v3453 = vmul.f32 %v3116, %v3389
      %v3454 = vmul.f32 %v3118, %v3390
      %v3455 = vmul.f32 %v3120, %v3391
      %v3456 = vmul.f32 %v3122, %v3392
      %v3457 = vmul.f32 %v3124, %v3393
      %v3458 = vmul.f32 %v3126, %v3394
      %v3459 = vmul.f32 %v3128, %v3395
      %v3460 = vmul.f32 %v3130, %v3396
      %v3461 = vmul.f32 %v3132, %v3397
      %v3462 = vmul.f32 %v3134, %v3398
      %v3463 = vmul.f32 %v3136, %v3399
      %v3464 = vmul.f32 %v3138, %v3400
      %v3465 = vmul.f32 %v3140, %v3401
      %v3466 = vmul.f32 %v3142, %v3402
      %v3467 = vmul.f32 %v3144, %v3403
      %v3468 = vmul.f32 %v3146, %v3404
      %v3469 = vmul.f32 %v3148, %v3405
      %v3470 = vmul.f32 %v3150, %v3406
      %v3471 = vpack.c.bf16 %v3407, %v3407
      %v3472 = vpack.c.bf16 %v3408, %v3408
      %v3473 = vpack.c.bf16 %v3409, %v3409
      %v3474 = vpack.c.bf16 %v3410, %v3410
      %v3475 = vpack.c.bf16 %v3411, %v3411
      %v3476 = vpack.c.bf16 %v3412, %v3412
      %v3477 = vpack.c.bf16 %v3413, %v3413
      %v3478 = vpack.c.bf16 %v3414, %v3414
      %v3479 = vpack.c.bf16 %v3415, %v3415
      %v3480 = vpack.c.bf16 %v3416, %v3416
      %v3481 = vpack.c.bf16 %v3417, %v3417
      %v3482 = vpack.c.bf16 %v3418, %v3418
      %v3483 = vpack.c.bf16 %v3419, %v3419
      %v3484 = vpack.c.bf16 %v3420, %v3420
      %v3485 = vpack.c.bf16 %v3421, %v3421
      %v3486 = vpack.c.bf16 %v3422, %v3422
      %v3487 = vpack.c.bf16 %v3423, %v3423
      %v3488 = vpack.c.bf16 %v3424, %v3424
      %v3489 = vpack.c.bf16 %v3425, %v3425
      %v3490 = vpack.c.bf16 %v3426, %v3426
      %v3491 = vpack.c.bf16 %v3427, %v3427
      %v3492 = vpack.c.bf16 %v3428, %v3428
      %v3493 = vpack.c.bf16 %v3429, %v3429
      %v3494 = vpack.c.bf16 %v3430, %v3430
      %v3495 = vpack.c.bf16 %v3431, %v3431
      %v3496 = vpack.c.bf16 %v3432, %v3432
      %v3497 = vpack.c.bf16 %v3433, %v3433
      %v3498 = vpack.c.bf16 %v3434, %v3434
      %v3499 = vpack.c.bf16 %v3435, %v3435
      %v3500 = vpack.c.bf16 %v3436, %v3436
      %v3501 = vpack.c.bf16 %v3437, %v3437
      %v3502 = vpack.c.bf16 %v3438, %v3438
      %v3503 = vpack.c.bf16 %v3439, %v3439
      %v3504 = vpack.c.bf16 %v3440, %v3440
      %v3505 = vpack.c.bf16 %v3441, %v3441
      %v3506 = vpack.c.bf16 %v3442, %v3442
      %v3507 = vpack.c.bf16 %v3443, %v3443
      %v3508 = vpack.c.bf16 %v3444, %v3444
      %v3509 = vpack.c.bf16 %v3445, %v3445
      %v3510 = vpack.c.bf16 %v3446, %v3446
      %v3511 = vpack.c.bf16 %v3447, %v3447
      %v3512 = vpack.c.bf16 %v3448, %v3448
      %v3513 = vpack.c.bf16 %v3449, %v3449
      %v3514 = vpack.c.bf16 %v3450, %v3450
      %v3515 = vpack.c.bf16 %v3451, %v3451
      %v3516 = vpack.c.bf16 %v3452, %v3452
      %v3517 = vpack.c.bf16 %v3453, %v3453
      %v3518 = vpack.c.bf16 %v3454, %v3454
      %v3519 = vpack.c.bf16 %v3455, %v3455
      %v3520 = vpack.c.bf16 %v3456, %v3456
      %v3521 = vpack.c.bf16 %v3457, %v3457
      %v3522 = vpack.c.bf16 %v3458, %v3458
      %v3523 = vpack.c.bf16 %v3459, %v3459
      %v3524 = vpack.c.bf16 %v3460, %v3460
      %v3525 = vpack.c.bf16 %v3461, %v3461
      %v3526 = vpack.c.bf16 %v3462, %v3462
      %v3527 = vpack.c.bf16 %v3463, %v3463
      %v3528 = vpack.c.bf16 %v3464, %v3464
      %v3529 = vpack.c.bf16 %v3465, %v3465
      %v3530 = vpack.c.bf16 %v3466, %v3466
      %v3531 = vpack.c.bf16 %v3467, %v3467
      %v3532 = vpack.c.bf16 %v3468, %v3468
      %v3533 = vpack.c.bf16 %v3469, %v3469
      %v3534 = vpack.c.bf16 %v3470, %v3470
      %v3543 = vunpack.c.l.b16 %v3471
      %v3544 = vunpack.c.l.b16 %v3472
      %v3545 = vunpack.c.l.b16 %v3473
      %v3546 = vunpack.c.l.b16 %v3474
      %v3547 = vunpack.c.l.b16 %v3475
      %v3548 = vunpack.c.l.b16 %v3476
      %v3549 = vunpack.c.l.b16 %v3477
      %v3550 = vunpack.c.l.b16 %v3478
      %v3551 = vpack.c.b16 %v3544, %v3543
      %v3552 = vpack.c.b16 %v3546, %v3545
      %v3553 = vpack.c.b16 %v3548, %v3547
      %v3554 = vpack.c.b16 %v3550, %v3549
      %3555 = vrot.lane.b32.xlu0 %v2134, 64
      %v3556 = vpop.permute.xlu0 %3555
      %3557 = vrot.lane.b32.xlu0 %v2135, 64
      %v3558 = vpop.permute.xlu0 %3557
      %3559 = vrot.lane.b32.xlu0 %v2136, 64
      %v3560 = vpop.permute.xlu0 %3559
      %3561 = vrot.lane.b32.xlu0 %v2137, 64
      %v3562 = vpop.permute.xlu0 %3561
      %v3568 = vsel %vm2766, %v3551, 0
      %v3571 = vsel %vm2766, %v3552, 0
      %v3574 = vsel %vm2766, %v3553, 0
      %v3577 = vsel %vm2766, %v3554, 0
      %3579 = vmatpush.bf16.msra.mxu0 0
      %3580 = vmatpush.bf16.msra.mxu0 0
      %3581 = vmatpush.bf16.msra.mxu0 0
      %3582 = vmatpush.bf16.msra.mxu0 0
      %3583 = vmatpush.bf16.msra.mxu0 %v3562
      %3584 = vmatpush.bf16.msra.mxu0 %v3560
      %3585 = vmatpush.bf16.msra.mxu0 %v3558
      %3586 = vmatpush.bf16.msra.mxu0 %v3556
      %3587 = vmatmul.bf16.gmra.mxu0 %v3568
      %v3588 = vpop.f32.mrf.mxu0
      %v3589 = vadd.f32 0.0, %v3588
      %v3590 = vpop.f32.mrf.mxu0
      %v3591 = vadd.f32 0.0, %v3590
      %3592 = vmatmul.bf16.gmra.mxu0 %v3571
      %v3593 = vpop.f32.mrf.mxu0
      %v3594 = vadd.f32 0.0, %v3593
      %v3595 = vpop.f32.mrf.mxu0
      %v3596 = vadd.f32 0.0, %v3595
      %3597 = vmatmul.bf16.gmra.mxu0 %v3574
      %v3598 = vpop.f32.mrf.mxu0
      %v3599 = vadd.f32 0.0, %v3598
      %v3600 = vpop.f32.mrf.mxu0
      %v3601 = vadd.f32 0.0, %v3600
      %3602 = vmatmul.bf16.gmra.mxu0 %v3577
      %v3603 = vpop.f32.mrf.mxu0
      %v3604 = vadd.f32 0.0, %v3603
      %v3605 = vpop.f32.mrf.mxu0
      %v3606 = vadd.f32 0.0, %v3605
      %3607 = vdwg.mxu0
      %v3616 = vunpack.c.l.b16 %v3479
      %v3617 = vunpack.c.l.b16 %v3480
      %v3618 = vunpack.c.l.b16 %v3481
      %v3619 = vunpack.c.l.b16 %v3482
      %v3620 = vunpack.c.l.b16 %v3483
      %v3621 = vunpack.c.l.b16 %v3484
      %v3622 = vunpack.c.l.b16 %v3485
      %v3623 = vunpack.c.l.b16 %v3486
      %v3624 = vpack.c.b16 %v3617, %v3616
      %v3625 = vpack.c.b16 %v3619, %v3618
      %v3626 = vpack.c.b16 %v3621, %v3620
      %v3627 = vpack.c.b16 %v3623, %v3622
      %3628 = vrot.lane.b32.xlu0 %v2215, 64
      %v3629 = vpop.permute.xlu0 %3628
      %3630 = vrot.lane.b32.xlu0 %v2216, 64
      %v3631 = vpop.permute.xlu0 %3630
      %3632 = vrot.lane.b32.xlu0 %v2217, 64
      %v3633 = vpop.permute.xlu0 %3632
      %3634 = vrot.lane.b32.xlu0 %v2218, 64
      %v3635 = vpop.permute.xlu0 %3634
      %v3641 = vsel %vm2766, %v3624, 0
      %v3644 = vsel %vm2766, %v3625, 0
      %v3647 = vsel %vm2766, %v3626, 0
      %v3650 = vsel %vm2766, %v3627, 0
      %3652 = vmatpush.bf16.msra.mxu0 0
      %3653 = vmatpush.bf16.msra.mxu0 0
      %3654 = vmatpush.bf16.msra.mxu0 0
      %3655 = vmatpush.bf16.msra.mxu0 0
      %3656 = vmatpush.bf16.msra.mxu0 %v3635
      %3657 = vmatpush.bf16.msra.mxu0 %v3633
      %3658 = vmatpush.bf16.msra.mxu0 %v3631
      %3659 = vmatpush.bf16.msra.mxu0 %v3629
      %3660 = vmatmul.bf16.gmra.mxu0 %v3641
      %v3661 = vpop.f32.mrf.mxu0
      %v3662 = vadd.f32 0.0, %v3661
      %v3663 = vpop.f32.mrf.mxu0
      %v3664 = vadd.f32 0.0, %v3663
      %3665 = vmatmul.bf16.gmra.mxu0 %v3644
      %v3666 = vpop.f32.mrf.mxu0
      %v3667 = vadd.f32 0.0, %v3666
      %v3668 = vpop.f32.mrf.mxu0
      %v3669 = vadd.f32 0.0, %v3668
      %3670 = vmatmul.bf16.gmra.mxu0 %v3647
      %v3671 = vpop.f32.mrf.mxu0
      %v3672 = vadd.f32 0.0, %v3671
      %v3673 = vpop.f32.mrf.mxu0
      %v3674 = vadd.f32 0.0, %v3673
      %3675 = vmatmul.bf16.gmra.mxu0 %v3650
      %v3676 = vpop.f32.mrf.mxu0
      %v3677 = vadd.f32 0.0, %v3676
      %v3678 = vpop.f32.mrf.mxu0
      %v3679 = vadd.f32 0.0, %v3678
      %3680 = vdwg.mxu0
      %v3689 = vunpack.c.l.b16 %v3487
      %v3690 = vunpack.c.l.b16 %v3488
      %v3691 = vunpack.c.l.b16 %v3489
      %v3692 = vunpack.c.l.b16 %v3490
      %v3693 = vunpack.c.l.b16 %v3491
      %v3694 = vunpack.c.l.b16 %v3492
      %v3695 = vunpack.c.l.b16 %v3493
      %v3696 = vunpack.c.l.b16 %v3494
      %v3697 = vpack.c.b16 %v3690, %v3689
      %v3698 = vpack.c.b16 %v3692, %v3691
      %v3699 = vpack.c.b16 %v3694, %v3693
      %v3700 = vpack.c.b16 %v3696, %v3695
      %3701 = vrot.lane.b32.xlu0 %v2296, 64
      %v3702 = vpop.permute.xlu0 %3701
      %3703 = vrot.lane.b32.xlu0 %v2297, 64
      %v3704 = vpop.permute.xlu0 %3703
      %3705 = vrot.lane.b32.xlu0 %v2298, 64
      %v3706 = vpop.permute.xlu0 %3705
      %3707 = vrot.lane.b32.xlu0 %v2299, 64
      %v3708 = vpop.permute.xlu0 %3707
      %v3714 = vsel %vm2766, %v3697, 0
      %v3717 = vsel %vm2766, %v3698, 0
      %v3720 = vsel %vm2766, %v3699, 0
      %v3723 = vsel %vm2766, %v3700, 0
      %3725 = vmatpush.bf16.msra.mxu0 0
      %3726 = vmatpush.bf16.msra.mxu0 0
      %3727 = vmatpush.bf16.msra.mxu0 0
      %3728 = vmatpush.bf16.msra.mxu0 0
      %3729 = vmatpush.bf16.msra.mxu0 %v3708
      %3730 = vmatpush.bf16.msra.mxu0 %v3706
      %3731 = vmatpush.bf16.msra.mxu0 %v3704
      %3732 = vmatpush.bf16.msra.mxu0 %v3702
      %3733 = vmatmul.bf16.gmra.mxu0 %v3714
      %v3734 = vpop.f32.mrf.mxu0
      %v3735 = vadd.f32 0.0, %v3734
      %v3736 = vpop.f32.mrf.mxu0
      %v3737 = vadd.f32 0.0, %v3736
      %3738 = vmatmul.bf16.gmra.mxu0 %v3717
      %v3739 = vpop.f32.mrf.mxu0
      %v3740 = vadd.f32 0.0, %v3739
      %v3741 = vpop.f32.mrf.mxu0
      %v3742 = vadd.f32 0.0, %v3741
      %3743 = vmatmul.bf16.gmra.mxu0 %v3720
      %v3744 = vpop.f32.mrf.mxu0
      %v3745 = vadd.f32 0.0, %v3744
      %v3746 = vpop.f32.mrf.mxu0
      %v3747 = vadd.f32 0.0, %v3746
      %3748 = vmatmul.bf16.gmra.mxu0 %v3723
      %v3749 = vpop.f32.mrf.mxu0
      %v3750 = vadd.f32 0.0, %v3749
      %v3751 = vpop.f32.mrf.mxu0
      %v3752 = vadd.f32 0.0, %v3751
      %3753 = vdwg.mxu0
      %v3762 = vunpack.c.l.b16 %v3495
      %v3763 = vunpack.c.l.b16 %v3496
      %v3764 = vunpack.c.l.b16 %v3497
      %v3765 = vunpack.c.l.b16 %v3498
      %v3766 = vunpack.c.l.b16 %v3499
      %v3767 = vunpack.c.l.b16 %v3500
      %v3768 = vunpack.c.l.b16 %v3501
      %v3769 = vunpack.c.l.b16 %v3502
      %v3770 = vpack.c.b16 %v3763, %v3762
      %v3771 = vpack.c.b16 %v3765, %v3764
      %v3772 = vpack.c.b16 %v3767, %v3766
      %v3773 = vpack.c.b16 %v3769, %v3768
      %3774 = vrot.lane.b32.xlu0 %v2377, 64
      %v3775 = vpop.permute.xlu0 %3774
      %3776 = vrot.lane.b32.xlu0 %v2378, 64
      %v3777 = vpop.permute.xlu0 %3776
      %3778 = vrot.lane.b32.xlu0 %v2379, 64
      %v3779 = vpop.permute.xlu0 %3778
      %3780 = vrot.lane.b32.xlu0 %v2380, 64
      %v3781 = vpop.permute.xlu0 %3780
      %v3787 = vsel %vm2766, %v3770, 0
      %v3790 = vsel %vm2766, %v3771, 0
      %v3793 = vsel %vm2766, %v3772, 0
      %v3796 = vsel %vm2766, %v3773, 0
      %3798 = vmatpush.bf16.msra.mxu0 0
      %3799 = vmatpush.bf16.msra.mxu0 0
      %3800 = vmatpush.bf16.msra.mxu0 0
      %3801 = vmatpush.bf16.msra.mxu0 0
      %3802 = vmatpush.bf16.msra.mxu0 %v3781
      %3803 = vmatpush.bf16.msra.mxu0 %v3779
      %3804 = vmatpush.bf16.msra.mxu0 %v3777
      %3805 = vmatpush.bf16.msra.mxu0 %v3775
      %3806 = vmatmul.bf16.gmra.mxu0 %v3787
      %v3807 = vpop.f32.mrf.mxu0
      %v3808 = vadd.f32 0.0, %v3807
      %v3809 = vpop.f32.mrf.mxu0
      %v3810 = vadd.f32 0.0, %v3809
      %3811 = vmatmul.bf16.gmra.mxu0 %v3790
      %v3812 = vpop.f32.mrf.mxu0
      %v3813 = vadd.f32 0.0, %v3812
      %v3814 = vpop.f32.mrf.mxu0
      %v3815 = vadd.f32 0.0, %v3814
      %3816 = vmatmul.bf16.gmra.mxu0 %v3793
      %v3817 = vpop.f32.mrf.mxu0
      %v3818 = vadd.f32 0.0, %v3817
      %v3819 = vpop.f32.mrf.mxu0
      %v3820 = vadd.f32 0.0, %v3819
      %3821 = vmatmul.bf16.gmra.mxu0 %v3796
      %v3822 = vpop.f32.mrf.mxu0
      %v3823 = vadd.f32 0.0, %v3822
      %v3824 = vpop.f32.mrf.mxu0
      %v3825 = vadd.f32 0.0, %v3824
      %3826 = vdwg.mxu0
      %v3835 = vunpack.c.l.b16 %v3503
      %v3836 = vunpack.c.l.b16 %v3504
      %v3837 = vunpack.c.l.b16 %v3505
      %v3838 = vunpack.c.l.b16 %v3506
      %v3839 = vunpack.c.l.b16 %v3507
      %v3840 = vunpack.c.l.b16 %v3508
      %v3841 = vunpack.c.l.b16 %v3509
      %v3842 = vunpack.c.l.b16 %v3510
      %v3843 = vpack.c.b16 %v3836, %v3835
      %v3844 = vpack.c.b16 %v3838, %v3837
      %v3845 = vpack.c.b16 %v3840, %v3839
      %v3846 = vpack.c.b16 %v3842, %v3841
      %3847 = vrot.lane.b32.xlu0 %v2458, 64
      %v3848 = vpop.permute.xlu0 %3847
      %3849 = vrot.lane.b32.xlu0 %v2459, 64
      %v3850 = vpop.permute.xlu0 %3849
      %3851 = vrot.lane.b32.xlu0 %v2460, 64
      %v3852 = vpop.permute.xlu0 %3851
      %3853 = vrot.lane.b32.xlu0 %v2461, 64
      %v3854 = vpop.permute.xlu0 %3853
      %v3860 = vsel %vm2766, %v3843, 0
      %v3863 = vsel %vm2766, %v3844, 0
      %v3866 = vsel %vm2766, %v3845, 0
      %v3869 = vsel %vm2766, %v3846, 0
      %3871 = vmatpush.bf16.msra.mxu0 0
      %3872 = vmatpush.bf16.msra.mxu0 0
      %3873 = vmatpush.bf16.msra.mxu0 0
      %3874 = vmatpush.bf16.msra.mxu0 0
      %3875 = vmatpush.bf16.msra.mxu0 %v3854
      %3876 = vmatpush.bf16.msra.mxu0 %v3852
      %3877 = vmatpush.bf16.msra.mxu0 %v3850
      %3878 = vmatpush.bf16.msra.mxu0 %v3848
      %3879 = vmatmul.bf16.gmra.mxu0 %v3860
      %v3880 = vpop.f32.mrf.mxu0
      %v3881 = vadd.f32 0.0, %v3880
      %v3882 = vpop.f32.mrf.mxu0
      %v3883 = vadd.f32 0.0, %v3882
      %3884 = vmatmul.bf16.gmra.mxu0 %v3863
      %v3885 = vpop.f32.mrf.mxu0
      %v3886 = vadd.f32 0.0, %v3885
      %v3887 = vpop.f32.mrf.mxu0
      %v3888 = vadd.f32 0.0, %v3887
      %3889 = vmatmul.bf16.gmra.mxu0 %v3866
      %v3890 = vpop.f32.mrf.mxu0
      %v3891 = vadd.f32 0.0, %v3890
      %v3892 = vpop.f32.mrf.mxu0
      %v3893 = vadd.f32 0.0, %v3892
      %3894 = vmatmul.bf16.gmra.mxu0 %v3869
      %v3895 = vpop.f32.mrf.mxu0
      %v3896 = vadd.f32 0.0, %v3895
      %v3897 = vpop.f32.mrf.mxu0
      %v3898 = vadd.f32 0.0, %v3897
      %3899 = vdwg.mxu0
      %v3908 = vunpack.c.l.b16 %v3511
      %v3909 = vunpack.c.l.b16 %v3512
      %v3910 = vunpack.c.l.b16 %v3513
      %v3911 = vunpack.c.l.b16 %v3514
      %v3912 = vunpack.c.l.b16 %v3515
      %v3913 = vunpack.c.l.b16 %v3516
      %v3914 = vunpack.c.l.b16 %v3517
      %v3915 = vunpack.c.l.b16 %v3518
      %v3916 = vpack.c.b16 %v3909, %v3908
      %v3917 = vpack.c.b16 %v3911, %v3910
      %v3918 = vpack.c.b16 %v3913, %v3912
      %v3919 = vpack.c.b16 %v3915, %v3914
      %3920 = vrot.lane.b32.xlu0 %v2539, 64
      %v3921 = vpop.permute.xlu0 %3920
      %3922 = vrot.lane.b32.xlu0 %v2540, 64
      %v3923 = vpop.permute.xlu0 %3922
      %3924 = vrot.lane.b32.xlu0 %v2541, 64
      %v3925 = vpop.permute.xlu0 %3924
      %3926 = vrot.lane.b32.xlu0 %v2542, 64
      %v3927 = vpop.permute.xlu0 %3926
      %v3933 = vsel %vm2766, %v3916, 0
      %v3936 = vsel %vm2766, %v3917, 0
      %v3939 = vsel %vm2766, %v3918, 0
      %v3942 = vsel %vm2766, %v3919, 0
      %3944 = vmatpush.bf16.msra.mxu0 0
      %3945 = vmatpush.bf16.msra.mxu0 0
      %3946 = vmatpush.bf16.msra.mxu0 0
      %3947 = vmatpush.bf16.msra.mxu0 0
      %3948 = vmatpush.bf16.msra.mxu0 %v3927
      %3949 = vmatpush.bf16.msra.mxu0 %v3925
      %3950 = vmatpush.bf16.msra.mxu0 %v3923
      %3951 = vmatpush.bf16.msra.mxu0 %v3921
      %3952 = vmatmul.bf16.gmra.mxu0 %v3933
      %v3953 = vpop.f32.mrf.mxu0
      %v3954 = vadd.f32 0.0, %v3953
      %v3955 = vpop.f32.mrf.mxu0
      %v3956 = vadd.f32 0.0, %v3955
      %3957 = vmatmul.bf16.gmra.mxu0 %v3936
      %v3958 = vpop.f32.mrf.mxu0
      %v3959 = vadd.f32 0.0, %v3958
      %v3960 = vpop.f32.mrf.mxu0
      %v3961 = vadd.f32 0.0, %v3960
      %3962 = vmatmul.bf16.gmra.mxu0 %v3939
      %v3963 = vpop.f32.mrf.mxu0
      %v3964 = vadd.f32 0.0, %v3963
      %v3965 = vpop.f32.mrf.mxu0
      %v3966 = vadd.f32 0.0, %v3965
      %3967 = vmatmul.bf16.gmra.mxu0 %v3942
      %v3968 = vpop.f32.mrf.mxu0
      %v3969 = vadd.f32 0.0, %v3968
      %v3970 = vpop.f32.mrf.mxu0
      %v3971 = vadd.f32 0.0, %v3970
      %3972 = vdwg.mxu0
      %v3981 = vunpack.c.l.b16 %v3519
      %v3982 = vunpack.c.l.b16 %v3520
      %v3983 = vunpack.c.l.b16 %v3521
      %v3984 = vunpack.c.l.b16 %v3522
      %v3985 = vunpack.c.l.b16 %v3523
      %v3986 = vunpack.c.l.b16 %v3524
      %v3987 = vunpack.c.l.b16 %v3525
      %v3988 = vunpack.c.l.b16 %v3526
      %v3989 = vpack.c.b16 %v3982, %v3981
      %v3990 = vpack.c.b16 %v3984, %v3983
      %v3991 = vpack.c.b16 %v3986, %v3985
      %v3992 = vpack.c.b16 %v3988, %v3987
      %3993 = vrot.lane.b32.xlu0 %v2620, 64
      %v3994 = vpop.permute.xlu0 %3993
      %3995 = vrot.lane.b32.xlu0 %v2621, 64
      %v3996 = vpop.permute.xlu0 %3995
      %3997 = vrot.lane.b32.xlu0 %v2622, 64
      %v3998 = vpop.permute.xlu0 %3997
      %3999 = vrot.lane.b32.xlu0 %v2623, 64
      %v4000 = vpop.permute.xlu0 %3999
      %v4006 = vsel %vm2766, %v3989, 0
      %v4009 = vsel %vm2766, %v3990, 0
      %v4012 = vsel %vm2766, %v3991, 0
      %v4015 = vsel %vm2766, %v3992, 0
      %4017 = vmatpush.bf16.msra.mxu0 0
      %4018 = vmatpush.bf16.msra.mxu0 0
      %4019 = vmatpush.bf16.msra.mxu0 0
      %4020 = vmatpush.bf16.msra.mxu0 0
      %4021 = vmatpush.bf16.msra.mxu0 %v4000
      %4022 = vmatpush.bf16.msra.mxu0 %v3998
      %4023 = vmatpush.bf16.msra.mxu0 %v3996
      %4024 = vmatpush.bf16.msra.mxu0 %v3994
      %4025 = vmatmul.bf16.gmra.mxu0 %v4006
      %v4026 = vpop.f32.mrf.mxu0
      %v4027 = vadd.f32 0.0, %v4026
      %v4028 = vpop.f32.mrf.mxu0
      %v4029 = vadd.f32 0.0, %v4028
      %4030 = vmatmul.bf16.gmra.mxu0 %v4009
      %v4031 = vpop.f32.mrf.mxu0
      %v4032 = vadd.f32 0.0, %v4031
      %v4033 = vpop.f32.mrf.mxu0
      %v4034 = vadd.f32 0.0, %v4033
      %4035 = vmatmul.bf16.gmra.mxu0 %v4012
      %v4036 = vpop.f32.mrf.mxu0
      %v4037 = vadd.f32 0.0, %v4036
      %v4038 = vpop.f32.mrf.mxu0
      %v4039 = vadd.f32 0.0, %v4038
      %4040 = vmatmul.bf16.gmra.mxu0 %v4015
      %v4041 = vpop.f32.mrf.mxu0
      %v4042 = vadd.f32 0.0, %v4041
      %v4043 = vpop.f32.mrf.mxu0
      %v4044 = vadd.f32 0.0, %v4043
      %4045 = vdwg.mxu0
      %v4054 = vunpack.c.l.b16 %v3527
      %v4055 = vunpack.c.l.b16 %v3528
      %v4056 = vunpack.c.l.b16 %v3529
      %v4057 = vunpack.c.l.b16 %v3530
      %v4058 = vunpack.c.l.b16 %v3531
      %v4059 = vunpack.c.l.b16 %v3532
      %v4060 = vunpack.c.l.b16 %v3533
      %v4061 = vunpack.c.l.b16 %v3534
      %v4062 = vpack.c.b16 %v4055, %v4054
      %v4063 = vpack.c.b16 %v4057, %v4056
      %v4064 = vpack.c.b16 %v4059, %v4058
      %v4065 = vpack.c.b16 %v4061, %v4060
      %4066 = vrot.lane.b32.xlu0 %v2701, 64
      %v4067 = vpop.permute.xlu0 %4066
      %4068 = vrot.lane.b32.xlu0 %v2702, 64
      %v4069 = vpop.permute.xlu0 %4068
      %4070 = vrot.lane.b32.xlu0 %v2703, 64
      %v4071 = vpop.permute.xlu0 %4070
      %4072 = vrot.lane.b32.xlu0 %v2704, 64
      %v4073 = vpop.permute.xlu0 %4072
      %v4079 = vsel %vm2766, %v4062, 0
      %v4082 = vsel %vm2766, %v4063, 0
      %v4085 = vsel %vm2766, %v4064, 0
      %v4088 = vsel %vm2766, %v4065, 0
      %4090 = vmatpush.bf16.msra.mxu0 0
      %4091 = vmatpush.bf16.msra.mxu0 0
      %4092 = vmatpush.bf16.msra.mxu0 0
      %4093 = vmatpush.bf16.msra.mxu0 0
      %4094 = vmatpush.bf16.msra.mxu0 %v4073
      %4095 = vmatpush.bf16.msra.mxu0 %v4071
      %4096 = vmatpush.bf16.msra.mxu0 %v4069
      %4097 = vmatpush.bf16.msra.mxu0 %v4067
      %4098 = vmatmul.bf16.gmra.mxu0 %v4079
      %v4099 = vpop.f32.mrf.mxu0
      %v4100 = vadd.f32 0.0, %v4099
      %v4101 = vpop.f32.mrf.mxu0
      %v4102 = vadd.f32 0.0, %v4101
      %4103 = vmatmul.bf16.gmra.mxu0 %v4082
      %v4104 = vpop.f32.mrf.mxu0
      %v4105 = vadd.f32 0.0, %v4104
      %v4106 = vpop.f32.mrf.mxu0
      %v4107 = vadd.f32 0.0, %v4106
      %4108 = vmatmul.bf16.gmra.mxu0 %v4085
      %v4109 = vpop.f32.mrf.mxu0
      %v4110 = vadd.f32 0.0, %v4109
      %v4111 = vpop.f32.mrf.mxu0
      %v4112 = vadd.f32 0.0, %v4111
      %4113 = vmatmul.bf16.gmra.mxu0 %v4088
      %v4114 = vpop.f32.mrf.mxu0
      %v4115 = vadd.f32 0.0, %v4114
      %v4116 = vpop.f32.mrf.mxu0
      %v4117 = vadd.f32 0.0, %v4116
      %4118 = vdwg.mxu0
      %v4119 = vpack.c.bf16 %v3591, %v3589
      %v4120 = vpack.c.bf16 %v3596, %v3594
      %v4121 = vpack.c.bf16 %v3601, %v3599
      %v4122 = vpack.c.bf16 %v3606, %v3604
      %v4123 = vpack.c.bf16 %v3664, %v3662
      %v4124 = vpack.c.bf16 %v3669, %v3667
      %v4125 = vpack.c.bf16 %v3674, %v3672
      %v4126 = vpack.c.bf16 %v3679, %v3677
      %v4127 = vpack.c.bf16 %v3737, %v3735
      %v4128 = vpack.c.bf16 %v3742, %v3740
      %v4129 = vpack.c.bf16 %v3747, %v3745
      %v4130 = vpack.c.bf16 %v3752, %v3750
      %v4131 = vpack.c.bf16 %v3810, %v3808
      %v4132 = vpack.c.bf16 %v3815, %v3813
      %v4133 = vpack.c.bf16 %v3820, %v3818
      %v4134 = vpack.c.bf16 %v3825, %v3823
      %v4135 = vpack.c.bf16 %v3883, %v3881
      %v4136 = vpack.c.bf16 %v3888, %v3886
      %v4137 = vpack.c.bf16 %v3893, %v3891
      %v4138 = vpack.c.bf16 %v3898, %v3896
      %v4139 = vpack.c.bf16 %v3956, %v3954
      %v4140 = vpack.c.bf16 %v3961, %v3959
      %v4141 = vpack.c.bf16 %v3966, %v3964
      %v4142 = vpack.c.bf16 %v3971, %v3969
      %v4143 = vpack.c.bf16 %v4029, %v4027
      %v4144 = vpack.c.bf16 %v4034, %v4032
      %v4145 = vpack.c.bf16 %v4039, %v4037
      %v4146 = vpack.c.bf16 %v4044, %v4042
      %v4147 = vpack.c.bf16 %v4102, %v4100
      %v4148 = vpack.c.bf16 %v4107, %v4105
      %v4149 = vpack.c.bf16 %v4112, %v4110
      %v4150 = vpack.c.bf16 %v4117, %v4115
      %v4151 = vld [vmem:[%s4] sm:$0xf]
      %v4152 = vld [vmem:[%s4 + $0x4] sm:$0xf]
      %v4153 = vld [vmem:[%s4 + $0x8] sm:$0xf]
      %v4154 = vld [vmem:[%s4 + $0xc] sm:$0xf]
      %v4155 = vld [vmem:[%s2] sm:$0x1]
      %v4157 = vperm.slane %v4155, 0
      %v4162 = vunpack.c.l.b16 %v4151
      %v4163 = vunpack.c.l.b16 %v4152
      %v4164 = vunpack.c.l.b16 %v4153
      %v4165 = vunpack.c.l.b16 %v4154
      %v4166 = vpack.c.b16 %v4163, %v4162
      %v4167 = vpack.c.b16 %v4165, %v4164
      %4170 = vrot.lane.b32.xlu0 %v4157, 32
      %v4171 = vpop.permute.xlu0 %4170
      %v4174 = vsel %vm952, %v4119, 0
      %v4177 = vsel %vm952, %v4120, 0
      %v4180 = vsel %vm952, %v4121, 0
      %v4183 = vsel %vm952, %v4122, 0
      %v4186 = vsel %vm952, %v4123, 0
      %v4189 = vsel %vm952, %v4124, 0
      %v4192 = vsel %vm952, %v4125, 0
      %v4195 = vsel %vm952, %v4126, 0
      %v4198 = vsel %vm952, %v4127, 0
      %v4201 = vsel %vm952, %v4128, 0
      %v4204 = vsel %vm952, %v4129, 0
      %v4207 = vsel %vm952, %v4130, 0
      %v4210 = vsel %vm952, %v4131, 0
      %v4213 = vsel %vm952, %v4132, 0
      %v4216 = vsel %vm952, %v4133, 0
      %v4219 = vsel %vm952, %v4134, 0
      %v4222 = vsel %vm952, %v4135, 0
      %v4225 = vsel %vm952, %v4136, 0
      %v4228 = vsel %vm952, %v4137, 0
      %v4231 = vsel %vm952, %v4138, 0
      %v4234 = vsel %vm952, %v4139, 0
      %v4237 = vsel %vm952, %v4140, 0
      %v4240 = vsel %vm952, %v4141, 0
      %v4243 = vsel %vm952, %v4142, 0
      %v4246 = vsel %vm952, %v4143, 0
      %v4249 = vsel %vm952, %v4144, 0
      %v4252 = vsel %vm952, %v4145, 0
      %v4255 = vsel %vm952, %v4146, 0
      %v4258 = vsel %vm952, %v4147, 0
      %v4261 = vsel %vm952, %v4148, 0
      %v4264 = vsel %vm952, %v4149, 0
      %v4267 = vsel %vm952, %v4150, 0
      %4269 = vmatpush.bf16.msra.mxu0 0
      %4270 = vmatpush.bf16.msra.mxu0 0
      %4271 = vmatpush.bf16.msra.mxu0 0
      %4272 = vmatpush.bf16.msra.mxu0 0
      %4273 = vmatpush.bf16.msra.mxu0 0
      %4274 = vmatpush.bf16.msra.mxu0 0
      %4275 = vmatpush.bf16.msra.mxu0 %v4167
      %4276 = vmatpush.bf16.msra.mxu0 %v4166
      %4277 = vmatmul.bf16.gmra.mxu0 %v4174
      %v4278 = vpop.f32.mrf.mxu0
      %v4279 = vadd.f32 %v4171, %v4278
      %v4280 = vpop.f32.mrf.mxu0
      %v4281 = vadd.f32 %v4171, %v4280
      %4282 = vmatmul.bf16.gmra.mxu0 %v4177
      %v4283 = vpop.f32.mrf.mxu0
      %v4284 = vadd.f32 %v4171, %v4283
      %v4285 = vpop.f32.mrf.mxu0
      %v4286 = vadd.f32 %v4171, %v4285
      %4287 = vmatmul.bf16.gmra.mxu0 %v4180
      %v4288 = vpop.f32.mrf.mxu0
      %v4289 = vadd.f32 %v4171, %v4288
      %v4290 = vpop.f32.mrf.mxu0
      %v4291 = vadd.f32 %v4171, %v4290
      %4292 = vmatmul.bf16.gmra.mxu0 %v4183
      %v4293 = vpop.f32.mrf.mxu0
      %v4294 = vadd.f32 %v4171, %v4293
      %v4295 = vpop.f32.mrf.mxu0
      %v4296 = vadd.f32 %v4171, %v4295
      %4297 = vmatmul.bf16.gmra.mxu0 %v4186
      %v4298 = vpop.f32.mrf.mxu0
      %v4299 = vadd.f32 %v4171, %v4298
      %v4300 = vpop.f32.mrf.mxu0
      %v4301 = vadd.f32 %v4171, %v4300
      %4302 = vmatmul.bf16.gmra.mxu0 %v4189
      %v4303 = vpop.f32.mrf.mxu0
      %v4304 = vadd.f32 %v4171, %v4303
      %v4305 = vpop.f32.mrf.mxu0
      %v4306 = vadd.f32 %v4171, %v4305
      %4307 = vmatmul.bf16.gmra.mxu0 %v4192
      %v4308 = vpop.f32.mrf.mxu0
      %v4309 = vadd.f32 %v4171, %v4308
      %v4310 = vpop.f32.mrf.mxu0
      %v4311 = vadd.f32 %v4171, %v4310
      %4312 = vmatmul.bf16.gmra.mxu0 %v4195
      %v4313 = vpop.f32.mrf.mxu0
      %v4314 = vadd.f32 %v4171, %v4313
      %v4315 = vpop.f32.mrf.mxu0
      %v4316 = vadd.f32 %v4171, %v4315
      %4317 = vmatmul.bf16.gmra.mxu0 %v4198
      %v4318 = vpop.f32.mrf.mxu0
      %v4319 = vadd.f32 %v4171, %v4318
      %v4320 = vpop.f32.mrf.mxu0
      %v4321 = vadd.f32 %v4171, %v4320
      %4322 = vmatmul.bf16.gmra.mxu0 %v4201
      %v4323 = vpop.f32.mrf.mxu0
      %v4324 = vadd.f32 %v4171, %v4323
      %v4325 = vpop.f32.mrf.mxu0
      %v4326 = vadd.f32 %v4171, %v4325
      %4327 = vmatmul.bf16.gmra.mxu0 %v4204
      %v4328 = vpop.f32.mrf.mxu0
      %v4329 = vadd.f32 %v4171, %v4328
      %v4330 = vpop.f32.mrf.mxu0
      %v4331 = vadd.f32 %v4171, %v4330
      %4332 = vmatmul.bf16.gmra.mxu0 %v4207
      %v4333 = vpop.f32.mrf.mxu0
      %v4334 = vadd.f32 %v4171, %v4333
      %v4335 = vpop.f32.mrf.mxu0
      %v4336 = vadd.f32 %v4171, %v4335
      %4337 = vmatmul.bf16.gmra.mxu0 %v4210
      %v4338 = vpop.f32.mrf.mxu0
      %v4339 = vadd.f32 %v4171, %v4338
      %v4340 = vpop.f32.mrf.mxu0
      %v4341 = vadd.f32 %v4171, %v4340
      %4342 = vmatmul.bf16.gmra.mxu0 %v4213
      %v4343 = vpop.f32.mrf.mxu0
      %v4344 = vadd.f32 %v4171, %v4343
      %v4345 = vpop.f32.mrf.mxu0
      %v4346 = vadd.f32 %v4171, %v4345
      %4347 = vmatmul.bf16.gmra.mxu0 %v4216
      %v4348 = vpop.f32.mrf.mxu0
      %v4349 = vadd.f32 %v4171, %v4348
      %v4350 = vpop.f32.mrf.mxu0
      %v4351 = vadd.f32 %v4171, %v4350
      %4352 = vmatmul.bf16.gmra.mxu0 %v4219
      %v4353 = vpop.f32.mrf.mxu0
      %v4354 = vadd.f32 %v4171, %v4353
      %v4355 = vpop.f32.mrf.mxu0
      %v4356 = vadd.f32 %v4171, %v4355
      %4357 = vmatmul.bf16.gmra.mxu0 %v4222
      %v4358 = vpop.f32.mrf.mxu0
      %v4359 = vadd.f32 %v4171, %v4358
      %v4360 = vpop.f32.mrf.mxu0
      %v4361 = vadd.f32 %v4171, %v4360
      %4362 = vmatmul.bf16.gmra.mxu0 %v4225
      %v4363 = vpop.f32.mrf.mxu0
      %v4364 = vadd.f32 %v4171, %v4363
      %v4365 = vpop.f32.mrf.mxu0
      %v4366 = vadd.f32 %v4171, %v4365
      %4367 = vmatmul.bf16.gmra.mxu0 %v4228
      %v4368 = vpop.f32.mrf.mxu0
      %v4369 = vadd.f32 %v4171, %v4368
      %v4370 = vpop.f32.mrf.mxu0
      %v4371 = vadd.f32 %v4171, %v4370
      %4372 = vmatmul.bf16.gmra.mxu0 %v4231
      %v4373 = vpop.f32.mrf.mxu0
      %v4374 = vadd.f32 %v4171, %v4373
      %v4375 = vpop.f32.mrf.mxu0
      %v4376 = vadd.f32 %v4171, %v4375
      %4377 = vmatmul.bf16.gmra.mxu0 %v4234
      %v4378 = vpop.f32.mrf.mxu0
      %v4379 = vadd.f32 %v4171, %v4378
      %v4380 = vpop.f32.mrf.mxu0
      %v4381 = vadd.f32 %v4171, %v4380
      %4382 = vmatmul.bf16.gmra.mxu0 %v4237
      %v4383 = vpop.f32.mrf.mxu0
      %v4384 = vadd.f32 %v4171, %v4383
      %v4385 = vpop.f32.mrf.mxu0
      %v4386 = vadd.f32 %v4171, %v4385
      %4387 = vmatmul.bf16.gmra.mxu0 %v4240
      %v4388 = vpop.f32.mrf.mxu0
      %v4389 = vadd.f32 %v4171, %v4388
      %v4390 = vpop.f32.mrf.mxu0
      %v4391 = vadd.f32 %v4171, %v4390
      %4392 = vmatmul.bf16.gmra.mxu0 %v4243
      %v4393 = vpop.f32.mrf.mxu0
      %v4394 = vadd.f32 %v4171, %v4393
      %v4395 = vpop.f32.mrf.mxu0
      %v4396 = vadd.f32 %v4171, %v4395
      %4397 = vmatmul.bf16.gmra.mxu0 %v4246
      %v4398 = vpop.f32.mrf.mxu0
      %v4399 = vadd.f32 %v4171, %v4398
      %v4400 = vpop.f32.mrf.mxu0
      %v4401 = vadd.f32 %v4171, %v4400
      %4402 = vmatmul.bf16.gmra.mxu0 %v4249
      %v4403 = vpop.f32.mrf.mxu0
      %v4404 = vadd.f32 %v4171, %v4403
      %v4405 = vpop.f32.mrf.mxu0
      %v4406 = vadd.f32 %v4171, %v4405
      %4407 = vmatmul.bf16.gmra.mxu0 %v4252
      %v4408 = vpop.f32.mrf.mxu0
      %v4409 = vadd.f32 %v4171, %v4408
      %v4410 = vpop.f32.mrf.mxu0
      %v4411 = vadd.f32 %v4171, %v4410
      %4412 = vmatmul.bf16.gmra.mxu0 %v4255
      %v4413 = vpop.f32.mrf.mxu0
      %v4414 = vadd.f32 %v4171, %v4413
      %v4415 = vpop.f32.mrf.mxu0
      %v4416 = vadd.f32 %v4171, %v4415
      %4417 = vmatmul.bf16.gmra.mxu0 %v4258
      %v4418 = vpop.f32.mrf.mxu0
      %v4419 = vadd.f32 %v4171, %v4418
      %v4420 = vpop.f32.mrf.mxu0
      %v4421 = vadd.f32 %v4171, %v4420
      %4422 = vmatmul.bf16.gmra.mxu0 %v4261
      %v4423 = vpop.f32.mrf.mxu0
      %v4424 = vadd.f32 %v4171, %v4423
      %v4425 = vpop.f32.mrf.mxu0
      %v4426 = vadd.f32 %v4171, %v4425
      %4427 = vmatmul.bf16.gmra.mxu0 %v4264
      %v4428 = vpop.f32.mrf.mxu0
      %v4429 = vadd.f32 %v4171, %v4428
      %v4430 = vpop.f32.mrf.mxu0
      %v4431 = vadd.f32 %v4171, %v4430
      %4432 = vmatmul.bf16.gmra.mxu0 %v4267
      %v4433 = vpop.f32.mrf.mxu0
      %v4434 = vadd.f32 %v4171, %v4433
      %v4435 = vpop.f32.mrf.mxu0
      %v4436 = vadd.f32 %v4171, %v4435
      %4437 = vdwg.mxu0
      %s4438 = scalar_lea.vmem %s1, 56
      %v4439 = vld [vmem:[%s4438] sm:$0x1]
      %v4440 = vld [vmem:[%s4438 + $0x1] sm:$0x1]
      %v4441 = vld [vmem:[%s4438 + $0x2] sm:$0x1]
      %v4442 = vld [vmem:[%s4438 + $0x3] sm:$0x1]
      %v4443 = vld [vmem:[%s4438 + $0x4] sm:$0x1]
      %v4444 = vld [vmem:[%s4438 + $0x5] sm:$0x1]
      %v4445 = vld [vmem:[%s4438 + $0x6] sm:$0x1]
      %v4446 = vld [vmem:[%s4438 + $0x7] sm:$0x1]
      %s4447 = scalar_lea.vmem %s1, 64
      %v4448 = vld [vmem:[%s4447] sm:$0x1]
      %v4449 = vld [vmem:[%s4447 + $0x1] sm:$0x1]
      %v4450 = vld [vmem:[%s4447 + $0x2] sm:$0x1]
      %v4451 = vld [vmem:[%s4447 + $0x3] sm:$0x1]
      %v4452 = vld [vmem:[%s4447 + $0x4] sm:$0x1]
      %v4453 = vld [vmem:[%s4447 + $0x5] sm:$0x1]
      %v4454 = vld [vmem:[%s4447 + $0x6] sm:$0x1]
      %v4455 = vld [vmem:[%s4447 + $0x7] sm:$0x1]
      %v4456 = vsel %vm952, %v4279, 0.0
      %v4457 = vsel %vm952, %v4299, 0.0
      %v4458 = vadd.f32 %v4456, %v4457
      %v4459 = vsel %vm952, %v4319, 0.0
      %v4460 = vadd.f32 %v4458, %v4459
      %v4461 = vsel %vm952, %v4339, 0.0
      %v4462 = vadd.f32 %v4460, %v4461
      %v4463 = vsel %vm952, %v4359, 0.0
      %v4464 = vadd.f32 %v4462, %v4463
      %v4465 = vsel %vm952, %v4379, 0.0
      %v4466 = vadd.f32 %v4464, %v4465
      %v4467 = vsel %vm952, %v4399, 0.0
      %v4468 = vadd.f32 %v4466, %v4467
      %v4469 = vsel %vm952, %v4419, 0.0
      %v4470 = vadd.f32 %v4468, %v4469
      %v4471 = vsel %vm952, %v4281, 0.0
      %v4472 = vsel %vm952, %v4301, 0.0
      %v4473 = vadd.f32 %v4471, %v4472
      %v4474 = vsel %vm952, %v4321, 0.0
      %v4475 = vadd.f32 %v4473, %v4474
      %v4476 = vsel %vm952, %v4341, 0.0
      %v4477 = vadd.f32 %v4475, %v4476
      %v4478 = vsel %vm952, %v4361, 0.0
      %v4479 = vadd.f32 %v4477, %v4478
      %v4480 = vsel %vm952, %v4381, 0.0
      %v4481 = vadd.f32 %v4479, %v4480
      %v4482 = vsel %vm952, %v4401, 0.0
      %v4483 = vadd.f32 %v4481, %v4482
      %v4484 = vsel %vm952, %v4421, 0.0
      %v4485 = vadd.f32 %v4483, %v4484
      %v4486 = vsel %vm952, %v4284, 0.0
      %v4487 = vsel %vm952, %v4304, 0.0
      %v4488 = vadd.f32 %v4486, %v4487
      %v4489 = vsel %vm952, %v4324, 0.0
      %v4490 = vadd.f32 %v4488, %v4489
      %v4491 = vsel %vm952, %v4344, 0.0
      %v4492 = vadd.f32 %v4490, %v4491
      %v4493 = vsel %vm952, %v4364, 0.0
      %v4494 = vadd.f32 %v4492, %v4493
      %v4495 = vsel %vm952, %v4384, 0.0
      %v4496 = vadd.f32 %v4494, %v4495
      %v4497 = vsel %vm952, %v4404, 0.0
      %v4498 = vadd.f32 %v4496, %v4497
      %v4499 = vsel %vm952, %v4424, 0.0
      %v4500 = vadd.f32 %v4498, %v4499
      %v4501 = vsel %vm952, %v4286, 0.0
      %v4502 = vsel %vm952, %v4306, 0.0
      %v4503 = vadd.f32 %v4501, %v4502
      %v4504 = vsel %vm952, %v4326, 0.0
      %v4505 = vadd.f32 %v4503, %v4504
      %v4506 = vsel %vm952, %v4346, 0.0
      %v4507 = vadd.f32 %v4505, %v4506
      %v4508 = vsel %vm952, %v4366, 0.0
      %v4509 = vadd.f32 %v4507, %v4508
      %v4510 = vsel %vm952, %v4386, 0.0
      %v4511 = vadd.f32 %v4509, %v4510
      %v4512 = vsel %vm952, %v4406, 0.0
      %v4513 = vadd.f32 %v4511, %v4512
      %v4514 = vsel %vm952, %v4426, 0.0
      %v4515 = vadd.f32 %v4513, %v4514
      %v4516 = vsel %vm952, %v4289, 0.0
      %v4517 = vsel %vm952, %v4309, 0.0
      %v4518 = vadd.f32 %v4516, %v4517
      %v4519 = vsel %vm952, %v4329, 0.0
      %v4520 = vadd.f32 %v4518, %v4519
      %v4521 = vsel %vm952, %v4349, 0.0
      %v4522 = vadd.f32 %v4520, %v4521
      %v4523 = vsel %vm952, %v4369, 0.0
      %v4524 = vadd.f32 %v4522, %v4523
      %v4525 = vsel %vm952, %v4389, 0.0
      %v4526 = vadd.f32 %v4524, %v4525
      %v4527 = vsel %vm952, %v4409, 0.0
      %v4528 = vadd.f32 %v4526, %v4527
      %v4529 = vsel %vm952, %v4429, 0.0
      %v4530 = vadd.f32 %v4528, %v4529
      %v4531 = vsel %vm952, %v4291, 0.0
      %v4532 = vsel %vm952, %v4311, 0.0
      %v4533 = vadd.f32 %v4531, %v4532
      %v4534 = vsel %vm952, %v4331, 0.0
      %v4535 = vadd.f32 %v4533, %v4534
      %v4536 = vsel %vm952, %v4351, 0.0
      %v4537 = vadd.f32 %v4535, %v4536
      %v4538 = vsel %vm952, %v4371, 0.0
      %v4539 = vadd.f32 %v4537, %v4538
      %v4540 = vsel %vm952, %v4391, 0.0
      %v4541 = vadd.f32 %v4539, %v4540
      %v4542 = vsel %vm952, %v4411, 0.0
      %v4543 = vadd.f32 %v4541, %v4542
      %v4544 = vsel %vm952, %v4431, 0.0
      %v4545 = vadd.f32 %v4543, %v4544
      %v4546 = vsel %vm952, %v4294, 0.0
      %v4547 = vsel %vm952, %v4314, 0.0
      %v4548 = vadd.f32 %v4546, %v4547
      %v4549 = vsel %vm952, %v4334, 0.0
      %v4550 = vadd.f32 %v4548, %v4549
      %v4551 = vsel %vm952, %v4354, 0.0
      %v4552 = vadd.f32 %v4550, %v4551
      %v4553 = vsel %vm952, %v4374, 0.0
      %v4554 = vadd.f32 %v4552, %v4553
      %v4555 = vsel %vm952, %v4394, 0.0
      %v4556 = vadd.f32 %v4554, %v4555
      %v4557 = vsel %vm952, %v4414, 0.0
      %v4558 = vadd.f32 %v4556, %v4557
      %v4559 = vsel %vm952, %v4434, 0.0
      %v4560 = vadd.f32 %v4558, %v4559
      %v4561 = vsel %vm952, %v4296, 0.0
      %v4562 = vsel %vm952, %v4316, 0.0
      %v4563 = vadd.f32 %v4561, %v4562
      %v4564 = vsel %vm952, %v4336, 0.0
      %v4565 = vadd.f32 %v4563, %v4564
      %v4566 = vsel %vm952, %v4356, 0.0
      %v4567 = vadd.f32 %v4565, %v4566
      %v4568 = vsel %vm952, %v4376, 0.0
      %v4569 = vadd.f32 %v4567, %v4568
      %v4570 = vsel %vm952, %v4396, 0.0
      %v4571 = vadd.f32 %v4569, %v4570
      %v4572 = vsel %vm952, %v4416, 0.0
      %v4573 = vadd.f32 %v4571, %v4572
      %v4574 = vsel %vm952, %v4436, 0.0
      %v4575 = vadd.f32 %v4573, %v4574
      %v4576 = vsel %vm952, %v4470, 0.0
      %4577 = vadd.xlane.f32.xlu0 %v4576
      %v4578 = vpop.xlane.xlu0 %4577
      %v4579 = vsel %vm952, %v4485, 0.0
      %4580 = vadd.xlane.f32.xlu0 %v4579
      %v4581 = vpop.xlane.xlu0 %4580
      %v4582 = vsel %vm952, %v4500, 0.0
      %4583 = vadd.xlane.f32.xlu0 %v4582
      %v4584 = vpop.xlane.xlu0 %4583
      %v4585 = vsel %vm952, %v4515, 0.0
      %4586 = vadd.xlane.f32.xlu0 %v4585
      %v4587 = vpop.xlane.xlu0 %4586
      %v4588 = vsel %vm952, %v4530, 0.0
      %4589 = vadd.xlane.f32.xlu0 %v4588
      %v4590 = vpop.xlane.xlu0 %4589
      %v4591 = vsel %vm952, %v4545, 0.0
      %4592 = vadd.xlane.f32.xlu0 %v4591
      %v4593 = vpop.xlane.xlu0 %4592
      %v4594 = vsel %vm952, %v4560, 0.0
      %4595 = vadd.xlane.f32.xlu0 %v4594
      %v4596 = vpop.xlane.xlu0 %4595
      %v4597 = vsel %vm952, %v4575, 0.0
      %4598 = vadd.xlane.f32.xlu0 %v4597
      %v4599 = vpop.xlane.xlu0 %4598
      %v4600 = vmul.f32 %v4578, 0.00390625
      %v4601 = vmul.f32 %v4581, 0.00390625
      %v4602 = vmul.f32 %v4584, 0.00390625
      %v4603 = vmul.f32 %v4587, 0.00390625
      %v4604 = vmul.f32 %v4590, 0.00390625
      %v4605 = vmul.f32 %v4593, 0.00390625
      %v4606 = vmul.f32 %v4596, 0.00390625
      %v4607 = vmul.f32 %v4599, 0.00390625
      %v4608 = vmul.f32 %v4279, %v4279
      %v4609 = vmul.f32 %v4281, %v4281
      %v4610 = vmul.f32 %v4284, %v4284
      %v4611 = vmul.f32 %v4286, %v4286
      %v4612 = vmul.f32 %v4289, %v4289
      %v4613 = vmul.f32 %v4291, %v4291
      %v4614 = vmul.f32 %v4294, %v4294
      %v4615 = vmul.f32 %v4296, %v4296
      %v4616 = vmul.f32 %v4299, %v4299
      %v4617 = vmul.f32 %v4301, %v4301
      %v4618 = vmul.f32 %v4304, %v4304
      %v4619 = vmul.f32 %v4306, %v4306
      %v4620 = vmul.f32 %v4309, %v4309
      %v4621 = vmul.f32 %v4311, %v4311
      %v4622 = vmul.f32 %v4314, %v4314
      %v4623 = vmul.f32 %v4316, %v4316
      %v4624 = vmul.f32 %v4319, %v4319
      %v4625 = vmul.f32 %v4321, %v4321
      %v4626 = vmul.f32 %v4324, %v4324
      %v4627 = vmul.f32 %v4326, %v4326
      %v4628 = vmul.f32 %v4329, %v4329
      %v4629 = vmul.f32 %v4331, %v4331
      %v4630 = vmul.f32 %v4334, %v4334
      %v4631 = vmul.f32 %v4336, %v4336
      %v4632 = vmul.f32 %v4339, %v4339
      %v4633 = vmul.f32 %v4341, %v4341
      %v4634 = vmul.f32 %v4344, %v4344
      %v4635 = vmul.f32 %v4346, %v4346
      %v4636 = vmul.f32 %v4349, %v4349
      %v4637 = vmul.f32 %v4351, %v4351
      %v4638 = vmul.f32 %v4354, %v4354
      %v4639 = vmul.f32 %v4356, %v4356
      %v4640 = vmul.f32 %v4359, %v4359
      %v4641 = vmul.f32 %v4361, %v4361
      %v4642 = vmul.f32 %v4364, %v4364
      %v4643 = vmul.f32 %v4366, %v4366
      %v4644 = vmul.f32 %v4369, %v4369
      %v4645 = vmul.f32 %v4371, %v4371
      %v4646 = vmul.f32 %v4374, %v4374
      %v4647 = vmul.f32 %v4376, %v4376
      %v4648 = vmul.f32 %v4379, %v4379
      %v4649 = vmul.f32 %v4381, %v4381
      %v4650 = vmul.f32 %v4384, %v4384
      %v4651 = vmul.f32 %v4386, %v4386
      %v4652 = vmul.f32 %v4389, %v4389
      %v4653 = vmul.f32 %v4391, %v4391
      %v4654 = vmul.f32 %v4394, %v4394
      %v4655 = vmul.f32 %v4396, %v4396
      %v4656 = vmul.f32 %v4399, %v4399
      %v4657 = vmul.f32 %v4401, %v4401
      %v4658 = vmul.f32 %v4404, %v4404
      %v4659 = vmul.f32 %v4406, %v4406
      %v4660 = vmul.f32 %v4409, %v4409
      %v4661 = vmul.f32 %v4411, %v4411
      %v4662 = vmul.f32 %v4414, %v4414
      %v4663 = vmul.f32 %v4416, %v4416
      %v4664 = vmul.f32 %v4419, %v4419
      %v4665 = vmul.f32 %v4421, %v4421
      %v4666 = vmul.f32 %v4424, %v4424
      %v4667 = vmul.f32 %v4426, %v4426
      %v4668 = vmul.f32 %v4429, %v4429
      %v4669 = vmul.f32 %v4431, %v4431
      %v4670 = vmul.f32 %v4434, %v4434
      %v4671 = vmul.f32 %v4436, %v4436
      %v4672 = vsel %vm952, %v4608, 0.0
      %v4673 = vsel %vm952, %v4616, 0.0
      %v4674 = vadd.f32 %v4672, %v4673
      %v4675 = vsel %vm952, %v4624, 0.0
      %v4676 = vadd.f32 %v4674, %v4675
      %v4677 = vsel %vm952, %v4632, 0.0
      %v4678 = vadd.f32 %v4676, %v4677
      %v4679 = vsel %vm952, %v4640, 0.0
      %v4680 = vadd.f32 %v4678, %v4679
      %v4681 = vsel %vm952, %v4648, 0.0
      %v4682 = vadd.f32 %v4680, %v4681
      %v4683 = vsel %vm952, %v4656, 0.0
      %v4684 = vadd.f32 %v4682, %v4683
      %v4685 = vsel %vm952, %v4664, 0.0
      %v4686 = vadd.f32 %v4684, %v4685
      %v4687 = vsel %vm952, %v4609, 0.0
      %v4688 = vsel %vm952, %v4617, 0.0
      %v4689 = vadd.f32 %v4687, %v4688
      %v4690 = vsel %vm952, %v4625, 0.0
      %v4691 = vadd.f32 %v4689, %v4690
      %v4692 = vsel %vm952, %v4633, 0.0
      %v4693 = vadd.f32 %v4691, %v4692
      %v4694 = vsel %vm952, %v4641, 0.0
      %v4695 = vadd.f32 %v4693, %v4694
      %v4696 = vsel %vm952, %v4649, 0.0
      %v4697 = vadd.f32 %v4695, %v4696
      %v4698 = vsel %vm952, %v4657, 0.0
      %v4699 = vadd.f32 %v4697, %v4698
      %v4700 = vsel %vm952, %v4665, 0.0
      %v4701 = vadd.f32 %v4699, %v4700
      %v4702 = vsel %vm952, %v4610, 0.0
      %v4703 = vsel %vm952, %v4618, 0.0
      %v4704 = vadd.f32 %v4702, %v4703
      %v4705 = vsel %vm952, %v4626, 0.0
      %v4706 = vadd.f32 %v4704, %v4705
      %v4707 = vsel %vm952, %v4634, 0.0
      %v4708 = vadd.f32 %v4706, %v4707
      %v4709 = vsel %vm952, %v4642, 0.0
      %v4710 = vadd.f32 %v4708, %v4709
      %v4711 = vsel %vm952, %v4650, 0.0
      %v4712 = vadd.f32 %v4710, %v4711
      %v4713 = vsel %vm952, %v4658, 0.0
      %v4714 = vadd.f32 %v4712, %v4713
      %v4715 = vsel %vm952, %v4666, 0.0
      %v4716 = vadd.f32 %v4714, %v4715
      %v4717 = vsel %vm952, %v4611, 0.0
      %v4718 = vsel %vm952, %v4619, 0.0
      %v4719 = vadd.f32 %v4717, %v4718
      %v4720 = vsel %vm952, %v4627, 0.0
      %v4721 = vadd.f32 %v4719, %v4720
      %v4722 = vsel %vm952, %v4635, 0.0
      %v4723 = vadd.f32 %v4721, %v4722
      %v4724 = vsel %vm952, %v4643, 0.0
      %v4725 = vadd.f32 %v4723, %v4724
      %v4726 = vsel %vm952, %v4651, 0.0
      %v4727 = vadd.f32 %v4725, %v4726
      %v4728 = vsel %vm952, %v4659, 0.0
      %v4729 = vadd.f32 %v4727, %v4728
      %v4730 = vsel %vm952, %v4667, 0.0
      %v4731 = vadd.f32 %v4729, %v4730
      %v4732 = vsel %vm952, %v4612, 0.0
      %v4733 = vsel %vm952, %v4620, 0.0
      %v4734 = vadd.f32 %v4732, %v4733
      %v4735 = vsel %vm952, %v4628, 0.0
      %v4736 = vadd.f32 %v4734, %v4735
      %v4737 = vsel %vm952, %v4636, 0.0
      %v4738 = vadd.f32 %v4736, %v4737
      %v4739 = vsel %vm952, %v4644, 0.0
      %v4740 = vadd.f32 %v4738, %v4739
      %v4741 = vsel %vm952, %v4652, 0.0
      %v4742 = vadd.f32 %v4740, %v4741
      %v4743 = vsel %vm952, %v4660, 0.0
      %v4744 = vadd.f32 %v4742, %v4743
      %v4745 = vsel %vm952, %v4668, 0.0
      %v4746 = vadd.f32 %v4744, %v4745
      %v4747 = vsel %vm952, %v4613, 0.0
      %v4748 = vsel %vm952, %v4621, 0.0
      %v4749 = vadd.f32 %v4747, %v4748
      %v4750 = vsel %vm952, %v4629, 0.0
      %v4751 = vadd.f32 %v4749, %v4750
      %v4752 = vsel %vm952, %v4637, 0.0
      %v4753 = vadd.f32 %v4751, %v4752
      %v4754 = vsel %vm952, %v4645, 0.0
      %v4755 = vadd.f32 %v4753, %v4754
      %v4756 = vsel %vm952, %v4653, 0.0
      %v4757 = vadd.f32 %v4755, %v4756
      %v4758 = vsel %vm952, %v4661, 0.0
      %v4759 = vadd.f32 %v4757, %v4758
      %v4760 = vsel %vm952, %v4669, 0.0
      %v4761 = vadd.f32 %v4759, %v4760
      %v4762 = vsel %vm952, %v4614, 0.0
      %v4763 = vsel %vm952, %v4622, 0.0
      %v4764 = vadd.f32 %v4762, %v4763
      %v4765 = vsel %vm952, %v4630, 0.0
      %v4766 = vadd.f32 %v4764, %v4765
      %v4767 = vsel %vm952, %v4638, 0.0
      %v4768 = vadd.f32 %v4766, %v4767
      %v4769 = vsel %vm952, %v4646, 0.0
      %v4770 = vadd.f32 %v4768, %v4769
      %v4771 = vsel %vm952, %v4654, 0.0
      %v4772 = vadd.f32 %v4770, %v4771
      %v4773 = vsel %vm952, %v4662, 0.0
      %v4774 = vadd.f32 %v4772, %v4773
      %v4775 = vsel %vm952, %v4670, 0.0
      %v4776 = vadd.f32 %v4774, %v4775
      %v4777 = vsel %vm952, %v4615, 0.0
      %v4778 = vsel %vm952, %v4623, 0.0
      %v4779 = vadd.f32 %v4777, %v4778
      %v4780 = vsel %vm952, %v4631, 0.0
      %v4781 = vadd.f32 %v4779, %v4780
      %v4782 = vsel %vm952, %v4639, 0.0
      %v4783 = vadd.f32 %v4781, %v4782
      %v4784 = vsel %vm952, %v4647, 0.0
      %v4785 = vadd.f32 %v4783, %v4784
      %v4786 = vsel %vm952, %v4655, 0.0
      %v4787 = vadd.f32 %v4785, %v4786
      %v4788 = vsel %vm952, %v4663, 0.0
      %v4789 = vadd.f32 %v4787, %v4788
      %v4790 = vsel %vm952, %v4671, 0.0
      %v4791 = vadd.f32 %v4789, %v4790
      %v4792 = vsel %vm952, %v4686, 0.0
      %4793 = vadd.xlane.f32.xlu0 %v4792
      %v4794 = vpop.xlane.xlu0 %4793
      %v4795 = vsel %vm952, %v4701, 0.0
      %4796 = vadd.xlane.f32.xlu0 %v4795
      %v4797 = vpop.xlane.xlu0 %4796
      %v4798 = vsel %vm952, %v4716, 0.0
      %4799 = vadd.xlane.f32.xlu0 %v4798
      %v4800 = vpop.xlane.xlu0 %4799
      %v4801 = vsel %vm952, %v4731, 0.0
      %4802 = vadd.xlane.f32.xlu0 %v4801
      %v4803 = vpop.xlane.xlu0 %4802
      %v4804 = vsel %vm952, %v4746, 0.0
      %4805 = vadd.xlane.f32.xlu0 %v4804
      %v4806 = vpop.xlane.xlu0 %4805
      %v4807 = vsel %vm952, %v4761, 0.0
      %4808 = vadd.xlane.f32.xlu0 %v4807
      %v4809 = vpop.xlane.xlu0 %4808
      %v4810 = vsel %vm952, %v4776, 0.0
      %4811 = vadd.xlane.f32.xlu0 %v4810
      %v4812 = vpop.xlane.xlu0 %4811
      %v4813 = vsel %vm952, %v4791, 0.0
      %4814 = vadd.xlane.f32.xlu0 %v4813
      %v4815 = vpop.xlane.xlu0 %4814
      %v4816 = vmul.f32 %v4794, 0.00390625
      %v4817 = vmul.f32 %v4797, 0.00390625
      %v4818 = vmul.f32 %v4800, 0.00390625
      %v4819 = vmul.f32 %v4803, 0.00390625
      %v4820 = vmul.f32 %v4806, 0.00390625
      %v4821 = vmul.f32 %v4809, 0.00390625
      %v4822 = vmul.f32 %v4812, 0.00390625
      %v4823 = vmul.f32 %v4815, 0.00390625
      %v4824 = vmul.f32 %v4600, %v4600
      %v4825 = vmul.f32 %v4601, %v4601
      %v4826 = vmul.f32 %v4602, %v4602
      %v4827 = vmul.f32 %v4603, %v4603
      %v4828 = vmul.f32 %v4604, %v4604
      %v4829 = vmul.f32 %v4605, %v4605
      %v4830 = vmul.f32 %v4606, %v4606
      %v4831 = vmul.f32 %v4607, %v4607
      %v4832 = vsub.f32 %v4816, %v4824
      %v4833 = vsub.f32 %v4817, %v4825
      %v4834 = vsub.f32 %v4818, %v4826
      %v4835 = vsub.f32 %v4819, %v4827
      %v4836 = vsub.f32 %v4820, %v4828
      %v4837 = vsub.f32 %v4821, %v4829
      %v4838 = vsub.f32 %v4822, %v4830
      %v4839 = vsub.f32 %v4823, %v4831
      %v4840 = vmax.f32 %v4832, 0.0
      %v4841 = vmax.f32 %v4833, 0.0
      %v4842 = vmax.f32 %v4834, 0.0
      %v4843 = vmax.f32 %v4835, 0.0
      %v4844 = vmax.f32 %v4836, 0.0
      %v4845 = vmax.f32 %v4837, 0.0
      %v4846 = vmax.f32 %v4838, 0.0
      %v4847 = vmax.f32 %v4839, 0.0
      %v4848 = vadd.f32 %v4840, 1e-05
      %v4849 = vadd.f32 %v4841, 1e-05
      %v4850 = vadd.f32 %v4842, 1e-05
      %v4851 = vadd.f32 %v4843, 1e-05
      %v4852 = vadd.f32 %v4844, 1e-05
      %v4853 = vadd.f32 %v4845, 1e-05
      %v4854 = vadd.f32 %v4846, 1e-05
      %v4855 = vadd.f32 %v4847, 1e-05
      %v4856 = vrsqrt.pop %v4848
      %v4857 = vmul.f32 %v4856, %v4848
      %v4858 = vmul.f32 %v4857, %v4856
      %v4859 = vmul.f32 0.5, %v4858
      %v4860 = vsub.f32 1.5, %v4859
      %v4861 = vmul.f32 %v4856, %v4860
      %vm4862 = vweird.f32 %v4848
      %vm4863 = vweird.f32 %v4856
      %vm4864 = vmor %vm4862, %vm4863
      %v4865 = vsel %vm4864, %v4856, %v4861
      %v4866 = vrsqrt.pop %v4849
      %v4867 = vmul.f32 %v4866, %v4849
      %v4868 = vmul.f32 %v4867, %v4866
      %v4869 = vmul.f32 0.5, %v4868
      %v4870 = vsub.f32 1.5, %v4869
      %v4871 = vmul.f32 %v4866, %v4870
      %vm4872 = vweird.f32 %v4849
      %vm4873 = vweird.f32 %v4866
      %vm4874 = vmor %vm4872, %vm4873
      %v4875 = vsel %vm4874, %v4866, %v4871
      %v4876 = vrsqrt.pop %v4850
      %v4877 = vmul.f32 %v4876, %v4850
      %v4878 = vmul.f32 %v4877, %v4876
      %v4879 = vmul.f32 0.5, %v4878
      %v4880 = vsub.f32 1.5, %v4879
      %v4881 = vmul.f32 %v4876, %v4880
      %vm4882 = vweird.f32 %v4850
      %vm4883 = vweird.f32 %v4876
      %vm4884 = vmor %vm4882, %vm4883
      %v4885 = vsel %vm4884, %v4876, %v4881
      %v4886 = vrsqrt.pop %v4851
      %v4887 = vmul.f32 %v4886, %v4851
      %v4888 = vmul.f32 %v4887, %v4886
      %v4889 = vmul.f32 0.5, %v4888
      %v4890 = vsub.f32 1.5, %v4889
      %v4891 = vmul.f32 %v4886, %v4890
      %vm4892 = vweird.f32 %v4851
      %vm4893 = vweird.f32 %v4886
      %vm4894 = vmor %vm4892, %vm4893
      %v4895 = vsel %vm4894, %v4886, %v4891
      %v4896 = vrsqrt.pop %v4852
      %v4897 = vmul.f32 %v4896, %v4852
      %v4898 = vmul.f32 %v4897, %v4896
      %v4899 = vmul.f32 0.5, %v4898
      %v4900 = vsub.f32 1.5, %v4899
      %v4901 = vmul.f32 %v4896, %v4900
      %vm4902 = vweird.f32 %v4852
      %vm4903 = vweird.f32 %v4896
      %vm4904 = vmor %vm4902, %vm4903
      %v4905 = vsel %vm4904, %v4896, %v4901
      %v4906 = vrsqrt.pop %v4853
      %v4907 = vmul.f32 %v4906, %v4853
      %v4908 = vmul.f32 %v4907, %v4906
      %v4909 = vmul.f32 0.5, %v4908
      %v4910 = vsub.f32 1.5, %v4909
      %v4911 = vmul.f32 %v4906, %v4910
      %vm4912 = vweird.f32 %v4853
      %vm4913 = vweird.f32 %v4906
      %vm4914 = vmor %vm4912, %vm4913
      %v4915 = vsel %vm4914, %v4906, %v4911
      %v4916 = vrsqrt.pop %v4854
      %v4917 = vmul.f32 %v4916, %v4854
      %v4918 = vmul.f32 %v4917, %v4916
      %v4919 = vmul.f32 0.5, %v4918
      %v4920 = vsub.f32 1.5, %v4919
      %v4921 = vmul.f32 %v4916, %v4920
      %vm4922 = vweird.f32 %v4854
      %vm4923 = vweird.f32 %v4916
      %vm4924 = vmor %vm4922, %vm4923
      %v4925 = vsel %vm4924, %v4916, %v4921
      %v4926 = vrsqrt.pop %v4855
      %v4927 = vmul.f32 %v4926, %v4855
      %v4928 = vmul.f32 %v4927, %v4926
      %v4929 = vmul.f32 0.5, %v4928
      %v4930 = vsub.f32 1.5, %v4929
      %v4931 = vmul.f32 %v4926, %v4930
      %vm4932 = vweird.f32 %v4855
      %vm4933 = vweird.f32 %v4926
      %vm4934 = vmor %vm4932, %vm4933
      %v4935 = vsel %vm4934, %v4926, %v4931
      %v4936 = vsub.f32 %v4279, %v4600
      %v4937 = vsub.f32 %v4281, %v4601
      %v4938 = vsub.f32 %v4284, %v4602
      %v4939 = vsub.f32 %v4286, %v4603
      %v4940 = vsub.f32 %v4289, %v4604
      %v4941 = vsub.f32 %v4291, %v4605
      %v4942 = vsub.f32 %v4294, %v4606
      %v4943 = vsub.f32 %v4296, %v4607
      %v4944 = vsub.f32 %v4299, %v4600
      %v4945 = vsub.f32 %v4301, %v4601
      %v4946 = vsub.f32 %v4304, %v4602
      %v4947 = vsub.f32 %v4306, %v4603
      %v4948 = vsub.f32 %v4309, %v4604
      %v4949 = vsub.f32 %v4311, %v4605
      %v4950 = vsub.f32 %v4314, %v4606
      %v4951 = vsub.f32 %v4316, %v4607
      %v4952 = vsub.f32 %v4319, %v4600
      %v4953 = vsub.f32 %v4321, %v4601
      %v4954 = vsub.f32 %v4324, %v4602
      %v4955 = vsub.f32 %v4326, %v4603
      %v4956 = vsub.f32 %v4329, %v4604
      %v4957 = vsub.f32 %v4331, %v4605
      %v4958 = vsub.f32 %v4334, %v4606
      %v4959 = vsub.f32 %v4336, %v4607
      %v4960 = vsub.f32 %v4339, %v4600
      %v4961 = vsub.f32 %v4341, %v4601
      %v4962 = vsub.f32 %v4344, %v4602
      %v4963 = vsub.f32 %v4346, %v4603
      %v4964 = vsub.f32 %v4349, %v4604
      %v4965 = vsub.f32 %v4351, %v4605
      %v4966 = vsub.f32 %v4354, %v4606
      %v4967 = vsub.f32 %v4356, %v4607
      %v4968 = vsub.f32 %v4359, %v4600
      %v4969 = vsub.f32 %v4361, %v4601
      %v4970 = vsub.f32 %v4364, %v4602
      %v4971 = vsub.f32 %v4366, %v4603
      %v4972 = vsub.f32 %v4369, %v4604
      %v4973 = vsub.f32 %v4371, %v4605
      %v4974 = vsub.f32 %v4374, %v4606
      %v4975 = vsub.f32 %v4376, %v4607
      %v4976 = vsub.f32 %v4379, %v4600
      %v4977 = vsub.f32 %v4381, %v4601
      %v4978 = vsub.f32 %v4384, %v4602
      %v4979 = vsub.f32 %v4386, %v4603
      %v4980 = vsub.f32 %v4389, %v4604
      %v4981 = vsub.f32 %v4391, %v4605
      %v4982 = vsub.f32 %v4394, %v4606
      %v4983 = vsub.f32 %v4396, %v4607
      %v4984 = vsub.f32 %v4399, %v4600
      %v4985 = vsub.f32 %v4401, %v4601
      %v4986 = vsub.f32 %v4404, %v4602
      %v4987 = vsub.f32 %v4406, %v4603
      %v4988 = vsub.f32 %v4409, %v4604
      %v4989 = vsub.f32 %v4411, %v4605
      %v4990 = vsub.f32 %v4414, %v4606
      %v4991 = vsub.f32 %v4416, %v4607
      %v4992 = vsub.f32 %v4419, %v4600
      %v4993 = vsub.f32 %v4421, %v4601
      %v4994 = vsub.f32 %v4424, %v4602
      %v4995 = vsub.f32 %v4426, %v4603
      %v4996 = vsub.f32 %v4429, %v4604
      %v4997 = vsub.f32 %v4431, %v4605
      %v4998 = vsub.f32 %v4434, %v4606
      %v4999 = vsub.f32 %v4436, %v4607
      %v5000 = vmul.f32 %v4936, %v4865
      %v5001 = vmul.f32 %v4937, %v4875
      %v5002 = vmul.f32 %v4938, %v4885
      %v5003 = vmul.f32 %v4939, %v4895
      %v5004 = vmul.f32 %v4940, %v4905
      %v5005 = vmul.f32 %v4941, %v4915
      %v5006 = vmul.f32 %v4942, %v4925
      %v5007 = vmul.f32 %v4943, %v4935
      %v5008 = vmul.f32 %v4944, %v4865
      %v5009 = vmul.f32 %v4945, %v4875
      %v5010 = vmul.f32 %v4946, %v4885
      %v5011 = vmul.f32 %v4947, %v4895
      %v5012 = vmul.f32 %v4948, %v4905
      %v5013 = vmul.f32 %v4949, %v4915
      %v5014 = vmul.f32 %v4950, %v4925
      %v5015 = vmul.f32 %v4951, %v4935
      %v5016 = vmul.f32 %v4952, %v4865
      %v5017 = vmul.f32 %v4953, %v4875
      %v5018 = vmul.f32 %v4954, %v4885
      %v5019 = vmul.f32 %v4955, %v4895
      %v5020 = vmul.f32 %v4956, %v4905
      %v5021 = vmul.f32 %v4957, %v4915
      %v5022 = vmul.f32 %v4958, %v4925
      %v5023 = vmul.f32 %v4959, %v4935
      %v5024 = vmul.f32 %v4960, %v4865
      %v5025 = vmul.f32 %v4961, %v4875
      %v5026 = vmul.f32 %v4962, %v4885
      %v5027 = vmul.f32 %v4963, %v4895
      %v5028 = vmul.f32 %v4964, %v4905
      %v5029 = vmul.f32 %v4965, %v4915
      %v5030 = vmul.f32 %v4966, %v4925
      %v5031 = vmul.f32 %v4967, %v4935
      %v5032 = vmul.f32 %v4968, %v4865
      %v5033 = vmul.f32 %v4969, %v4875
      %v5034 = vmul.f32 %v4970, %v4885
      %v5035 = vmul.f32 %v4971, %v4895
      %v5036 = vmul.f32 %v4972, %v4905
      %v5037 = vmul.f32 %v4973, %v4915
      %v5038 = vmul.f32 %v4974, %v4925
      %v5039 = vmul.f32 %v4975, %v4935
      %v5040 = vmul.f32 %v4976, %v4865
      %v5041 = vmul.f32 %v4977, %v4875
      %v5042 = vmul.f32 %v4978, %v4885
      %v5043 = vmul.f32 %v4979, %v4895
      %v5044 = vmul.f32 %v4980, %v4905
      %v5045 = vmul.f32 %v4981, %v4915
      %v5046 = vmul.f32 %v4982, %v4925
      %v5047 = vmul.f32 %v4983, %v4935
      %v5048 = vmul.f32 %v4984, %v4865
      %v5049 = vmul.f32 %v4985, %v4875
      %v5050 = vmul.f32 %v4986, %v4885
      %v5051 = vmul.f32 %v4987, %v4895
      %v5052 = vmul.f32 %v4988, %v4905
      %v5053 = vmul.f32 %v4989, %v4915
      %v5054 = vmul.f32 %v4990, %v4925
      %v5055 = vmul.f32 %v4991, %v4935
      %v5056 = vmul.f32 %v4992, %v4865
      %v5057 = vmul.f32 %v4993, %v4875
      %v5058 = vmul.f32 %v4994, %v4885
      %v5059 = vmul.f32 %v4995, %v4895
      %v5060 = vmul.f32 %v4996, %v4905
      %v5061 = vmul.f32 %v4997, %v4915
      %v5062 = vmul.f32 %v4998, %v4925
      %v5063 = vmul.f32 %v4999, %v4935
      %v5072 = vperm.slane %v4439, 0
      %v5073 = vperm.slane %v4440, 0
      %v5074 = vperm.slane %v4441, 0
      %v5075 = vperm.slane %v4442, 0
      %v5076 = vperm.slane %v4443, 0
      %v5077 = vperm.slane %v4444, 0
      %v5078 = vperm.slane %v4445, 0
      %v5079 = vperm.slane %v4446, 0
      %v5088 = vmul.f32 %v5000, %v5072
      %v5089 = vmul.f32 %v5001, %v5072
      %v5090 = vmul.f32 %v5002, %v5072
      %v5091 = vmul.f32 %v5003, %v5072
      %v5092 = vmul.f32 %v5004, %v5072
      %v5093 = vmul.f32 %v5005, %v5072
      %v5094 = vmul.f32 %v5006, %v5072
      %v5095 = vmul.f32 %v5007, %v5072
      %v5096 = vmul.f32 %v5008, %v5073
      %v5097 = vmul.f32 %v5009, %v5073
      %v5098 = vmul.f32 %v5010, %v5073
      %v5099 = vmul.f32 %v5011, %v5073
      %v5100 = vmul.f32 %v5012, %v5073
      %v5101 = vmul.f32 %v5013, %v5073
      %v5102 = vmul.f32 %v5014, %v5073
      %v5103 = vmul.f32 %v5015, %v5073
      %v5104 = vmul.f32 %v5016, %v5074
      %v5105 = vmul.f32 %v5017, %v5074
      %v5106 = vmul.f32 %v5018, %v5074
      %v5107 = vmul.f32 %v5019, %v5074
      %v5108 = vmul.f32 %v5020, %v5074
      %v5109 = vmul.f32 %v5021, %v5074
      %v5110 = vmul.f32 %v5022, %v5074
      %v5111 = vmul.f32 %v5023, %v5074
      %v5112 = vmul.f32 %v5024, %v5075
      %v5113 = vmul.f32 %v5025, %v5075
      %v5114 = vmul.f32 %v5026, %v5075
      %v5115 = vmul.f32 %v5027, %v5075
      %v5116 = vmul.f32 %v5028, %v5075
      %v5117 = vmul.f32 %v5029, %v5075
      %v5118 = vmul.f32 %v5030, %v5075
      %v5119 = vmul.f32 %v5031, %v5075
      %v5120 = vmul.f32 %v5032, %v5076
      %v5121 = vmul.f32 %v5033, %v5076
      %v5122 = vmul.f32 %v5034, %v5076
      %v5123 = vmul.f32 %v5035, %v5076
      %v5124 = vmul.f32 %v5036, %v5076
      %v5125 = vmul.f32 %v5037, %v5076
      %v5126 = vmul.f32 %v5038, %v5076
      %v5127 = vmul.f32 %v5039, %v5076
      %v5128 = vmul.f32 %v5040, %v5077
      %v5129 = vmul.f32 %v5041, %v5077
      %v5130 = vmul.f32 %v5042, %v5077
      %v5131 = vmul.f32 %v5043, %v5077
      %v5132 = vmul.f32 %v5044, %v5077
      %v5133 = vmul.f32 %v5045, %v5077
      %v5134 = vmul.f32 %v5046, %v5077
      %v5135 = vmul.f32 %v5047, %v5077
      %v5136 = vmul.f32 %v5048, %v5078
      %v5137 = vmul.f32 %v5049, %v5078
      %v5138 = vmul.f32 %v5050, %v5078
      %v5139 = vmul.f32 %v5051, %v5078
      %v5140 = vmul.f32 %v5052, %v5078
      %v5141 = vmul.f32 %v5053, %v5078
      %v5142 = vmul.f32 %v5054, %v5078
      %v5143 = vmul.f32 %v5055, %v5078
      %v5144 = vmul.f32 %v5056, %v5079
      %v5145 = vmul.f32 %v5057, %v5079
      %v5146 = vmul.f32 %v5058, %v5079
      %v5147 = vmul.f32 %v5059, %v5079
      %v5148 = vmul.f32 %v5060, %v5079
      %v5149 = vmul.f32 %v5061, %v5079
      %v5150 = vmul.f32 %v5062, %v5079
      %v5151 = vmul.f32 %v5063, %v5079
      %v5160 = vperm.slane %v4448, 0
      %v5161 = vperm.slane %v4449, 0
      %v5162 = vperm.slane %v4450, 0
      %v5163 = vperm.slane %v4451, 0
      %v5164 = vperm.slane %v4452, 0
      %v5165 = vperm.slane %v4453, 0
      %v5166 = vperm.slane %v4454, 0
      %v5167 = vperm.slane %v4455, 0
      %v5176 = vadd.f32 %v5088, %v5160
      %v5177 = vadd.f32 %v5089, %v5160
      %v5178 = vadd.f32 %v5090, %v5160
      %v5179 = vadd.f32 %v5091, %v5160
      %v5180 = vadd.f32 %v5092, %v5160
      %v5181 = vadd.f32 %v5093, %v5160
      %v5182 = vadd.f32 %v5094, %v5160
      %v5183 = vadd.f32 %v5095, %v5160
      %v5184 = vadd.f32 %v5096, %v5161
      %v5185 = vadd.f32 %v5097, %v5161
      %v5186 = vadd.f32 %v5098, %v5161
      %v5187 = vadd.f32 %v5099, %v5161
      %v5188 = vadd.f32 %v5100, %v5161
      %v5189 = vadd.f32 %v5101, %v5161
      %v5190 = vadd.f32 %v5102, %v5161
      %v5191 = vadd.f32 %v5103, %v5161
      %v5192 = vadd.f32 %v5104, %v5162
      %v5193 = vadd.f32 %v5105, %v5162
      %v5194 = vadd.f32 %v5106, %v5162
      %v5195 = vadd.f32 %v5107, %v5162
      %v5196 = vadd.f32 %v5108, %v5162
      %v5197 = vadd.f32 %v5109, %v5162
      %v5198 = vadd.f32 %v5110, %v5162
      %v5199 = vadd.f32 %v5111, %v5162
      %v5200 = vadd.f32 %v5112, %v5163
      %v5201 = vadd.f32 %v5113, %v5163
      %v5202 = vadd.f32 %v5114, %v5163
      %v5203 = vadd.f32 %v5115, %v5163
      %v5204 = vadd.f32 %v5116, %v5163
      %v5205 = vadd.f32 %v5117, %v5163
      %v5206 = vadd.f32 %v5118, %v5163
      %v5207 = vadd.f32 %v5119, %v5163
      %v5208 = vadd.f32 %v5120, %v5164
      %v5209 = vadd.f32 %v5121, %v5164
      %v5210 = vadd.f32 %v5122, %v5164
      %v5211 = vadd.f32 %v5123, %v5164
      %v5212 = vadd.f32 %v5124, %v5164
      %v5213 = vadd.f32 %v5125, %v5164
      %v5214 = vadd.f32 %v5126, %v5164
      %v5215 = vadd.f32 %v5127, %v5164
      %v5216 = vadd.f32 %v5128, %v5165
      %v5217 = vadd.f32 %v5129, %v5165
      %v5218 = vadd.f32 %v5130, %v5165
      %v5219 = vadd.f32 %v5131, %v5165
      %v5220 = vadd.f32 %v5132, %v5165
      %v5221 = vadd.f32 %v5133, %v5165
      %v5222 = vadd.f32 %v5134, %v5165
      %v5223 = vadd.f32 %v5135, %v5165
      %v5224 = vadd.f32 %v5136, %v5166
      %v5225 = vadd.f32 %v5137, %v5166
      %v5226 = vadd.f32 %v5138, %v5166
      %v5227 = vadd.f32 %v5139, %v5166
      %v5228 = vadd.f32 %v5140, %v5166
      %v5229 = vadd.f32 %v5141, %v5166
      %v5230 = vadd.f32 %v5142, %v5166
      %v5231 = vadd.f32 %v5143, %v5166
      %v5232 = vadd.f32 %v5144, %v5167
      %v5233 = vadd.f32 %v5145, %v5167
      %v5234 = vadd.f32 %v5146, %v5167
      %v5235 = vadd.f32 %v5147, %v5167
      %v5236 = vadd.f32 %v5148, %v5167
      %v5237 = vadd.f32 %v5149, %v5167
      %v5238 = vadd.f32 %v5150, %v5167
      %v5239 = vadd.f32 %v5151, %v5167
      %v5240 = vadd.f32 %v870, %v5176
      %v5241 = vadd.f32 %v871, %v5177
      %v5242 = vadd.f32 %v872, %v5178
      %v5243 = vadd.f32 %v873, %v5179
      %v5244 = vadd.f32 %v874, %v5180
      %v5245 = vadd.f32 %v875, %v5181
      %v5246 = vadd.f32 %v876, %v5182
      %v5247 = vadd.f32 %v877, %v5183
      %v5248 = vadd.f32 %v878, %v5184
      %v5249 = vadd.f32 %v879, %v5185
      %v5250 = vadd.f32 %v880, %v5186
      %v5251 = vadd.f32 %v881, %v5187
      %v5252 = vadd.f32 %v882, %v5188
      %v5253 = vadd.f32 %v883, %v5189
      %v5254 = vadd.f32 %v884, %v5190
      %v5255 = vadd.f32 %v885, %v5191
      %v5256 = vadd.f32 %v886, %v5192
      %v5257 = vadd.f32 %v887, %v5193
      %v5258 = vadd.f32 %v888, %v5194
      %v5259 = vadd.f32 %v889, %v5195
      %v5260 = vadd.f32 %v890, %v5196
      %v5261 = vadd.f32 %v891, %v5197
      %v5262 = vadd.f32 %v892, %v5198
      %v5263 = vadd.f32 %v893, %v5199
      %v5264 = vadd.f32 %v894, %v5200
      %v5265 = vadd.f32 %v895, %v5201
      %v5266 = vadd.f32 %v896, %v5202
      %v5267 = vadd.f32 %v897, %v5203
      %v5268 = vadd.f32 %v898, %v5204
      %v5269 = vadd.f32 %v899, %v5205
      %v5270 = vadd.f32 %v900, %v5206
      %v5271 = vadd.f32 %v901, %v5207
      %v5272 = vadd.f32 %v902, %v5208
      %v5273 = vadd.f32 %v903, %v5209
      %v5274 = vadd.f32 %v904, %v5210
      %v5275 = vadd.f32 %v905, %v5211
      %v5276 = vadd.f32 %v906, %v5212
      %v5277 = vadd.f32 %v907, %v5213
      %v5278 = vadd.f32 %v908, %v5214
      %v5279 = vadd.f32 %v909, %v5215
      %v5280 = vadd.f32 %v910, %v5216
      %v5281 = vadd.f32 %v911, %v5217
      %v5282 = vadd.f32 %v912, %v5218
      %v5283 = vadd.f32 %v913, %v5219
      %v5284 = vadd.f32 %v914, %v5220
      %v5285 = vadd.f32 %v915, %v5221
      %v5286 = vadd.f32 %v916, %v5222
      %v5287 = vadd.f32 %v917, %v5223
      %v5288 = vadd.f32 %v918, %v5224
      %v5289 = vadd.f32 %v919, %v5225
      %v5290 = vadd.f32 %v920, %v5226
      %v5291 = vadd.f32 %v921, %v5227
      %v5292 = vadd.f32 %v922, %v5228
      %v5293 = vadd.f32 %v923, %v5229
      %v5294 = vadd.f32 %v924, %v5230
      %v5295 = vadd.f32 %v925, %v5231
      %v5296 = vadd.f32 %v926, %v5232
      %v5297 = vadd.f32 %v927, %v5233
      %v5298 = vadd.f32 %v928, %v5234
      %v5299 = vadd.f32 %v929, %v5235
      %v5300 = vadd.f32 %v930, %v5236
      %v5301 = vadd.f32 %v931, %v5237
      %v5302 = vadd.f32 %v932, %v5238
      %v5303 = vadd.f32 %v933, %v5239
      %5304 = vst.msk [vmem:[%s224] sm:$0xff] %vm952, %v5240
      %5305 = vst.msk [vmem:[%s224 + $0x8] sm:$0xff] %vm952, %v5241
      %5306 = vst.msk [vmem:[%s224 + $0x10] sm:$0xff] %vm952, %v5242
      %5307 = vst.msk [vmem:[%s224 + $0x18] sm:$0xff] %vm952, %v5243
      %5308 = vst.msk [vmem:[%s224 + $0x20] sm:$0xff] %vm952, %v5244
      %5309 = vst.msk [vmem:[%s224 + $0x28] sm:$0xff] %vm952, %v5245
      %5310 = vst.msk [vmem:[%s224 + $0x30] sm:$0xff] %vm952, %v5246
      %5311 = vst.msk [vmem:[%s224 + $0x38] sm:$0xff] %vm952, %v5247
      %5312 = vst.msk [vmem:[%s224 + $0x40] sm:$0xff] %vm952, %v5248
      %5313 = vst.msk [vmem:[%s224 + $0x48] sm:$0xff] %vm952, %v5249
      %5314 = vst.msk [vmem:[%s224 + $0x50] sm:$0xff] %vm952, %v5250
      %5315 = vst.msk [vmem:[%s224 + $0x58] sm:$0xff] %vm952, %v5251
      %5316 = vst.msk [vmem:[%s224 + $0x60] sm:$0xff] %vm952, %v5252
      %5317 = vst.msk [vmem:[%s224 + $0x68] sm:$0xff] %vm952, %v5253
      %5318 = vst.msk [vmem:[%s224 + $0x70] sm:$0xff] %vm952, %v5254
      %5319 = vst.msk [vmem:[%s224 + $0x78] sm:$0xff] %vm952, %v5255
      %5320 = vst.msk [vmem:[%s224 + $0x80] sm:$0xff] %vm952, %v5256
      %5321 = vst.msk [vmem:[%s224 + $0x88] sm:$0xff] %vm952, %v5257
      %5322 = vst.msk [vmem:[%s224 + $0x90] sm:$0xff] %vm952, %v5258
      %5323 = vst.msk [vmem:[%s224 + $0x98] sm:$0xff] %vm952, %v5259
      %5324 = vst.msk [vmem:[%s224 + $0xa0] sm:$0xff] %vm952, %v5260
      %5325 = vst.msk [vmem:[%s224 + $0xa8] sm:$0xff] %vm952, %v5261
      %5326 = vst.msk [vmem:[%s224 + $0xb0] sm:$0xff] %vm952, %v5262
      %5327 = vst.msk [vmem:[%s224 + $0xb8] sm:$0xff] %vm952, %v5263
      %5328 = vst.msk [vmem:[%s224 + $0xc0] sm:$0xff] %vm952, %v5264
      %5329 = vst.msk [vmem:[%s224 + $0xc8] sm:$0xff] %vm952, %v5265
      %5330 = vst.msk [vmem:[%s224 + $0xd0] sm:$0xff] %vm952, %v5266
      %5331 = vst.msk [vmem:[%s224 + $0xd8] sm:$0xff] %vm952, %v5267
      %5332 = vst.msk [vmem:[%s224 + $0xe0] sm:$0xff] %vm952, %v5268
      %5333 = vst.msk [vmem:[%s224 + $0xe8] sm:$0xff] %vm952, %v5269
      %5334 = vst.msk [vmem:[%s224 + $0xf0] sm:$0xff] %vm952, %v5270
      %5335 = vst.msk [vmem:[%s224 + $0xf8] sm:$0xff] %vm952, %v5271
      %5336 = vst.msk [vmem:[%s224 + $0x100] sm:$0xff] %vm952, %v5272
      %5337 = vst.msk [vmem:[%s224 + $0x108] sm:$0xff] %vm952, %v5273
      %5338 = vst.msk [vmem:[%s224 + $0x110] sm:$0xff] %vm952, %v5274
      %5339 = vst.msk [vmem:[%s224 + $0x118] sm:$0xff] %vm952, %v5275
      %5340 = vst.msk [vmem:[%s224 + $0x120] sm:$0xff] %vm952, %v5276
      %5341 = vst.msk [vmem:[%s224 + $0x128] sm:$0xff] %vm952, %v5277
      %5342 = vst.msk [vmem:[%s224 + $0x130] sm:$0xff] %vm952, %v5278
      %5343 = vst.msk [vmem:[%s224 + $0x138] sm:$0xff] %vm952, %v5279
      %5344 = vst.msk [vmem:[%s224 + $0x140] sm:$0xff] %vm952, %v5280
      %5345 = vst.msk [vmem:[%s224 + $0x148] sm:$0xff] %vm952, %v5281
      %5346 = vst.msk [vmem:[%s224 + $0x150] sm:$0xff] %vm952, %v5282
      %5347 = vst.msk [vmem:[%s224 + $0x158] sm:$0xff] %vm952, %v5283
      %5348 = vst.msk [vmem:[%s224 + $0x160] sm:$0xff] %vm952, %v5284
      %5349 = vst.msk [vmem:[%s224 + $0x168] sm:$0xff] %vm952, %v5285
      %5350 = vst.msk [vmem:[%s224 + $0x170] sm:$0xff] %vm952, %v5286
      %5351 = vst.msk [vmem:[%s224 + $0x178] sm:$0xff] %vm952, %v5287
      %5352 = vst.msk [vmem:[%s224 + $0x180] sm:$0xff] %vm952, %v5288
      %5353 = vst.msk [vmem:[%s224 + $0x188] sm:$0xff] %vm952, %v5289
      %5354 = vst.msk [vmem:[%s224 + $0x190] sm:$0xff] %vm952, %v5290
      %5355 = vst.msk [vmem:[%s224 + $0x198] sm:$0xff] %vm952, %v5291
      %5356 = vst.msk [vmem:[%s224 + $0x1a0] sm:$0xff] %vm952, %v5292
      %5357 = vst.msk [vmem:[%s224 + $0x1a8] sm:$0xff] %vm952, %v5293
      %5358 = vst.msk [vmem:[%s224 + $0x1b0] sm:$0xff] %vm952, %v5294
      %5359 = vst.msk [vmem:[%s224 + $0x1b8] sm:$0xff] %vm952, %v5295
      %5360 = vst.msk [vmem:[%s224 + $0x1c0] sm:$0xff] %vm952, %v5296
      %5361 = vst.msk [vmem:[%s224 + $0x1c8] sm:$0xff] %vm952, %v5297
      %5362 = vst.msk [vmem:[%s224 + $0x1d0] sm:$0xff] %vm952, %v5298
      %5363 = vst.msk [vmem:[%s224 + $0x1d8] sm:$0xff] %vm952, %v5299
      %5364 = vst.msk [vmem:[%s224 + $0x1e0] sm:$0xff] %vm952, %v5300
      %5365 = vst.msk [vmem:[%s224 + $0x1e8] sm:$0xff] %vm952, %v5301
      %5366 = vst.msk [vmem:[%s224 + $0x1f0] sm:$0xff] %vm952, %v5302
      %5367 = vst.msk [vmem:[%s224 + $0x1f8] sm:$0xff] %vm952, %v5303
      %p5368 = scmp.lt.s32.totalorder %s16, 1
      %s5369 = scalar_select %p5368, %s16, 1
      %s5370 = smul.addr %s5369, 64
      %s5371 = smul.addr %s5370, 8
      %s5372 = scalar_lea.vmem %s5, %s5371
      // Predicated region
      $region41: #{_lambda_.1} parent=39 // pred_check
        %p5373 = pneg %p144
      $region42: #{_lambda_.1} parent=39 // pred_check_branch
        %5375 = sbr.rel (%p5373) target = $region44
      $region43: #{_lambda_.1} parent=39 // pred_region
        _
      $region44: #{_lambda_.1} parent=39 // pred_fallthru
        _
    $region40: #{_lambda_.1} parent=5 // pred_fallthru
      _
    %p5376 = scmp.le.s32.totalorder 2, %s11
    // Predicated region
    $region45: #{_lambda_.1} parent=5 // pred_check
      %p5377 = pneg %p5376
    $region46: #{_lambda_.1} parent=5 // pred_check_branch
      %5379 = sbr.rel (%p5377) target = $region48
    $region47: #{_lambda_.1} parent=5 // pred_region
      %s5380 = ssub.s32 %s11, 2
      // Predicated region
      $region49: #{_lambda_.1} parent=47 // pred_check
        %p5381 = pneg %p150
      $region50: #{_lambda_.1} parent=47 // pred_check_branch
        %5383 = sbr.rel (%p5381) target = $region52
      $region51: #{_lambda_.1} parent=47 // pred_region
        %p5384 = scmp.lt.s32.totalorder %s17, 1
        %s5385 = scalar_select %p5384, %s17, 1
        %s5386 = smul.addr %s5385, 64
        %s5387 = smul.addr %s5386, 8
        %s5388 = scalar_lea.vmem %s5, %s5387
      $region52: #{_lambda_.1} parent=47 // pred_fallthru
        _
    $region48: #{_lambda_.1} parent=5 // pred_fallthru
      _
  $region6: #{_lambda_.1} parent=0 // loop_footer
    %s15 = sadd.s32 1, %s11
  $region7: #{_lambda_.1} parent=0 // loop_footer_branch
    %10 = sbr.rel target = $region3
  $region8: #{_lambda_.1} parent=0 // loop_exit
    _

</llo_original>
